<compile_context>
chip_gen: v7x
topology: tpu7x:2x2x1
jax: 0.10.0
libtpu: 0.0.40
codegen_flags: <defaults>
</compile_context>

<pallas_src>
import functools
import math

import jax
import jax.numpy as jnp
from jax import lax
from jax.experimental import pallas as pl
from jax.experimental.pallas import tpu as pltpu

# ----------------------------- config (small) -------------------------------
VOCAB = 64
MAX_LEN = 16
N_SEG = 2
DIM = 32
DIM_FF = 64
N_LAYERS = 2
N_HEADS = 4
D_HEAD = DIM // N_HEADS
LN_EPS = 1e-12


# ------------------------------ fused kernel --------------------------------
def _fused_forward_kernel(
    e_ref, bias_ref, emb_g_ref, emb_b_ref,
    wqkv_ref, bqkv_ref, wo_ref, bo_ref, n1g_ref, n1b_ref,
    w1_ref, b1_ref, w2_ref, b2_ref, n2g_ref, n2b_ref,
    fc_w_ref, fc_b_ref, pred_w_ref, pred_b_ref,
    out_ref, *, batch, seq,
):
    def layer_norm(x, g, b):
        u = jnp.mean(x, axis=-1, keepdims=True)
        s = jnp.mean((x - u) ** 2, axis=-1, keepdims=True)
        return g * ((x - u) * lax.rsqrt(s + LN_EPS)) + b

    def gelu(x):
        # tanh-approx GELU (EUP tanh instead of a VALU erf polynomial).
        return 0.5 * x * (1.0 + jnp.tanh(0.7978845608028654 * (x + 0.044715 * x * x * x)))

    # Embedding LayerNorm (no dummy residual).
    h = layer_norm(e_ref[...], emb_g_ref[...], emb_b_ref[...])          # (BS, D)

    attn_bias = bias_ref[...]                                           # (BS, BS)
    scale = 1.0 / math.sqrt(D_HEAD)

    for l in range(N_LAYERS):
        # Fused QKV projection: one (BS, D) @ (D, 3D) matmul.
        qkv = (
            jnp.dot(h, wqkv_ref[l], preferred_element_type=jnp.float32)
            + bqkv_ref[l]
        )                                                               # (BS, 3D)

        wo_l = wo_ref[l]                                                # (D, D)
        proj = None
        for hd in range(N_HEADS):
            lo = hd * D_HEAD
            q = qkv[:, lo:lo + D_HEAD]                                  # (BS, Dh)
            k = qkv[:, DIM + lo:DIM + lo + D_HEAD]
            v = qkv[:, 2 * DIM + lo:2 * DIM + lo + D_HEAD]

            s_ = jnp.einsum("qd,kd->qk", q, k,
                            preferred_element_type=jnp.float32) * scale
            s_ = s_ + attn_bias                                         # masks padding + cross-batch
            s_ = s_ - jnp.max(s_, axis=-1, keepdims=True)
            p = jnp.exp(s_)
            p = p * pl.reciprocal(jnp.sum(p, axis=-1, keepdims=True), approx=True)

            ctx = jnp.dot(p, v, preferred_element_type=jnp.float32)     # (BS, Dh)
            # Fold the head-merge into the output projection:
            #   concat_h(ctx_h) @ Wo == sum_h ctx_h @ Wo[h*Dh:(h+1)*Dh, :]
            part = jnp.dot(ctx, wo_l[lo:lo + D_HEAD, :],
                           preferred_element_type=jnp.float32)          # (BS, D)
            proj = part if proj is None else proj + part
        proj = proj + bo_ref[l]

        h = layer_norm(h + proj, n1g_ref[l], n1b_ref[l])                # norm1(x + proj(attn))

        ff = gelu(jnp.dot(h, w1_ref[l], preferred_element_type=jnp.float32) + b1_ref[l])
        ff = jnp.dot(ff, w2_ref[l], preferred_element_type=jnp.float32) + b2_ref[l]
        h = layer_norm(h + ff, n2g_ref[l], n2b_ref[l])                  # norm2(h + pwff(h))

    # pooled = tanh(fc(h[:, 0]));  out = relu(predictor(pooled))   (drop == id)
    fc_w = fc_w_ref[...]
    fc_b = fc_b_ref[...]
    pred_w = pred_w_ref[...]
    pred_b = pred_b_ref[...]
    for b in range(batch):
        cls = h[b * seq:b * seq + 1, :]                                 # (1, D) CLS row
        pooled = jnp.tanh(
            jnp.dot(cls, fc_w, preferred_element_type=jnp.float32) + fc_b
        )
        logit = jnp.sum(pooled * pred_w, axis=-1, keepdims=True) + pred_b
        out_ref[b:b + 1, :] = jnp.maximum(logit, 0.0)


# ------------------------------- wrapper -------------------------------------
def predictor_forward(packed, input_ids, input_mask):
    B, S = input_ids.shape
    n_tok = B * S

    # Embedding gathers are plain-JAX glue (table lookups, not the hot path).
    e = (
        packed["tok_embed"][input_ids]
        + packed["pos_embed"][:S][None, :, :]
        + packed["seg_embed"][0][None, None, :]        # segment_ids == 0 everywhere
    ).reshape(n_tok, DIM).astype(jnp.float32)

    # Additive attention bias over flattened tokens, built once and reused by
    # every layer: -10000 for padded keys and cross-batch pairs, 0 otherwise.
    mask_f = input_mask.astype(jnp.float32).reshape(-1)                 # (BS,)
    batch_ids = jnp.repeat(jnp.arange(B), S)                            # (BS,)
    same_batch = (batch_ids[:, None] == batch_ids[None, :]).astype(jnp.float32)
    attn_ok = same_batch * mask_f[None, :]
    attn_bias = -10000.0 * (1.0 - attn_ok)                              # (BS, BS)

    full2 = lambda shp: pl.BlockSpec(shp, lambda i: (0, 0))
    full3 = lambda shp: pl.BlockSpec(shp, lambda i: (0, 0, 0))

    kernel = functools.partial(_fused_forward_kernel, batch=B, seq=S)

    return pl.pallas_call(
        kernel,
        out_shape=jax.ShapeDtypeStruct((B, 1), jnp.float32),
        grid=(1,),
        in_specs=[
            full2((n_tok, DIM)),                                        # e
            full2((n_tok, n_tok)),                                      # attn_bias
            full2((1, DIM)), full2((1, DIM)),                           # emb LN gamma/beta
            full3((N_LAYERS, DIM, 3 * DIM)), full3((N_LAYERS, 1, 3 * DIM)),  # Wqkv, bqkv
            full3((N_LAYERS, DIM, DIM)), full3((N_LAYERS, 1, DIM)),     # Wo, bo
            full3((N_LAYERS, 1, DIM)), full3((N_LAYERS, 1, DIM)),       # norm1 gamma/beta
            full3((N_LAYERS, DIM, DIM_FF)), full3((N_LAYERS, 1, DIM_FF)),    # W1, b1
            full3((N_LAYERS, DIM_FF, DIM)), full3((N_LAYERS, 1, DIM)),  # W2, b2
            full3((N_LAYERS, 1, DIM)), full3((N_LAYERS, 1, DIM)),       # norm2 gamma/beta
            full2((DIM, DIM)), full2((1, DIM)),                         # fc
            full2((1, DIM)), full2((1, 1)),                             # predictor
        ],
        out_specs=pl.BlockSpec((B, 1), lambda i: (0, 0)),
        compiler_params=pltpu.CompilerParams(dimension_semantics=("arbitrary",)),
    )(
        e, attn_bias, packed["emb_norm_g"], packed["emb_norm_b"],
        packed["wqkv"], packed["bqkv"], packed["wo"], packed["bo"],
        packed["n1g"], packed["n1b"], packed["w1"], packed["b1"],
        packed["w2"], packed["b2"], packed["n2g"], packed["n2b"],
        packed["fc_w"], packed["fc_b"], packed["pred_w"], packed["pred_b"],
    )


# ------------------------------ parameters ----------------------------------
def init_params(key):
    keys = iter(jax.random.split(key, 64))

    def nrm(shape, scale=0.02):
        return (scale * jax.random.normal(next(keys), shape)).astype(jnp.float32)

    ones = lambda n: jnp.ones((1, n), jnp.float32)
    zeros = lambda n: jnp.zeros((1, n), jnp.float32)

    params = {
        "tok_embed": nrm((VOCAB, DIM)),
        "pos_embed": nrm((MAX_LEN, DIM)),
        "seg_embed": nrm((N_SEG, DIM)),
        "emb_norm_g": ones(DIM),
        "emb_norm_b": zeros(DIM),
        "layers": [],
        "fc_w": nrm((DIM, DIM)),
        "fc_b": zeros(DIM),
        "pred_w": nrm((1, DIM)),  # PyTorch Linear(dim, 1).weight shape
        "pred_b": jnp.zeros((1, 1), jnp.float32),
    }
    for _ in range(N_LAYERS):
        params["layers"].append(
            {
                "wq": nrm((DIM, DIM)), "bq": zeros(DIM),
                "wk": nrm((DIM, DIM)), "bk": zeros(DIM),
                "wv": nrm((DIM, DIM)), "bv": zeros(DIM),
                "wo": nrm((DIM, DIM)), "bo": zeros(DIM),
                "norm1_g": ones(DIM), "norm1_b": zeros(DIM),
                "w1": nrm((DIM, DIM_FF)), "b1": zeros(DIM_FF),
                "w2": nrm((DIM_FF, DIM)), "b2": zeros(DIM),
                "norm2_g": ones(DIM), "norm2_b": zeros(DIM),
            }
        )
    return params


def pack_params(params):
    """Stack per-layer weights and fuse Q/K/V for the single fused kernel."""
    L = params["layers"]
    stack = lambda k: jnp.stack([l[k] for l in L], axis=0)
    return {
        "tok_embed": params["tok_embed"],
        "pos_embed": params["pos_embed"],
        "seg_embed": params["seg_embed"],
        "emb_norm_g": params["emb_norm_g"],
        "emb_norm_b": params["emb_norm_b"],
        "wqkv": jnp.stack(
            [jnp.concatenate([l["wq"], l["wk"], l["wv"]], axis=1) for l in L], axis=0
        ),
        "bqkv": jnp.stack(
            [jnp.concatenate([l["bq"], l["bk"], l["bv"]], axis=1) for l in L], axis=0
        ),
        "wo": stack("wo"), "bo": stack("bo"),
        "n1g": stack("norm1_g"), "n1b": stack("norm1_b"),
        "w1": stack("w1"), "b1": stack("b1"),
        "w2": stack("w2"), "b2": stack("b2"),
        "n2g": stack("norm2_g"), "n2b": stack("norm2_b"),
        "fc_w": params["fc_w"], "fc_b": params["fc_b"],
        "pred_w": params["pred_w"], "pred_b": params["pred_b"],
    }


# --------------------------------- main --------------------------------------
if __name__ == "__main__":
    B, S = 2, 8
    params = init_params(jax.random.PRNGKey(0))
    packed = pack_params(params)

    k_ids, _ = jax.random.split(jax.random.PRNGKey(1))
    input_ids = jax.random.randint(k_ids, (B, S), 0, VOCAB, dtype=jnp.int32)
    input_mask = jnp.ones((B, S), jnp.int32).at[1, 6:].set(0)  # ragged lengths

    out = jax.jit(predictor_forward)(packed, input_ids, input_mask)
    out = jax.block_until_ready(out)

    assert out.shape == (B, 1)
    assert bool(jnp.all(out >= 0.0))           # ReLU output
    assert bool(jnp.all(jnp.isfinite(out)))
    print("KERNEL_OK")
</pallas_src>

<mosaic_0001>
module attributes {stable_mosaic.version = 11 : i64} {
  func.func @_fused_forward_kernel(%arg0: i32, %arg1: memref<16x32xf32, #tpu.memory_space<vmem>>, %arg2: memref<16x16xf32, #tpu.memory_space<vmem>>, %arg3: memref<1x32xf32, #tpu.memory_space<vmem>>, %arg4: memref<1x32xf32, #tpu.memory_space<vmem>>, %arg5: memref<2x32x96xf32, #tpu.memory_space<vmem>>, %arg6: memref<2x1x96xf32, #tpu.memory_space<vmem>>, %arg7: memref<2x32x32xf32, #tpu.memory_space<vmem>>, %arg8: memref<2x1x32xf32, #tpu.memory_space<vmem>>, %arg9: memref<2x1x32xf32, #tpu.memory_space<vmem>>, %arg10: memref<2x1x32xf32, #tpu.memory_space<vmem>>, %arg11: memref<2x32x64xf32, #tpu.memory_space<vmem>>, %arg12: memref<2x1x64xf32, #tpu.memory_space<vmem>>, %arg13: memref<2x64x32xf32, #tpu.memory_space<vmem>>, %arg14: memref<2x1x32xf32, #tpu.memory_space<vmem>>, %arg15: memref<2x1x32xf32, #tpu.memory_space<vmem>>, %arg16: memref<2x1x32xf32, #tpu.memory_space<vmem>>, %arg17: memref<32x32xf32, #tpu.memory_space<vmem>>, %arg18: memref<1x32xf32, #tpu.memory_space<vmem>>, %arg19: memref<1x32xf32, #tpu.memory_space<vmem>>, %arg20: memref<1x1xf32, #tpu.memory_space<vmem>>, %arg21: memref<2x1xf32, #tpu.memory_space<vmem>>) attributes {dimension_semantics = [#tpu.dimension_semantics<arbitrary>], iteration_bounds = array<i64: 1>, scalar_prefetch = 0 : i64, scratch_operands = 0 : i64, tpu.core_type = #tpu.core_type<tc>, window_params = [{pipeline_mode = #tpu.pipeline_mode<synchronous>, transform_indices = @transform_0, window_bounds = array<i64: 16, 32>}, {pipeline_mode = #tpu.pipeline_mode<synchronous>, transform_indices = @transform_1, window_bounds = array<i64: 16, 16>}, {pipeline_mode = #tpu.pipeline_mode<synchronous>, transform_indices = @transform_2, window_bounds = array<i64: 1, 32>}, {pipeline_mode = #tpu.pipeline_mode<synchronous>, transform_indices = @transform_3, window_bounds = array<i64: 1, 32>}, {pipeline_mode = #tpu.pipeline_mode<synchronous>, transform_indices = @transform_4, window_bounds = array<i64: 2, 32, 96>}, {pipeline_mode = #tpu.pipeline_mode<synchronous>, transform_indices = @transform_5, window_bounds = array<i64: 2, 1, 96>}, {pipeline_mode = #tpu.pipeline_mode<synchronous>, transform_indices = @transform_6, window_bounds = array<i64: 2, 32, 32>}, {pipeline_mode = #tpu.pipeline_mode<synchronous>, transform_indices = @transform_7, window_bounds = array<i64: 2, 1, 32>}, {pipeline_mode = #tpu.pipeline_mode<synchronous>, transform_indices = @transform_8, window_bounds = array<i64: 2, 1, 32>}, {pipeline_mode = #tpu.pipeline_mode<synchronous>, transform_indices = @transform_9, window_bounds = array<i64: 2, 1, 32>}, {pipeline_mode = #tpu.pipeline_mode<synchronous>, transform_indices = @transform_10, window_bounds = array<i64: 2, 32, 64>}, {pipeline_mode = #tpu.pipeline_mode<synchronous>, transform_indices = @transform_11, window_bounds = array<i64: 2, 1, 64>}, {pipeline_mode = #tpu.pipeline_mode<synchronous>, transform_indices = @transform_12, window_bounds = array<i64: 2, 64, 32>}, {pipeline_mode = #tpu.pipeline_mode<synchronous>, transform_indices = @transform_13, window_bounds = array<i64: 2, 1, 32>}, {pipeline_mode = #tpu.pipeline_mode<synchronous>, transform_indices = @transform_14, window_bounds = array<i64: 2, 1, 32>}, {pipeline_mode = #tpu.pipeline_mode<synchronous>, transform_indices = @transform_15, window_bounds = array<i64: 2, 1, 32>}, {pipeline_mode = #tpu.pipeline_mode<synchronous>, transform_indices = @transform_16, window_bounds = array<i64: 32, 32>}, {pipeline_mode = #tpu.pipeline_mode<synchronous>, transform_indices = @transform_17, window_bounds = array<i64: 1, 32>}, {pipeline_mode = #tpu.pipeline_mode<synchronous>, transform_indices = @transform_18, window_bounds = array<i64: 1, 32>}, {pipeline_mode = #tpu.pipeline_mode<synchronous>, transform_indices = @transform_19, window_bounds = array<i64: 1, 1>}, {pipeline_mode = #tpu.pipeline_mode<synchronous>, transform_indices = @transform_20, window_bounds = array<i64: 2, 1>}]} {
    %c0 = arith.constant 0 : index
    %c0_0 = arith.constant 0 : index
    %0 = vector.load %arg1[%c0, %c0_0] : memref<16x32xf32, #tpu.memory_space<vmem>>, vector<16x32xf32>
    %c0_1 = arith.constant 0 : index
    %c0_2 = arith.constant 0 : index
    %1 = vector.load %arg3[%c0_1, %c0_2] : memref<1x32xf32, #tpu.memory_space<vmem>>, vector<1x32xf32>
    %c0_3 = arith.constant 0 : index
    %c0_4 = arith.constant 0 : index
    %2 = vector.load %arg4[%c0_3, %c0_4] : memref<1x32xf32, #tpu.memory_space<vmem>>, vector<1x32xf32>
    %cst = arith.constant dense<0.000000e+00> : vector<16xf32>
    %3 = vector.multi_reduction <add>, %0, %cst [1] : vector<16x32xf32> to vector<16xf32>
    %4 = vector.shape_cast %3 : vector<16xf32> to vector<16x1xf32>
    %cst_5 = arith.constant 3.200000e+01 : f32
    %5 = vector.broadcast %cst_5 : f32 to vector<16x1xf32>
    %6 = arith.divf %4, %5 : vector<16x1xf32>
    %7 = vector.broadcast %6 : vector<16x1xf32> to vector<16x32xf32>
    %8 = arith.subf %0, %7 : vector<16x32xf32>
    %9 = arith.mulf %8, %8 : vector<16x32xf32>
    %cst_6 = arith.constant dense<0.000000e+00> : vector<16xf32>
    %10 = vector.multi_reduction <add>, %9, %cst_6 [1] : vector<16x32xf32> to vector<16xf32>
    %11 = vector.shape_cast %10 : vector<16xf32> to vector<16x1xf32>
    %cst_7 = arith.constant 3.200000e+01 : f32
    %12 = vector.broadcast %cst_7 : f32 to vector<16x1xf32>
    %13 = arith.divf %11, %12 : vector<16x1xf32>
    %14 = vector.broadcast %6 : vector<16x1xf32> to vector<16x32xf32>
    %15 = arith.subf %0, %14 : vector<16x32xf32>
    %cst_8 = arith.constant 9.99999996E-13 : f32
    %16 = vector.broadcast %cst_8 : f32 to vector<16x1xf32>
    %17 = arith.addf %13, %16 : vector<16x1xf32>
    %18 = math.rsqrt %17 : vector<16x1xf32>
    %19 = vector.broadcast %18 : vector<16x1xf32> to vector<16x32xf32>
    %20 = arith.mulf %15, %19 : vector<16x32xf32>
    %21 = vector.broadcast %1 : vector<1x32xf32> to vector<16x32xf32>
    %22 = arith.mulf %21, %20 : vector<16x32xf32>
    %23 = vector.broadcast %2 : vector<1x32xf32> to vector<16x32xf32>
    %24 = arith.addf %22, %23 : vector<16x32xf32>
    %c0_9 = arith.constant 0 : index
    %c0_10 = arith.constant 0 : index
    %25 = vector.load %arg2[%c0_9, %c0_10] : memref<16x16xf32, #tpu.memory_space<vmem>>, vector<16x16xf32>
    %c0_11 = arith.constant 0 : index
    %c0_12 = arith.constant 0 : index
    %c0_13 = arith.constant 0 : index
    %26 = vector.load %arg5[%c0_11, %c0_12, %c0_13] : memref<2x32x96xf32, #tpu.memory_space<vmem>>, vector<1x32x96xf32>
    %27 = vector.shape_cast %26 : vector<1x32x96xf32> to vector<32x96xf32>
    %cst_14 = arith.constant dense<0.000000e+00> : vector<16x96xf32>
    %28 = tpu.matmul %24, %27, %cst_14 {dimension_numbers = #tpu.dot_dimension_numbers<[1], [0], [0], [1], [0, 0, 1, 1], [], []>} : vector<16x32xf32>, vector<32x96xf32>, vector<16x96xf32> -> vector<16x96xf32>
    %c0_15 = arith.constant 0 : index
    %c0_16 = arith.constant 0 : index
    %c0_17 = arith.constant 0 : index
    %29 = vector.load %arg6[%c0_15, %c0_16, %c0_17] : memref<2x1x96xf32, #tpu.memory_space<vmem>>, vector<1x1x96xf32>
    %30 = vector.shape_cast %29 : vector<1x1x96xf32> to vector<1x96xf32>
    %31 = vector.broadcast %30 : vector<1x96xf32> to vector<16x96xf32>
    %32 = arith.addf %28, %31 : vector<16x96xf32>
    %c0_18 = arith.constant 0 : index
    %c0_19 = arith.constant 0 : index
    %c0_20 = arith.constant 0 : index
    %33 = vector.load %arg7[%c0_18, %c0_19, %c0_20] : memref<2x32x32xf32, #tpu.memory_space<vmem>>, vector<1x32x32xf32>
    %34 = vector.shape_cast %33 : vector<1x32x32xf32> to vector<32x32xf32>
    %35 = vector.extract_strided_slice %32 {offsets = [0, 0], sizes = [16, 8], strides = [1, 1]} : vector<16x96xf32> to vector<16x8xf32>
    %36 = vector.extract_strided_slice %32 {offsets = [0, 32], sizes = [16, 8], strides = [1, 1]} : vector<16x96xf32> to vector<16x8xf32>
    %37 = vector.extract_strided_slice %32 {offsets = [0, 64], sizes = [16, 8], strides = [1, 1]} : vector<16x96xf32> to vector<16x8xf32>
    "tpu.trace_start"() <{level = 10 : i32, message = "qd,kd->qk"}> : () -> ()
    %cst_21 = arith.constant dense<0.000000e+00> : vector<16x16xf32>
    %38 = tpu.matmul %35, %36, %cst_21 {dimension_numbers = #tpu.dot_dimension_numbers<[1], [1], [0], [0], [0, 0, 1, 0], [], []>} : vector<16x8xf32>, vector<16x8xf32>, vector<16x16xf32> -> vector<16x16xf32>
    "tpu.trace_stop"() : () -> ()
    %cst_22 = arith.constant 0.353553385 : f32
    %39 = vector.broadcast %cst_22 : f32 to vector<16x16xf32>
    %40 = arith.mulf %38, %39 : vector<16x16xf32>
    %41 = arith.addf %40, %25 : vector<16x16xf32>
    %cst_23 = arith.constant dense<0xFF800000> : vector<16xf32>
    %42 = vector.multi_reduction <maximumf>, %41, %cst_23 [1] : vector<16x16xf32> to vector<16xf32>
    %43 = vector.shape_cast %42 : vector<16xf32> to vector<16x1xf32>
    %44 = vector.broadcast %43 : vector<16x1xf32> to vector<16x16xf32>
    %45 = arith.subf %41, %44 : vector<16x16xf32>
    %46 = math.exp %45 : vector<16x16xf32>
    %cst_24 = arith.constant dense<0.000000e+00> : vector<16xf32>
    %47 = vector.multi_reduction <add>, %46, %cst_24 [1] : vector<16x16xf32> to vector<16xf32>
    %48 = vector.shape_cast %47 : vector<16xf32> to vector<16x1xf32>
    %49 = tpu.reciprocal %48 {approx = true} : vector<16x1xf32> -> vector<16x1xf32>
    %50 = vector.broadcast %49 : vector<16x1xf32> to vector<16x16xf32>
    %51 = arith.mulf %46, %50 : vector<16x16xf32>
    %cst_25 = arith.constant dense<0.000000e+00> : vector<16x8xf32>
    %52 = tpu.matmul %51, %37, %cst_25 {dimension_numbers = #tpu.dot_dimension_numbers<[1], [0], [0], [1], [0, 0, 1, 1], [], []>} : vector<16x16xf32>, vector<16x8xf32>, vector<16x8xf32> -> vector<16x8xf32>
    %53 = vector.extract_strided_slice %34 {offsets = [0, 0], sizes = [8, 32], strides = [1, 1]} : vector<32x32xf32> to vector<8x32xf32>
    %cst_26 = arith.constant dense<0.000000e+00> : vector<16x32xf32>
    %54 = tpu.matmul %52, %53, %cst_26 {dimension_numbers = #tpu.dot_dimension_numbers<[1], [0], [0], [1], [0, 0, 1, 1], [], []>} : vector<16x8xf32>, vector<8x32xf32>, vector<16x32xf32> -> vector<16x32xf32>
    %55 = vector.extract_strided_slice %32 {offsets = [0, 8], sizes = [16, 8], strides = [1, 1]} : vector<16x96xf32> to vector<16x8xf32>
    %56 = vector.extract_strided_slice %32 {offsets = [0, 40], sizes = [16, 8], strides = [1, 1]} : vector<16x96xf32> to vector<16x8xf32>
    %57 = vector.extract_strided_slice %32 {offsets = [0, 72], sizes = [16, 8], strides = [1, 1]} : vector<16x96xf32> to vector<16x8xf32>
    "tpu.trace_start"() <{level = 10 : i32, message = "qd,kd->qk"}> : () -> ()
    %cst_27 = arith.constant dense<0.000000e+00> : vector<16x16xf32>
    %58 = tpu.matmul %55, %56, %cst_27 {dimension_numbers = #tpu.dot_dimension_numbers<[1], [1], [0], [0], [0, 0, 1, 0], [], []>} : vector<16x8xf32>, vector<16x8xf32>, vector<16x16xf32> -> vector<16x16xf32>
    "tpu.trace_stop"() : () -> ()
    %cst_28 = arith.constant 0.353553385 : f32
    %59 = vector.broadcast %cst_28 : f32 to vector<16x16xf32>
    %60 = arith.mulf %58, %59 : vector<16x16xf32>
    %61 = arith.addf %60, %25 : vector<16x16xf32>
    %cst_29 = arith.constant dense<0xFF800000> : vector<16xf32>
    %62 = vector.multi_reduction <maximumf>, %61, %cst_29 [1] : vector<16x16xf32> to vector<16xf32>
    %63 = vector.shape_cast %62 : vector<16xf32> to vector<16x1xf32>
    %64 = vector.broadcast %63 : vector<16x1xf32> to vector<16x16xf32>
    %65 = arith.subf %61, %64 : vector<16x16xf32>
    %66 = math.exp %65 : vector<16x16xf32>
    %cst_30 = arith.constant dense<0.000000e+00> : vector<16xf32>
    %67 = vector.multi_reduction <add>, %66, %cst_30 [1] : vector<16x16xf32> to vector<16xf32>
    %68 = vector.shape_cast %67 : vector<16xf32> to vector<16x1xf32>
    %69 = tpu.reciprocal %68 {approx = true} : vector<16x1xf32> -> vector<16x1xf32>
    %70 = vector.broadcast %69 : vector<16x1xf32> to vector<16x16xf32>
    %71 = arith.mulf %66, %70 : vector<16x16xf32>
    %cst_31 = arith.constant dense<0.000000e+00> : vector<16x8xf32>
    %72 = tpu.matmul %71, %57, %cst_31 {dimension_numbers = #tpu.dot_dimension_numbers<[1], [0], [0], [1], [0, 0, 1, 1], [], []>} : vector<16x16xf32>, vector<16x8xf32>, vector<16x8xf32> -> vector<16x8xf32>
    %73 = vector.extract_strided_slice %34 {offsets = [8, 0], sizes = [8, 32], strides = [1, 1]} : vector<32x32xf32> to vector<8x32xf32>
    %cst_32 = arith.constant dense<0.000000e+00> : vector<16x32xf32>
    %74 = tpu.matmul %72, %73, %cst_32 {dimension_numbers = #tpu.dot_dimension_numbers<[1], [0], [0], [1], [0, 0, 1, 1], [], []>} : vector<16x8xf32>, vector<8x32xf32>, vector<16x32xf32> -> vector<16x32xf32>
    %75 = arith.addf %54, %74 : vector<16x32xf32>
    %76 = vector.extract_strided_slice %32 {offsets = [0, 16], sizes = [16, 8], strides = [1, 1]} : vector<16x96xf32> to vector<16x8xf32>
    %77 = vector.extract_strided_slice %32 {offsets = [0, 48], sizes = [16, 8], strides = [1, 1]} : vector<16x96xf32> to vector<16x8xf32>
    %78 = vector.extract_strided_slice %32 {offsets = [0, 80], sizes = [16, 8], strides = [1, 1]} : vector<16x96xf32> to vector<16x8xf32>
    "tpu.trace_start"() <{level = 10 : i32, message = "qd,kd->qk"}> : () -> ()
    %cst_33 = arith.constant dense<0.000000e+00> : vector<16x16xf32>
    %79 = tpu.matmul %76, %77, %cst_33 {dimension_numbers = #tpu.dot_dimension_numbers<[1], [1], [0], [0], [0, 0, 1, 0], [], []>} : vector<16x8xf32>, vector<16x8xf32>, vector<16x16xf32> -> vector<16x16xf32>
    "tpu.trace_stop"() : () -> ()
    %cst_34 = arith.constant 0.353553385 : f32
    %80 = vector.broadcast %cst_34 : f32 to vector<16x16xf32>
    %81 = arith.mulf %79, %80 : vector<16x16xf32>
    %82 = arith.addf %81, %25 : vector<16x16xf32>
    %cst_35 = arith.constant dense<0xFF800000> : vector<16xf32>
    %83 = vector.multi_reduction <maximumf>, %82, %cst_35 [1] : vector<16x16xf32> to vector<16xf32>
    %84 = vector.shape_cast %83 : vector<16xf32> to vector<16x1xf32>
    %85 = vector.broadcast %84 : vector<16x1xf32> to vector<16x16xf32>
    %86 = arith.subf %82, %85 : vector<16x16xf32>
    %87 = math.exp %86 : vector<16x16xf32>
    %cst_36 = arith.constant dense<0.000000e+00> : vector<16xf32>
    %88 = vector.multi_reduction <add>, %87, %cst_36 [1] : vector<16x16xf32> to vector<16xf32>
    %89 = vector.shape_cast %88 : vector<16xf32> to vector<16x1xf32>
    %90 = tpu.reciprocal %89 {approx = true} : vector<16x1xf32> -> vector<16x1xf32>
    %91 = vector.broadcast %90 : vector<16x1xf32> to vector<16x16xf32>
    %92 = arith.mulf %87, %91 : vector<16x16xf32>
    %cst_37 = arith.constant dense<0.000000e+00> : vector<16x8xf32>
    %93 = tpu.matmul %92, %78, %cst_37 {dimension_numbers = #tpu.dot_dimension_numbers<[1], [0], [0], [1], [0, 0, 1, 1], [], []>} : vector<16x16xf32>, vector<16x8xf32>, vector<16x8xf32> -> vector<16x8xf32>
    %94 = vector.extract_strided_slice %34 {offsets = [16, 0], sizes = [8, 32], strides = [1, 1]} : vector<32x32xf32> to vector<8x32xf32>
    %cst_38 = arith.constant dense<0.000000e+00> : vector<16x32xf32>
    %95 = tpu.matmul %93, %94, %cst_38 {dimension_numbers = #tpu.dot_dimension_numbers<[1], [0], [0], [1], [0, 0, 1, 1], [], []>} : vector<16x8xf32>, vector<8x32xf32>, vector<16x32xf32> -> vector<16x32xf32>
    %96 = arith.addf %75, %95 : vector<16x32xf32>
    %97 = vector.extract_strided_slice %32 {offsets = [0, 24], sizes = [16, 8], strides = [1, 1]} : vector<16x96xf32> to vector<16x8xf32>
    %98 = vector.extract_strided_slice %32 {offsets = [0, 56], sizes = [16, 8], strides = [1, 1]} : vector<16x96xf32> to vector<16x8xf32>
    %99 = vector.extract_strided_slice %32 {offsets = [0, 88], sizes = [16, 8], strides = [1, 1]} : vector<16x96xf32> to vector<16x8xf32>
    "tpu.trace_start"() <{level = 10 : i32, message = "qd,kd->qk"}> : () -> ()
    %cst_39 = arith.constant dense<0.000000e+00> : vector<16x16xf32>
    %100 = tpu.matmul %97, %98, %cst_39 {dimension_numbers = #tpu.dot_dimension_numbers<[1], [1], [0], [0], [0, 0, 1, 0], [], []>} : vector<16x8xf32>, vector<16x8xf32>, vector<16x16xf32> -> vector<16x16xf32>
    "tpu.trace_stop"() : () -> ()
    %cst_40 = arith.constant 0.353553385 : f32
    %101 = vector.broadcast %cst_40 : f32 to vector<16x16xf32>
    %102 = arith.mulf %100, %101 : vector<16x16xf32>
    %103 = arith.addf %102, %25 : vector<16x16xf32>
    %cst_41 = arith.constant dense<0xFF800000> : vector<16xf32>
    %104 = vector.multi_reduction <maximumf>, %103, %cst_41 [1] : vector<16x16xf32> to vector<16xf32>
    %105 = vector.shape_cast %104 : vector<16xf32> to vector<16x1xf32>
    %106 = vector.broadcast %105 : vector<16x1xf32> to vector<16x16xf32>
    %107 = arith.subf %103, %106 : vector<16x16xf32>
    %108 = math.exp %107 : vector<16x16xf32>
    %cst_42 = arith.constant dense<0.000000e+00> : vector<16xf32>
    %109 = vector.multi_reduction <add>, %108, %cst_42 [1] : vector<16x16xf32> to vector<16xf32>
    %110 = vector.shape_cast %109 : vector<16xf32> to vector<16x1xf32>
    %111 = tpu.reciprocal %110 {approx = true} : vector<16x1xf32> -> vector<16x1xf32>
    %112 = vector.broadcast %111 : vector<16x1xf32> to vector<16x16xf32>
    %113 = arith.mulf %108, %112 : vector<16x16xf32>
    %cst_43 = arith.constant dense<0.000000e+00> : vector<16x8xf32>
    %114 = tpu.matmul %113, %99, %cst_43 {dimension_numbers = #tpu.dot_dimension_numbers<[1], [0], [0], [1], [0, 0, 1, 1], [], []>} : vector<16x16xf32>, vector<16x8xf32>, vector<16x8xf32> -> vector<16x8xf32>
    %115 = vector.extract_strided_slice %34 {offsets = [24, 0], sizes = [8, 32], strides = [1, 1]} : vector<32x32xf32> to vector<8x32xf32>
    %cst_44 = arith.constant dense<0.000000e+00> : vector<16x32xf32>
    %116 = tpu.matmul %114, %115, %cst_44 {dimension_numbers = #tpu.dot_dimension_numbers<[1], [0], [0], [1], [0, 0, 1, 1], [], []>} : vector<16x8xf32>, vector<8x32xf32>, vector<16x32xf32> -> vector<16x32xf32>
    %117 = arith.addf %96, %116 : vector<16x32xf32>
    %c0_45 = arith.constant 0 : index
    %c0_46 = arith.constant 0 : index
    %c0_47 = arith.constant 0 : index
    %118 = vector.load %arg8[%c0_45, %c0_46, %c0_47] : memref<2x1x32xf32, #tpu.memory_space<vmem>>, vector<1x1x32xf32>
    %119 = vector.shape_cast %118 : vector<1x1x32xf32> to vector<1x32xf32>
    %120 = vector.broadcast %119 : vector<1x32xf32> to vector<16x32xf32>
    %121 = arith.addf %117, %120 : vector<16x32xf32>
    %122 = arith.addf %24, %121 : vector<16x32xf32>
    %c0_48 = arith.constant 0 : index
    %c0_49 = arith.constant 0 : index
    %c0_50 = arith.constant 0 : index
    %123 = vector.load %arg9[%c0_48, %c0_49, %c0_50] : memref<2x1x32xf32, #tpu.memory_space<vmem>>, vector<1x1x32xf32>
    %124 = vector.shape_cast %123 : vector<1x1x32xf32> to vector<1x32xf32>
    %c0_51 = arith.constant 0 : index
    %c0_52 = arith.constant 0 : index
    %c0_53 = arith.constant 0 : index
    %125 = vector.load %arg10[%c0_51, %c0_52, %c0_53] : memref<2x1x32xf32, #tpu.memory_space<vmem>>, vector<1x1x32xf32>
    %126 = vector.shape_cast %125 : vector<1x1x32xf32> to vector<1x32xf32>
    %cst_54 = arith.constant dense<0.000000e+00> : vector<16xf32>
    %127 = vector.multi_reduction <add>, %122, %cst_54 [1] : vector<16x32xf32> to vector<16xf32>
    %128 = vector.shape_cast %127 : vector<16xf32> to vector<16x1xf32>
    %cst_55 = arith.constant 3.200000e+01 : f32
    %129 = vector.broadcast %cst_55 : f32 to vector<16x1xf32>
    %130 = arith.divf %128, %129 : vector<16x1xf32>
    %131 = vector.broadcast %130 : vector<16x1xf32> to vector<16x32xf32>
    %132 = arith.subf %122, %131 : vector<16x32xf32>
    %133 = arith.mulf %132, %132 : vector<16x32xf32>
    %cst_56 = arith.constant dense<0.000000e+00> : vector<16xf32>
    %134 = vector.multi_reduction <add>, %133, %cst_56 [1] : vector<16x32xf32> to vector<16xf32>
    %135 = vector.shape_cast %134 : vector<16xf32> to vector<16x1xf32>
    %cst_57 = arith.constant 3.200000e+01 : f32
    %136 = vector.broadcast %cst_57 : f32 to vector<16x1xf32>
    %137 = arith.divf %135, %136 : vector<16x1xf32>
    %138 = vector.broadcast %130 : vector<16x1xf32> to vector<16x32xf32>
    %139 = arith.subf %122, %138 : vector<16x32xf32>
    %cst_58 = arith.constant 9.99999996E-13 : f32
    %140 = vector.broadcast %cst_58 : f32 to vector<16x1xf32>
    %141 = arith.addf %137, %140 : vector<16x1xf32>
    %142 = math.rsqrt %141 : vector<16x1xf32>
    %143 = vector.broadcast %142 : vector<16x1xf32> to vector<16x32xf32>
    %144 = arith.mulf %139, %143 : vector<16x32xf32>
    %145 = vector.broadcast %124 : vector<1x32xf32> to vector<16x32xf32>
    %146 = arith.mulf %145, %144 : vector<16x32xf32>
    %147 = vector.broadcast %126 : vector<1x32xf32> to vector<16x32xf32>
    %148 = arith.addf %146, %147 : vector<16x32xf32>
    %c0_59 = arith.constant 0 : index
    %c0_60 = arith.constant 0 : index
    %c0_61 = arith.constant 0 : index
    %149 = vector.load %arg11[%c0_59, %c0_60, %c0_61] : memref<2x32x64xf32, #tpu.memory_space<vmem>>, vector<1x32x64xf32>
    %150 = vector.shape_cast %149 : vector<1x32x64xf32> to vector<32x64xf32>
    %cst_62 = arith.constant dense<0.000000e+00> : vector<16x64xf32>
    %151 = tpu.matmul %148, %150, %cst_62 {dimension_numbers = #tpu.dot_dimension_numbers<[1], [0], [0], [1], [0, 0, 1, 1], [], []>} : vector<16x32xf32>, vector<32x64xf32>, vector<16x64xf32> -> vector<16x64xf32>
    %c0_63 = arith.constant 0 : index
    %c0_64 = arith.constant 0 : index
    %c0_65 = arith.constant 0 : index
    %152 = vector.load %arg12[%c0_63, %c0_64, %c0_65] : memref<2x1x64xf32, #tpu.memory_space<vmem>>, vector<1x1x64xf32>
    %153 = vector.shape_cast %152 : vector<1x1x64xf32> to vector<1x64xf32>
    %154 = vector.broadcast %153 : vector<1x64xf32> to vector<16x64xf32>
    %155 = arith.addf %151, %154 : vector<16x64xf32>
    %cst_66 = arith.constant 5.000000e-01 : f32
    %156 = vector.broadcast %cst_66 : f32 to vector<16x64xf32>
    %157 = arith.mulf %156, %155 : vector<16x64xf32>
    %cst_67 = arith.constant 4.471500e-02 : f32
    %158 = vector.broadcast %cst_67 : f32 to vector<16x64xf32>
    %159 = arith.mulf %158, %155 : vector<16x64xf32>
    %160 = arith.mulf %159, %155 : vector<16x64xf32>
    %161 = arith.mulf %160, %155 : vector<16x64xf32>
    %162 = arith.addf %155, %161 : vector<16x64xf32>
    %cst_68 = arith.constant 0.797884583 : f32
    %163 = vector.broadcast %cst_68 : f32 to vector<16x64xf32>
    %164 = arith.mulf %163, %162 : vector<16x64xf32>
    %165 = math.tanh %164 : vector<16x64xf32>
    %cst_69 = arith.constant 1.000000e+00 : f32
    %166 = vector.broadcast %cst_69 : f32 to vector<16x64xf32>
    %167 = arith.addf %166, %165 : vector<16x64xf32>
    %168 = arith.mulf %157, %167 : vector<16x64xf32>
    %c0_70 = arith.constant 0 : index
    %c0_71 = arith.constant 0 : index
    %c0_72 = arith.constant 0 : index
    %169 = vector.load %arg13[%c0_70, %c0_71, %c0_72] : memref<2x64x32xf32, #tpu.memory_space<vmem>>, vector<1x64x32xf32>
    %170 = vector.shape_cast %169 : vector<1x64x32xf32> to vector<64x32xf32>
    %cst_73 = arith.constant dense<0.000000e+00> : vector<16x32xf32>
    %171 = tpu.matmul %168, %170, %cst_73 {dimension_numbers = #tpu.dot_dimension_numbers<[1], [0], [0], [1], [0, 0, 1, 1], [], []>} : vector<16x64xf32>, vector<64x32xf32>, vector<16x32xf32> -> vector<16x32xf32>
    %c0_74 = arith.constant 0 : index
    %c0_75 = arith.constant 0 : index
    %c0_76 = arith.constant 0 : index
    %172 = vector.load %arg14[%c0_74, %c0_75, %c0_76] : memref<2x1x32xf32, #tpu.memory_space<vmem>>, vector<1x1x32xf32>
    %173 = vector.shape_cast %172 : vector<1x1x32xf32> to vector<1x32xf32>
    %174 = vector.broadcast %173 : vector<1x32xf32> to vector<16x32xf32>
    %175 = arith.addf %171, %174 : vector<16x32xf32>
    %176 = arith.addf %148, %175 : vector<16x32xf32>
    %c0_77 = arith.constant 0 : index
    %c0_78 = arith.constant 0 : index
    %c0_79 = arith.constant 0 : index
    %177 = vector.load %arg15[%c0_77, %c0_78, %c0_79] : memref<2x1x32xf32, #tpu.memory_space<vmem>>, vector<1x1x32xf32>
    %178 = vector.shape_cast %177 : vector<1x1x32xf32> to vector<1x32xf32>
    %c0_80 = arith.constant 0 : index
    %c0_81 = arith.constant 0 : index
    %c0_82 = arith.constant 0 : index
    %179 = vector.load %arg16[%c0_80, %c0_81, %c0_82] : memref<2x1x32xf32, #tpu.memory_space<vmem>>, vector<1x1x32xf32>
    %180 = vector.shape_cast %179 : vector<1x1x32xf32> to vector<1x32xf32>
    %cst_83 = arith.constant dense<0.000000e+00> : vector<16xf32>
    %181 = vector.multi_reduction <add>, %176, %cst_83 [1] : vector<16x32xf32> to vector<16xf32>
    %182 = vector.shape_cast %181 : vector<16xf32> to vector<16x1xf32>
    %cst_84 = arith.constant 3.200000e+01 : f32
    %183 = vector.broadcast %cst_84 : f32 to vector<16x1xf32>
    %184 = arith.divf %182, %183 : vector<16x1xf32>
    %185 = vector.broadcast %184 : vector<16x1xf32> to vector<16x32xf32>
    %186 = arith.subf %176, %185 : vector<16x32xf32>
    %187 = arith.mulf %186, %186 : vector<16x32xf32>
    %cst_85 = arith.constant dense<0.000000e+00> : vector<16xf32>
    %188 = vector.multi_reduction <add>, %187, %cst_85 [1] : vector<16x32xf32> to vector<16xf32>
    %189 = vector.shape_cast %188 : vector<16xf32> to vector<16x1xf32>
    %cst_86 = arith.constant 3.200000e+01 : f32
    %190 = vector.broadcast %cst_86 : f32 to vector<16x1xf32>
    %191 = arith.divf %189, %190 : vector<16x1xf32>
    %192 = vector.broadcast %184 : vector<16x1xf32> to vector<16x32xf32>
    %193 = arith.subf %176, %192 : vector<16x32xf32>
    %cst_87 = arith.constant 9.99999996E-13 : f32
    %194 = vector.broadcast %cst_87 : f32 to vector<16x1xf32>
    %195 = arith.addf %191, %194 : vector<16x1xf32>
    %196 = math.rsqrt %195 : vector<16x1xf32>
    %197 = vector.broadcast %196 : vector<16x1xf32> to vector<16x32xf32>
    %198 = arith.mulf %193, %197 : vector<16x32xf32>
    %199 = vector.broadcast %178 : vector<1x32xf32> to vector<16x32xf32>
    %200 = arith.mulf %199, %198 : vector<16x32xf32>
    %201 = vector.broadcast %180 : vector<1x32xf32> to vector<16x32xf32>
    %202 = arith.addf %200, %201 : vector<16x32xf32>
    %c1 = arith.constant 1 : index
    %c0_88 = arith.constant 0 : index
    %c0_89 = arith.constant 0 : index
    %203 = vector.load %arg5[%c1, %c0_88, %c0_89] : memref<2x32x96xf32, #tpu.memory_space<vmem>>, vector<1x32x96xf32>
    %204 = vector.shape_cast %203 : vector<1x32x96xf32> to vector<32x96xf32>
    %cst_90 = arith.constant dense<0.000000e+00> : vector<16x96xf32>
    %205 = tpu.matmul %202, %204, %cst_90 {dimension_numbers = #tpu.dot_dimension_numbers<[1], [0], [0], [1], [0, 0, 1, 1], [], []>} : vector<16x32xf32>, vector<32x96xf32>, vector<16x96xf32> -> vector<16x96xf32>
    %c1_91 = arith.constant 1 : index
    %c0_92 = arith.constant 0 : index
    %c0_93 = arith.constant 0 : index
    %206 = vector.load %arg6[%c1_91, %c0_92, %c0_93] : memref<2x1x96xf32, #tpu.memory_space<vmem>>, vector<1x1x96xf32>
    %207 = vector.shape_cast %206 : vector<1x1x96xf32> to vector<1x96xf32>
    %208 = vector.broadcast %207 : vector<1x96xf32> to vector<16x96xf32>
    %209 = arith.addf %205, %208 : vector<16x96xf32>
    %c1_94 = arith.constant 1 : index
    %c0_95 = arith.constant 0 : index
    %c0_96 = arith.constant 0 : index
    %210 = vector.load %arg7[%c1_94, %c0_95, %c0_96] : memref<2x32x32xf32, #tpu.memory_space<vmem>>, vector<1x32x32xf32>
    %211 = vector.shape_cast %210 : vector<1x32x32xf32> to vector<32x32xf32>
    %212 = vector.extract_strided_slice %209 {offsets = [0, 0], sizes = [16, 8], strides = [1, 1]} : vector<16x96xf32> to vector<16x8xf32>
    %213 = vector.extract_strided_slice %209 {offsets = [0, 32], sizes = [16, 8], strides = [1, 1]} : vector<16x96xf32> to vector<16x8xf32>
    %214 = vector.extract_strided_slice %209 {offsets = [0, 64], sizes = [16, 8], strides = [1, 1]} : vector<16x96xf32> to vector<16x8xf32>
    "tpu.trace_start"() <{level = 10 : i32, message = "qd,kd->qk"}> : () -> ()
    %cst_97 = arith.constant dense<0.000000e+00> : vector<16x16xf32>
    %215 = tpu.matmul %212, %213, %cst_97 {dimension_numbers = #tpu.dot_dimension_numbers<[1], [1], [0], [0], [0, 0, 1, 0], [], []>} : vector<16x8xf32>, vector<16x8xf32>, vector<16x16xf32> -> vector<16x16xf32>
    "tpu.trace_stop"() : () -> ()
    %cst_98 = arith.constant 0.353553385 : f32
    %216 = vector.broadcast %cst_98 : f32 to vector<16x16xf32>
    %217 = arith.mulf %215, %216 : vector<16x16xf32>
    %218 = arith.addf %217, %25 : vector<16x16xf32>
    %cst_99 = arith.constant dense<0xFF800000> : vector<16xf32>
    %219 = vector.multi_reduction <maximumf>, %218, %cst_99 [1] : vector<16x16xf32> to vector<16xf32>
    %220 = vector.shape_cast %219 : vector<16xf32> to vector<16x1xf32>
    %221 = vector.broadcast %220 : vector<16x1xf32> to vector<16x16xf32>
    %222 = arith.subf %218, %221 : vector<16x16xf32>
    %223 = math.exp %222 : vector<16x16xf32>
    %cst_100 = arith.constant dense<0.000000e+00> : vector<16xf32>
    %224 = vector.multi_reduction <add>, %223, %cst_100 [1] : vector<16x16xf32> to vector<16xf32>
    %225 = vector.shape_cast %224 : vector<16xf32> to vector<16x1xf32>
    %226 = tpu.reciprocal %225 {approx = true} : vector<16x1xf32> -> vector<16x1xf32>
    %227 = vector.broadcast %226 : vector<16x1xf32> to vector<16x16xf32>
    %228 = arith.mulf %223, %227 : vector<16x16xf32>
    %cst_101 = arith.constant dense<0.000000e+00> : vector<16x8xf32>
    %229 = tpu.matmul %228, %214, %cst_101 {dimension_numbers = #tpu.dot_dimension_numbers<[1], [0], [0], [1], [0, 0, 1, 1], [], []>} : vector<16x16xf32>, vector<16x8xf32>, vector<16x8xf32> -> vector<16x8xf32>
    %230 = vector.extract_strided_slice %211 {offsets = [0, 0], sizes = [8, 32], strides = [1, 1]} : vector<32x32xf32> to vector<8x32xf32>
    %cst_102 = arith.constant dense<0.000000e+00> : vector<16x32xf32>
    %231 = tpu.matmul %229, %230, %cst_102 {dimension_numbers = #tpu.dot_dimension_numbers<[1], [0], [0], [1], [0, 0, 1, 1], [], []>} : vector<16x8xf32>, vector<8x32xf32>, vector<16x32xf32> -> vector<16x32xf32>
    %232 = vector.extract_strided_slice %209 {offsets = [0, 8], sizes = [16, 8], strides = [1, 1]} : vector<16x96xf32> to vector<16x8xf32>
    %233 = vector.extract_strided_slice %209 {offsets = [0, 40], sizes = [16, 8], strides = [1, 1]} : vector<16x96xf32> to vector<16x8xf32>
    %234 = vector.extract_strided_slice %209 {offsets = [0, 72], sizes = [16, 8], strides = [1, 1]} : vector<16x96xf32> to vector<16x8xf32>
    "tpu.trace_start"() <{level = 10 : i32, message = "qd,kd->qk"}> : () -> ()
    %cst_103 = arith.constant dense<0.000000e+00> : vector<16x16xf32>
    %235 = tpu.matmul %232, %233, %cst_103 {dimension_numbers = #tpu.dot_dimension_numbers<[1], [1], [0], [0], [0, 0, 1, 0], [], []>} : vector<16x8xf32>, vector<16x8xf32>, vector<16x16xf32> -> vector<16x16xf32>
    "tpu.trace_stop"() : () -> ()
    %cst_104 = arith.constant 0.353553385 : f32
    %236 = vector.broadcast %cst_104 : f32 to vector<16x16xf32>
    %237 = arith.mulf %235, %236 : vector<16x16xf32>
    %238 = arith.addf %237, %25 : vector<16x16xf32>
    %cst_105 = arith.constant dense<0xFF800000> : vector<16xf32>
    %239 = vector.multi_reduction <maximumf>, %238, %cst_105 [1] : vector<16x16xf32> to vector<16xf32>
    %240 = vector.shape_cast %239 : vector<16xf32> to vector<16x1xf32>
    %241 = vector.broadcast %240 : vector<16x1xf32> to vector<16x16xf32>
    %242 = arith.subf %238, %241 : vector<16x16xf32>
    %243 = math.exp %242 : vector<16x16xf32>
    %cst_106 = arith.constant dense<0.000000e+00> : vector<16xf32>
    %244 = vector.multi_reduction <add>, %243, %cst_106 [1] : vector<16x16xf32> to vector<16xf32>
    %245 = vector.shape_cast %244 : vector<16xf32> to vector<16x1xf32>
    %246 = tpu.reciprocal %245 {approx = true} : vector<16x1xf32> -> vector<16x1xf32>
    %247 = vector.broadcast %246 : vector<16x1xf32> to vector<16x16xf32>
    %248 = arith.mulf %243, %247 : vector<16x16xf32>
    %cst_107 = arith.constant dense<0.000000e+00> : vector<16x8xf32>
    %249 = tpu.matmul %248, %234, %cst_107 {dimension_numbers = #tpu.dot_dimension_numbers<[1], [0], [0], [1], [0, 0, 1, 1], [], []>} : vector<16x16xf32>, vector<16x8xf32>, vector<16x8xf32> -> vector<16x8xf32>
    %250 = vector.extract_strided_slice %211 {offsets = [8, 0], sizes = [8, 32], strides = [1, 1]} : vector<32x32xf32> to vector<8x32xf32>
    %cst_108 = arith.constant dense<0.000000e+00> : vector<16x32xf32>
    %251 = tpu.matmul %249, %250, %cst_108 {dimension_numbers = #tpu.dot_dimension_numbers<[1], [0], [0], [1], [0, 0, 1, 1], [], []>} : vector<16x8xf32>, vector<8x32xf32>, vector<16x32xf32> -> vector<16x32xf32>
    %252 = arith.addf %231, %251 : vector<16x32xf32>
    %253 = vector.extract_strided_slice %209 {offsets = [0, 16], sizes = [16, 8], strides = [1, 1]} : vector<16x96xf32> to vector<16x8xf32>
    %254 = vector.extract_strided_slice %209 {offsets = [0, 48], sizes = [16, 8], strides = [1, 1]} : vector<16x96xf32> to vector<16x8xf32>
    %255 = vector.extract_strided_slice %209 {offsets = [0, 80], sizes = [16, 8], strides = [1, 1]} : vector<16x96xf32> to vector<16x8xf32>
    "tpu.trace_start"() <{level = 10 : i32, message = "qd,kd->qk"}> : () -> ()
    %cst_109 = arith.constant dense<0.000000e+00> : vector<16x16xf32>
    %256 = tpu.matmul %253, %254, %cst_109 {dimension_numbers = #tpu.dot_dimension_numbers<[1], [1], [0], [0], [0, 0, 1, 0], [], []>} : vector<16x8xf32>, vector<16x8xf32>, vector<16x16xf32> -> vector<16x16xf32>
    "tpu.trace_stop"() : () -> ()
    %cst_110 = arith.constant 0.353553385 : f32
    %257 = vector.broadcast %cst_110 : f32 to vector<16x16xf32>
    %258 = arith.mulf %256, %257 : vector<16x16xf32>
    %259 = arith.addf %258, %25 : vector<16x16xf32>
    %cst_111 = arith.constant dense<0xFF800000> : vector<16xf32>
    %260 = vector.multi_reduction <maximumf>, %259, %cst_111 [1] : vector<16x16xf32> to vector<16xf32>
    %261 = vector.shape_cast %260 : vector<16xf32> to vector<16x1xf32>
    %262 = vector.broadcast %261 : vector<16x1xf32> to vector<16x16xf32>
    %263 = arith.subf %259, %262 : vector<16x16xf32>
    %264 = math.exp %263 : vector<16x16xf32>
    %cst_112 = arith.constant dense<0.000000e+00> : vector<16xf32>
    %265 = vector.multi_reduction <add>, %264, %cst_112 [1] : vector<16x16xf32> to vector<16xf32>
    %266 = vector.shape_cast %265 : vector<16xf32> to vector<16x1xf32>
    %267 = tpu.reciprocal %266 {approx = true} : vector<16x1xf32> -> vector<16x1xf32>
    %268 = vector.broadcast %267 : vector<16x1xf32> to vector<16x16xf32>
    %269 = arith.mulf %264, %268 : vector<16x16xf32>
    %cst_113 = arith.constant dense<0.000000e+00> : vector<16x8xf32>
    %270 = tpu.matmul %269, %255, %cst_113 {dimension_numbers = #tpu.dot_dimension_numbers<[1], [0], [0], [1], [0, 0, 1, 1], [], []>} : vector<16x16xf32>, vector<16x8xf32>, vector<16x8xf32> -> vector<16x8xf32>
    %271 = vector.extract_strided_slice %211 {offsets = [16, 0], sizes = [8, 32], strides = [1, 1]} : vector<32x32xf32> to vector<8x32xf32>
    %cst_114 = arith.constant dense<0.000000e+00> : vector<16x32xf32>
    %272 = tpu.matmul %270, %271, %cst_114 {dimension_numbers = #tpu.dot_dimension_numbers<[1], [0], [0], [1], [0, 0, 1, 1], [], []>} : vector<16x8xf32>, vector<8x32xf32>, vector<16x32xf32> -> vector<16x32xf32>
    %273 = arith.addf %252, %272 : vector<16x32xf32>
    %274 = vector.extract_strided_slice %209 {offsets = [0, 24], sizes = [16, 8], strides = [1, 1]} : vector<16x96xf32> to vector<16x8xf32>
    %275 = vector.extract_strided_slice %209 {offsets = [0, 56], sizes = [16, 8], strides = [1, 1]} : vector<16x96xf32> to vector<16x8xf32>
    %276 = vector.extract_strided_slice %209 {offsets = [0, 88], sizes = [16, 8], strides = [1, 1]} : vector<16x96xf32> to vector<16x8xf32>
    "tpu.trace_start"() <{level = 10 : i32, message = "qd,kd->qk"}> : () -> ()
    %cst_115 = arith.constant dense<0.000000e+00> : vector<16x16xf32>
    %277 = tpu.matmul %274, %275, %cst_115 {dimension_numbers = #tpu.dot_dimension_numbers<[1], [1], [0], [0], [0, 0, 1, 0], [], []>} : vector<16x8xf32>, vector<16x8xf32>, vector<16x16xf32> -> vector<16x16xf32>
    "tpu.trace_stop"() : () -> ()
    %cst_116 = arith.constant 0.353553385 : f32
    %278 = vector.broadcast %cst_116 : f32 to vector<16x16xf32>
    %279 = arith.mulf %277, %278 : vector<16x16xf32>
    %280 = arith.addf %279, %25 : vector<16x16xf32>
    %cst_117 = arith.constant dense<0xFF800000> : vector<16xf32>
    %281 = vector.multi_reduction <maximumf>, %280, %cst_117 [1] : vector<16x16xf32> to vector<16xf32>
    %282 = vector.shape_cast %281 : vector<16xf32> to vector<16x1xf32>
    %283 = vector.broadcast %282 : vector<16x1xf32> to vector<16x16xf32>
    %284 = arith.subf %280, %283 : vector<16x16xf32>
    %285 = math.exp %284 : vector<16x16xf32>
    %cst_118 = arith.constant dense<0.000000e+00> : vector<16xf32>
    %286 = vector.multi_reduction <add>, %285, %cst_118 [1] : vector<16x16xf32> to vector<16xf32>
    %287 = vector.shape_cast %286 : vector<16xf32> to vector<16x1xf32>
    %288 = tpu.reciprocal %287 {approx = true} : vector<16x1xf32> -> vector<16x1xf32>
    %289 = vector.broadcast %288 : vector<16x1xf32> to vector<16x16xf32>
    %290 = arith.mulf %285, %289 : vector<16x16xf32>
    %cst_119 = arith.constant dense<0.000000e+00> : vector<16x8xf32>
    %291 = tpu.matmul %290, %276, %cst_119 {dimension_numbers = #tpu.dot_dimension_numbers<[1], [0], [0], [1], [0, 0, 1, 1], [], []>} : vector<16x16xf32>, vector<16x8xf32>, vector<16x8xf32> -> vector<16x8xf32>
    %292 = vector.extract_strided_slice %211 {offsets = [24, 0], sizes = [8, 32], strides = [1, 1]} : vector<32x32xf32> to vector<8x32xf32>
    %cst_120 = arith.constant dense<0.000000e+00> : vector<16x32xf32>
    %293 = tpu.matmul %291, %292, %cst_120 {dimension_numbers = #tpu.dot_dimension_numbers<[1], [0], [0], [1], [0, 0, 1, 1], [], []>} : vector<16x8xf32>, vector<8x32xf32>, vector<16x32xf32> -> vector<16x32xf32>
    %294 = arith.addf %273, %293 : vector<16x32xf32>
    %c1_121 = arith.constant 1 : index
    %c0_122 = arith.constant 0 : index
    %c0_123 = arith.constant 0 : index
    %295 = vector.load %arg8[%c1_121, %c0_122, %c0_123] : memref<2x1x32xf32, #tpu.memory_space<vmem>>, vector<1x1x32xf32>
    %296 = vector.shape_cast %295 : vector<1x1x32xf32> to vector<1x32xf32>
    %297 = vector.broadcast %296 : vector<1x32xf32> to vector<16x32xf32>
    %298 = arith.addf %294, %297 : vector<16x32xf32>
    %299 = arith.addf %202, %298 : vector<16x32xf32>
    %c1_124 = arith.constant 1 : index
    %c0_125 = arith.constant 0 : index
    %c0_126 = arith.constant 0 : index
    %300 = vector.load %arg9[%c1_124, %c0_125, %c0_126] : memref<2x1x32xf32, #tpu.memory_space<vmem>>, vector<1x1x32xf32>
    %301 = vector.shape_cast %300 : vector<1x1x32xf32> to vector<1x32xf32>
    %c1_127 = arith.constant 1 : index
    %c0_128 = arith.constant 0 : index
    %c0_129 = arith.constant 0 : index
    %302 = vector.load %arg10[%c1_127, %c0_128, %c0_129] : memref<2x1x32xf32, #tpu.memory_space<vmem>>, vector<1x1x32xf32>
    %303 = vector.shape_cast %302 : vector<1x1x32xf32> to vector<1x32xf32>
    %cst_130 = arith.constant dense<0.000000e+00> : vector<16xf32>
    %304 = vector.multi_reduction <add>, %299, %cst_130 [1] : vector<16x32xf32> to vector<16xf32>
    %305 = vector.shape_cast %304 : vector<16xf32> to vector<16x1xf32>
    %cst_131 = arith.constant 3.200000e+01 : f32
    %306 = vector.broadcast %cst_131 : f32 to vector<16x1xf32>
    %307 = arith.divf %305, %306 : vector<16x1xf32>
    %308 = vector.broadcast %307 : vector<16x1xf32> to vector<16x32xf32>
    %309 = arith.subf %299, %308 : vector<16x32xf32>
    %310 = arith.mulf %309, %309 : vector<16x32xf32>
    %cst_132 = arith.constant dense<0.000000e+00> : vector<16xf32>
    %311 = vector.multi_reduction <add>, %310, %cst_132 [1] : vector<16x32xf32> to vector<16xf32>
    %312 = vector.shape_cast %311 : vector<16xf32> to vector<16x1xf32>
    %cst_133 = arith.constant 3.200000e+01 : f32
    %313 = vector.broadcast %cst_133 : f32 to vector<16x1xf32>
    %314 = arith.divf %312, %313 : vector<16x1xf32>
    %315 = vector.broadcast %307 : vector<16x1xf32> to vector<16x32xf32>
    %316 = arith.subf %299, %315 : vector<16x32xf32>
    %cst_134 = arith.constant 9.99999996E-13 : f32
    %317 = vector.broadcast %cst_134 : f32 to vector<16x1xf32>
    %318 = arith.addf %314, %317 : vector<16x1xf32>
    %319 = math.rsqrt %318 : vector<16x1xf32>
    %320 = vector.broadcast %319 : vector<16x1xf32> to vector<16x32xf32>
    %321 = arith.mulf %316, %320 : vector<16x32xf32>
    %322 = vector.broadcast %301 : vector<1x32xf32> to vector<16x32xf32>
    %323 = arith.mulf %322, %321 : vector<16x32xf32>
    %324 = vector.broadcast %303 : vector<1x32xf32> to vector<16x32xf32>
    %325 = arith.addf %323, %324 : vector<16x32xf32>
    %c1_135 = arith.constant 1 : index
    %c0_136 = arith.constant 0 : index
    %c0_137 = arith.constant 0 : index
    %326 = vector.load %arg11[%c1_135, %c0_136, %c0_137] : memref<2x32x64xf32, #tpu.memory_space<vmem>>, vector<1x32x64xf32>
    %327 = vector.shape_cast %326 : vector<1x32x64xf32> to vector<32x64xf32>
    %cst_138 = arith.constant dense<0.000000e+00> : vector<16x64xf32>
    %328 = tpu.matmul %325, %327, %cst_138 {dimension_numbers = #tpu.dot_dimension_numbers<[1], [0], [0], [1], [0, 0, 1, 1], [], []>} : vector<16x32xf32>, vector<32x64xf32>, vector<16x64xf32> -> vector<16x64xf32>
    %c1_139 = arith.constant 1 : index
    %c0_140 = arith.constant 0 : index
    %c0_141 = arith.constant 0 : index
    %329 = vector.load %arg12[%c1_139, %c0_140, %c0_141] : memref<2x1x64xf32, #tpu.memory_space<vmem>>, vector<1x1x64xf32>
    %330 = vector.shape_cast %329 : vector<1x1x64xf32> to vector<1x64xf32>
    %331 = vector.broadcast %330 : vector<1x64xf32> to vector<16x64xf32>
    %332 = arith.addf %328, %331 : vector<16x64xf32>
    %cst_142 = arith.constant 5.000000e-01 : f32
    %333 = vector.broadcast %cst_142 : f32 to vector<16x64xf32>
    %334 = arith.mulf %333, %332 : vector<16x64xf32>
    %cst_143 = arith.constant 4.471500e-02 : f32
    %335 = vector.broadcast %cst_143 : f32 to vector<16x64xf32>
    %336 = arith.mulf %335, %332 : vector<16x64xf32>
    %337 = arith.mulf %336, %332 : vector<16x64xf32>
    %338 = arith.mulf %337, %332 : vector<16x64xf32>
    %339 = arith.addf %332, %338 : vector<16x64xf32>
    %cst_144 = arith.constant 0.797884583 : f32
    %340 = vector.broadcast %cst_144 : f32 to vector<16x64xf32>
    %341 = arith.mulf %340, %339 : vector<16x64xf32>
    %342 = math.tanh %341 : vector<16x64xf32>
    %cst_145 = arith.constant 1.000000e+00 : f32
    %343 = vector.broadcast %cst_145 : f32 to vector<16x64xf32>
    %344 = arith.addf %343, %342 : vector<16x64xf32>
    %345 = arith.mulf %334, %344 : vector<16x64xf32>
    %c1_146 = arith.constant 1 : index
    %c0_147 = arith.constant 0 : index
    %c0_148 = arith.constant 0 : index
    %346 = vector.load %arg13[%c1_146, %c0_147, %c0_148] : memref<2x64x32xf32, #tpu.memory_space<vmem>>, vector<1x64x32xf32>
    %347 = vector.shape_cast %346 : vector<1x64x32xf32> to vector<64x32xf32>
    %cst_149 = arith.constant dense<0.000000e+00> : vector<16x32xf32>
    %348 = tpu.matmul %345, %347, %cst_149 {dimension_numbers = #tpu.dot_dimension_numbers<[1], [0], [0], [1], [0, 0, 1, 1], [], []>} : vector<16x64xf32>, vector<64x32xf32>, vector<16x32xf32> -> vector<16x32xf32>
    %c1_150 = arith.constant 1 : index
    %c0_151 = arith.constant 0 : index
    %c0_152 = arith.constant 0 : index
    %349 = vector.load %arg14[%c1_150, %c0_151, %c0_152] : memref<2x1x32xf32, #tpu.memory_space<vmem>>, vector<1x1x32xf32>
    %350 = vector.shape_cast %349 : vector<1x1x32xf32> to vector<1x32xf32>
    %351 = vector.broadcast %350 : vector<1x32xf32> to vector<16x32xf32>
    %352 = arith.addf %348, %351 : vector<16x32xf32>
    %353 = arith.addf %325, %352 : vector<16x32xf32>
    %c1_153 = arith.constant 1 : index
    %c0_154 = arith.constant 0 : index
    %c0_155 = arith.constant 0 : index
    %354 = vector.load %arg15[%c1_153, %c0_154, %c0_155] : memref<2x1x32xf32, #tpu.memory_space<vmem>>, vector<1x1x32xf32>
    %355 = vector.shape_cast %354 : vector<1x1x32xf32> to vector<1x32xf32>
    %c1_156 = arith.constant 1 : index
    %c0_157 = arith.constant 0 : index
    %c0_158 = arith.constant 0 : index
    %356 = vector.load %arg16[%c1_156, %c0_157, %c0_158] : memref<2x1x32xf32, #tpu.memory_space<vmem>>, vector<1x1x32xf32>
    %357 = vector.shape_cast %356 : vector<1x1x32xf32> to vector<1x32xf32>
    %cst_159 = arith.constant dense<0.000000e+00> : vector<16xf32>
    %358 = vector.multi_reduction <add>, %353, %cst_159 [1] : vector<16x32xf32> to vector<16xf32>
    %359 = vector.shape_cast %358 : vector<16xf32> to vector<16x1xf32>
    %cst_160 = arith.constant 3.200000e+01 : f32
    %360 = vector.broadcast %cst_160 : f32 to vector<16x1xf32>
    %361 = arith.divf %359, %360 : vector<16x1xf32>
    %362 = vector.broadcast %361 : vector<16x1xf32> to vector<16x32xf32>
    %363 = arith.subf %353, %362 : vector<16x32xf32>
    %364 = arith.mulf %363, %363 : vector<16x32xf32>
    %cst_161 = arith.constant dense<0.000000e+00> : vector<16xf32>
    %365 = vector.multi_reduction <add>, %364, %cst_161 [1] : vector<16x32xf32> to vector<16xf32>
    %366 = vector.shape_cast %365 : vector<16xf32> to vector<16x1xf32>
    %cst_162 = arith.constant 3.200000e+01 : f32
    %367 = vector.broadcast %cst_162 : f32 to vector<16x1xf32>
    %368 = arith.divf %366, %367 : vector<16x1xf32>
    %369 = vector.broadcast %361 : vector<16x1xf32> to vector<16x32xf32>
    %370 = arith.subf %353, %369 : vector<16x32xf32>
    %cst_163 = arith.constant 9.99999996E-13 : f32
    %371 = vector.broadcast %cst_163 : f32 to vector<16x1xf32>
    %372 = arith.addf %368, %371 : vector<16x1xf32>
    %373 = math.rsqrt %372 : vector<16x1xf32>
    %374 = vector.broadcast %373 : vector<16x1xf32> to vector<16x32xf32>
    %375 = arith.mulf %370, %374 : vector<16x32xf32>
    %376 = vector.broadcast %355 : vector<1x32xf32> to vector<16x32xf32>
    %377 = arith.mulf %376, %375 : vector<16x32xf32>
    %378 = vector.broadcast %357 : vector<1x32xf32> to vector<16x32xf32>
    %379 = arith.addf %377, %378 : vector<16x32xf32>
    %c0_164 = arith.constant 0 : index
    %c0_165 = arith.constant 0 : index
    %380 = vector.load %arg17[%c0_164, %c0_165] : memref<32x32xf32, #tpu.memory_space<vmem>>, vector<32x32xf32>
    %c0_166 = arith.constant 0 : index
    %c0_167 = arith.constant 0 : index
    %381 = vector.load %arg18[%c0_166, %c0_167] : memref<1x32xf32, #tpu.memory_space<vmem>>, vector<1x32xf32>
    %c0_168 = arith.constant 0 : index
    %c0_169 = arith.constant 0 : index
    %382 = vector.load %arg19[%c0_168, %c0_169] : memref<1x32xf32, #tpu.memory_space<vmem>>, vector<1x32xf32>
    %c0_170 = arith.constant 0 : index
    %c0_171 = arith.constant 0 : index
    %383 = vector.load %arg20[%c0_170, %c0_171] : memref<1x1xf32, #tpu.memory_space<vmem>>, vector<1x1xf32>
    %384 = vector.extract_strided_slice %379 {offsets = [0, 0], sizes = [1, 32], strides = [1, 1]} : vector<16x32xf32> to vector<1x32xf32>
    %cst_172 = arith.constant dense<0.000000e+00> : vector<1x32xf32>
    %385 = tpu.matmul %384, %380, %cst_172 {dimension_numbers = #tpu.dot_dimension_numbers<[1], [0], [0], [1], [0, 0, 1, 1], [], []>} : vector<1x32xf32>, vector<32x32xf32>, vector<1x32xf32> -> vector<1x32xf32>
    %386 = arith.addf %385, %381 : vector<1x32xf32>
    %387 = math.tanh %386 : vector<1x32xf32>
    %388 = arith.mulf %387, %382 : vector<1x32xf32>
    %cst_173 = arith.constant dense<0.000000e+00> : vector<1xf32>
    %389 = vector.multi_reduction <add>, %388, %cst_173 [1] : vector<1x32xf32> to vector<1xf32>
    %390 = vector.shape_cast %389 : vector<1xf32> to vector<1x1xf32>
    %391 = arith.addf %390, %383 : vector<1x1xf32>
    %cst_174 = arith.constant 0.000000e+00 : f32
    %392 = vector.broadcast %cst_174 : f32 to vector<1x1xf32>
    %393 = arith.maximumf %391, %392 : vector<1x1xf32>
    %c0_175 = arith.constant 0 : index
    %c0_176 = arith.constant 0 : index
    %394 = vector.load %arg21[%c0_175, %c0_176] : memref<2x1xf32, #tpu.memory_space<vmem>>, vector<1x1xf32>
    tpu.vector_store %arg21[%c0_175, %c0_176], %393 {strides = array<i32>} : memref<2x1xf32, #tpu.memory_space<vmem>>, vector<1x1xf32>,
    %395 = vector.extract_strided_slice %379 {offsets = [8, 0], sizes = [1, 32], strides = [1, 1]} : vector<16x32xf32> to vector<1x32xf32>
    %cst_177 = arith.constant dense<0.000000e+00> : vector<1x32xf32>
    %396 = tpu.matmul %395, %380, %cst_177 {dimension_numbers = #tpu.dot_dimension_numbers<[1], [0], [0], [1], [0, 0, 1, 1], [], []>} : vector<1x32xf32>, vector<32x32xf32>, vector<1x32xf32> -> vector<1x32xf32>
    %397 = arith.addf %396, %381 : vector<1x32xf32>
    %398 = math.tanh %397 : vector<1x32xf32>
    %399 = arith.mulf %398, %382 : vector<1x32xf32>
    %cst_178 = arith.constant dense<0.000000e+00> : vector<1xf32>
    %400 = vector.multi_reduction <add>, %399, %cst_178 [1] : vector<1x32xf32> to vector<1xf32>
    %401 = vector.shape_cast %400 : vector<1xf32> to vector<1x1xf32>
    %402 = arith.addf %401, %383 : vector<1x1xf32>
    %cst_179 = arith.constant 0.000000e+00 : f32
    %403 = vector.broadcast %cst_179 : f32 to vector<1x1xf32>
    %404 = arith.maximumf %402, %403 : vector<1x1xf32>
    %c1_180 = arith.constant 1 : index
    %c0_181 = arith.constant 0 : index
    %405 = vector.load %arg21[%c1_180, %c0_181] : memref<2x1xf32, #tpu.memory_space<vmem>>, vector<1x1xf32>
    tpu.vector_store %arg21[%c1_180, %c0_181], %404 {strides = array<i32>} : memref<2x1xf32, #tpu.memory_space<vmem>>, vector<1x1xf32>,
    return
  }
  func.func @transform_0(%arg0: i32) -> (i32, i32) {
    %c0_i32 = arith.constant 0 : i32
    %c0_i32_0 = arith.constant 0 : i32
    %c0_i32_1 = arith.constant 0 : i32
    return %c0_i32, %c0_i32_0 : i32, i32
  }
  func.func @transform_1(%arg0: i32) -> (i32, i32) {
    %c0_i32 = arith.constant 0 : i32
    %c0_i32_0 = arith.constant 0 : i32
    %c0_i32_1 = arith.constant 0 : i32
    return %c0_i32, %c0_i32_0 : i32, i32
  }
  func.func @transform_2(%arg0: i32) -> (i32, i32) {
    %c0_i32 = arith.constant 0 : i32
    %c0_i32_0 = arith.constant 0 : i32
    %c0_i32_1 = arith.constant 0 : i32
    return %c0_i32, %c0_i32_0 : i32, i32
  }
  func.func @transform_3(%arg0: i32) -> (i32, i32) {
    %c0_i32 = arith.constant 0 : i32
    %c0_i32_0 = arith.constant 0 : i32
    %c0_i32_1 = arith.constant 0 : i32
    return %c0_i32, %c0_i32_0 : i32, i32
  }
  func.func @transform_4(%arg0: i32) -> (i32, i32, i32) {
    %c0_i32 = arith.constant 0 : i32
    %c0_i32_0 = arith.constant 0 : i32
    %c0_i32_1 = arith.constant 0 : i32
    %c0_i32_2 = arith.constant 0 : i32
    return %c0_i32, %c0_i32_0, %c0_i32_1 : i32, i32, i32
  }
  func.func @transform_5(%arg0: i32) -> (i32, i32, i32) {
    %c0_i32 = arith.constant 0 : i32
    %c0_i32_0 = arith.constant 0 : i32
    %c0_i32_1 = arith.constant 0 : i32
    %c0_i32_2 = arith.constant 0 : i32
    return %c0_i32, %c0_i32_0, %c0_i32_1 : i32, i32, i32
  }
  func.func @transform_6(%arg0: i32) -> (i32, i32, i32) {
    %c0_i32 = arith.constant 0 : i32
    %c0_i32_0 = arith.constant 0 : i32
    %c0_i32_1 = arith.constant 0 : i32
    %c0_i32_2 = arith.constant 0 : i32
    return %c0_i32, %c0_i32_0, %c0_i32_1 : i32, i32, i32
  }
  func.func @transform_7(%arg0: i32) -> (i32, i32, i32) {
    %c0_i32 = arith.constant 0 : i32
    %c0_i32_0 = arith.constant 0 : i32
    %c0_i32_1 = arith.constant 0 : i32
    %c0_i32_2 = arith.constant 0 : i32
    return %c0_i32, %c0_i32_0, %c0_i32_1 : i32, i32, i32
  }
  func.func @transform_8(%arg0: i32) -> (i32, i32, i32) {
    %c0_i32 = arith.constant 0 : i32
    %c0_i32_0 = arith.constant 0 : i32
    %c0_i32_1 = arith.constant 0 : i32
    %c0_i32_2 = arith.constant 0 : i32
    return %c0_i32, %c0_i32_0, %c0_i32_1 : i32, i32, i32
  }
  func.func @transform_9(%arg0: i32) -> (i32, i32, i32) {
    %c0_i32 = arith.constant 0 : i32
    %c0_i32_0 = arith.constant 0 : i32
    %c0_i32_1 = arith.constant 0 : i32
    %c0_i32_2 = arith.constant 0 : i32
    return %c0_i32, %c0_i32_0, %c0_i32_1 : i32, i32, i32
  }
  func.func @transform_10(%arg0: i32) -> (i32, i32, i32) {
    %c0_i32 = arith.constant 0 : i32
    %c0_i32_0 = arith.constant 0 : i32
    %c0_i32_1 = arith.constant 0 : i32
    %c0_i32_2 = arith.constant 0 : i32
    return %c0_i32, %c0_i32_0, %c0_i32_1 : i32, i32, i32
  }
  func.func @transform_11(%arg0: i32) -> (i32, i32, i32) {
    %c0_i32 = arith.constant 0 : i32
    %c0_i32_0 = arith.constant 0 : i32
    %c0_i32_1 = arith.constant 0 : i32
    %c0_i32_2 = arith.constant 0 : i32
    return %c0_i32, %c0_i32_0, %c0_i32_1 : i32, i32, i32
  }
  func.func @transform_12(%arg0: i32) -> (i32, i32, i32) {
    %c0_i32 = arith.constant 0 : i32
    %c0_i32_0 = arith.constant 0 : i32
    %c0_i32_1 = arith.constant 0 : i32
    %c0_i32_2 = arith.constant 0 : i32
    return %c0_i32, %c0_i32_0, %c0_i32_1 : i32, i32, i32
  }
  func.func @transform_13(%arg0: i32) -> (i32, i32, i32) {
    %c0_i32 = arith.constant 0 : i32
    %c0_i32_0 = arith.constant 0 : i32
    %c0_i32_1 = arith.constant 0 : i32
    %c0_i32_2 = arith.constant 0 : i32
    return %c0_i32, %c0_i32_0, %c0_i32_1 : i32, i32, i32
  }
  func.func @transform_14(%arg0: i32) -> (i32, i32, i32) {
    %c0_i32 = arith.constant 0 : i32
    %c0_i32_0 = arith.constant 0 : i32
    %c0_i32_1 = arith.constant 0 : i32
    %c0_i32_2 = arith.constant 0 : i32
    return %c0_i32, %c0_i32_0, %c0_i32_1 : i32, i32, i32
  }
  func.func @transform_15(%arg0: i32) -> (i32, i32, i32) {
    %c0_i32 = arith.constant 0 : i32
    %c0_i32_0 = arith.constant 0 : i32
    %c0_i32_1 = arith.constant 0 : i32
    %c0_i32_2 = arith.constant 0 : i32
    return %c0_i32, %c0_i32_0, %c0_i32_1 : i32, i32, i32
  }
  func.func @transform_16(%arg0: i32) -> (i32, i32) {
    %c0_i32 = arith.constant 0 : i32
    %c0_i32_0 = arith.constant 0 : i32
    %c0_i32_1 = arith.constant 0 : i32
    return %c0_i32, %c0_i32_0 : i32, i32
  }
  func.func @transform_17(%arg0: i32) -> (i32, i32) {
    %c0_i32 = arith.constant 0 : i32
    %c0_i32_0 = arith.constant 0 : i32
    %c0_i32_1 = arith.constant 0 : i32
    return %c0_i32, %c0_i32_0 : i32, i32
  }
  func.func @transform_18(%arg0: i32) -> (i32, i32) {
    %c0_i32 = arith.constant 0 : i32
    %c0_i32_0 = arith.constant 0 : i32
    %c0_i32_1 = arith.constant 0 : i32
    return %c0_i32, %c0_i32_0 : i32, i32
  }
  func.func @transform_19(%arg0: i32) -> (i32, i32) {
    %c0_i32 = arith.constant 0 : i32
    %c0_i32_0 = arith.constant 0 : i32
    %c0_i32_1 = arith.constant 0 : i32
    return %c0_i32, %c0_i32_0 : i32, i32
  }
  func.func @transform_20(%arg0: i32) -> (i32, i32) {
    %c0_i32 = arith.constant 0 : i32
    %c0_i32_0 = arith.constant 0 : i32
    %c0_i32_1 = arith.constant 0 : i32
    return %c0_i32, %c0_i32_0 : i32, i32
  }
}

</mosaic_0001>

<llo_original>
// kernel: mul.8
$region0: #{mul.8}
  %s0 = inlined_call_operand.vmem [shape: f32[2,8], index: 0, kind: input, shape index: {}]
  %s1 = inlined_call_operand.vmem [shape: f32[16], index: 1, kind: output, shape index: {}]
  $region1: #{mul.8} parent=0
    #allocation0 [shape = 'u8[4096]{0}', space=vmem, size = 0x1000, scoped, tag = 'scoped mem for output reshape']
    #allocation1 [shape = 'u8[4096]{0}', space=vmem, size = 0x1000, scoped, tag = 'scoped mem for input reshape']
    %s3 = sshllo.u32 0, 2
    %v4 = vld [vmem:[%s0] sm:%s3]
    %5 = vst [vmem:[#allocation1] sm:%s3] %v4
    %v6 = vld [vmem:[#allocation1] sm:$0x1]
    %vm7 = vcmask 64512
    %8 = vst.msk [vmem:[#allocation0] sm:$0x1] %vm7, %v6
    %s9 = scalar_lea.vmem [#allocation1], 1
    %v10 = vld [vmem:[%s9] sm:$0x1]
    %11 = vrot.lane.b32.xlu0 %v10, 8
    %v12 = vpop.permute.xlu0 %11
    %vm13 = vcmask 130112
    %14 = vst.msk [vmem:[#allocation0] sm:$0x1] %vm13, %v12
    %s16 = sshllo.u32 0, 1
    %v18 = vld [vmem:[#allocation0] sm:%s16]
    %s19 = sshllo.u32 0, 1
    %20 = vst [vmem:[%s1] sm:%s19] %v18

// kernel: predictor_forward.1
$region0: #{predictor_forward.1}
  #allocation0 [shape = 'u32[]', space=smem, size = 0x4, offset = 0x4, fixed_abs, tag = 'smem constant byte address 0x4 - core index']
  #allocation1 [shape = 'u32[144,128]{1,0:T(1,128)}', space=vmem, size = 0x12000, scoped, tag = 'internal scratch']
  #allocation2 [shape = 'f32[1,1]{1,0:T(1,128)S(1)}', space=vmem, size = 0x200, scoped, tag = 'scoped memory for predictor_forward.1']
  %s0 = inlined_call_operand.vmem [shape: f32[16,32], index: 0, kind: input, shape index: {}]
  %s1 = inlined_call_operand.vmem [shape: f32[16,16], index: 1, kind: input, shape index: {}]
  %s2 = inlined_call_operand.vmem [shape: f32[1,32], index: 2, kind: input, shape index: {}]
  %s3 = inlined_call_operand.vmem [shape: f32[1,32], index: 3, kind: input, shape index: {}]
  %s4 = inlined_call_operand.vmem [shape: f32[2,32,96], index: 4, kind: input, shape index: {}]
  %s5 = inlined_call_operand.vmem [shape: f32[2,1,96], index: 5, kind: input, shape index: {}]
  %s6 = inlined_call_operand.vmem [shape: f32[2,32,32], index: 6, kind: input, shape index: {}]
  %s7 = inlined_call_operand.vmem [shape: f32[2,1,32], index: 7, kind: input, shape index: {}]
  %s8 = inlined_call_operand.vmem [shape: f32[2,1,32], index: 8, kind: input, shape index: {}]
  %s9 = inlined_call_operand.vmem [shape: f32[2,1,32], index: 9, kind: input, shape index: {}]
  %s10 = inlined_call_operand.vmem [shape: f32[2,32,64], index: 10, kind: input, shape index: {}]
  %s11 = inlined_call_operand.vmem [shape: f32[2,1,64], index: 11, kind: input, shape index: {}]
  %s12 = inlined_call_operand.vmem [shape: f32[2,64,32], index: 12, kind: input, shape index: {}]
  %s13 = inlined_call_operand.vmem [shape: f32[2,1,32], index: 13, kind: input, shape index: {}]
  %s14 = inlined_call_operand.vmem [shape: f32[2,1,32], index: 14, kind: input, shape index: {}]
  %s15 = inlined_call_operand.vmem [shape: f32[2,1,32], index: 15, kind: input, shape index: {}]
  %s16 = inlined_call_operand.vmem [shape: f32[32,32], index: 16, kind: input, shape index: {}]
  %s17 = inlined_call_operand.vmem [shape: f32[1,32], index: 17, kind: input, shape index: {}]
  %s18 = inlined_call_operand.vmem [shape: f32[1,32], index: 18, kind: input, shape index: {}]
  %s19 = inlined_call_operand.<no memory space> [shape: f32[1,1], index: 19, kind: input, shape index: {}]
  %s20 = inlined_call_operand.vmem [shape: f32[2,1], index: 20, kind: output, shape index: {}]
  %s21 = sld [smem:[#allocation0]]
  $region90: #{predictor_forward.1} parent=0
    _
  %s23 = ssub.s32 1, %s21
  %s24 = scalar_select 0, %s23, %s21
  %v25 = vstv %s19
  %26 = vst [vmem:[#allocation2] sm:$0x1] %v25
  // Predicated region
  $region2: #{predictor_forward.1} parent=0 // pred_check
    _
  $region3: #{predictor_forward.1} parent=0 // pred_check_branch
    %28 = sbr.rel (0) target = $region5
  $region4: #{predictor_forward.1} parent=0 // pred_region
    _
  $region5: #{predictor_forward.1} parent=0 // pred_fallthru
    _
  // Predicated region
  $region6: #{predictor_forward.1} parent=0 // pred_check
    _
  $region7: #{predictor_forward.1} parent=0 // pred_check_branch
    %30 = sbr.rel (0) target = $region9
  $region8: #{predictor_forward.1} parent=0 // pred_region
    _
  $region9: #{predictor_forward.1} parent=0 // pred_fallthru
    _
  // Predicated region
  $region10: #{predictor_forward.1} parent=0 // pred_check
    _
  $region11: #{predictor_forward.1} parent=0 // pred_check_branch
    %32 = sbr.rel (0) target = $region13
  $region12: #{predictor_forward.1} parent=0 // pred_region
    _
  $region13: #{predictor_forward.1} parent=0 // pred_fallthru
    _
  // Predicated region
  $region14: #{predictor_forward.1} parent=0 // pred_check
    _
  $region15: #{predictor_forward.1} parent=0 // pred_check_branch
    %34 = sbr.rel (0) target = $region17
  $region16: #{predictor_forward.1} parent=0 // pred_region
    _
  $region17: #{predictor_forward.1} parent=0 // pred_fallthru
    _
  // Predicated region
  $region18: #{predictor_forward.1} parent=0 // pred_check
    _
  $region19: #{predictor_forward.1} parent=0 // pred_check_branch
    %36 = sbr.rel (0) target = $region21
  $region20: #{predictor_forward.1} parent=0 // pred_region
    _
  $region21: #{predictor_forward.1} parent=0 // pred_fallthru
    _
  // Predicated region
  $region22: #{predictor_forward.1} parent=0 // pred_check
    _
  $region23: #{predictor_forward.1} parent=0 // pred_check_branch
    %38 = sbr.rel (0) target = $region25
  $region24: #{predictor_forward.1} parent=0 // pred_region
    _
  $region25: #{predictor_forward.1} parent=0 // pred_fallthru
    _
  // Predicated region
  $region26: #{predictor_forward.1} parent=0 // pred_check
    _
  $region27: #{predictor_forward.1} parent=0 // pred_check_branch
    %40 = sbr.rel (0) target = $region29
  $region28: #{predictor_forward.1} parent=0 // pred_region
    _
  $region29: #{predictor_forward.1} parent=0 // pred_fallthru
    _
  // Predicated region
  $region30: #{predictor_forward.1} parent=0 // pred_check
    _
  $region31: #{predictor_forward.1} parent=0 // pred_check_branch
    %42 = sbr.rel (0) target = $region33
  $region32: #{predictor_forward.1} parent=0 // pred_region
    _
  $region33: #{predictor_forward.1} parent=0 // pred_fallthru
    _
  // Predicated region
  $region34: #{predictor_forward.1} parent=0 // pred_check
    _
  $region35: #{predictor_forward.1} parent=0 // pred_check_branch
    %44 = sbr.rel (0) target = $region37
  $region36: #{predictor_forward.1} parent=0 // pred_region
    _
  $region37: #{predictor_forward.1} parent=0 // pred_fallthru
    _
  // Predicated region
  $region38: #{predictor_forward.1} parent=0 // pred_check
    _
  $region39: #{predictor_forward.1} parent=0 // pred_check_branch
    %46 = sbr.rel (0) target = $region41
  $region40: #{predictor_forward.1} parent=0 // pred_region
    _
  $region41: #{predictor_forward.1} parent=0 // pred_fallthru
    _
  // Predicated region
  $region42: #{predictor_forward.1} parent=0 // pred_check
    _
  $region43: #{predictor_forward.1} parent=0 // pred_check_branch
    %48 = sbr.rel (0) target = $region45
  $region44: #{predictor_forward.1} parent=0 // pred_region
    _
  $region45: #{predictor_forward.1} parent=0 // pred_fallthru
    _
  // Predicated region
  $region46: #{predictor_forward.1} parent=0 // pred_check
    _
  $region47: #{predictor_forward.1} parent=0 // pred_check_branch
    %50 = sbr.rel (0) target = $region49
  $region48: #{predictor_forward.1} parent=0 // pred_region
    _
  $region49: #{predictor_forward.1} parent=0 // pred_fallthru
    _
  // Predicated region
  $region50: #{predictor_forward.1} parent=0 // pred_check
    _
  $region51: #{predictor_forward.1} parent=0 // pred_check_branch
    %52 = sbr.rel (0) target = $region53
  $region52: #{predictor_forward.1} parent=0 // pred_region
    _
  $region53: #{predictor_forward.1} parent=0 // pred_fallthru
    _
  // Predicated region
  $region54: #{predictor_forward.1} parent=0 // pred_check
    _
  $region55: #{predictor_forward.1} parent=0 // pred_check_branch
    %54 = sbr.rel (0) target = $region57
  $region56: #{predictor_forward.1} parent=0 // pred_region
    _
  $region57: #{predictor_forward.1} parent=0 // pred_fallthru
    _
  // Predicated region
  $region58: #{predictor_forward.1} parent=0 // pred_check
    _
  $region59: #{predictor_forward.1} parent=0 // pred_check_branch
    %56 = sbr.rel (0) target = $region61
  $region60: #{predictor_forward.1} parent=0 // pred_region
    _
  $region61: #{predictor_forward.1} parent=0 // pred_fallthru
    _
  // Predicated region
  $region62: #{predictor_forward.1} parent=0 // pred_check
    _
  $region63: #{predictor_forward.1} parent=0 // pred_check_branch
    %58 = sbr.rel (0) target = $region65
  $region64: #{predictor_forward.1} parent=0 // pred_region
    _
  $region65: #{predictor_forward.1} parent=0 // pred_fallthru
    _
  // Predicated region
  $region66: #{predictor_forward.1} parent=0 // pred_check
    _
  $region67: #{predictor_forward.1} parent=0 // pred_check_branch
    %60 = sbr.rel (0) target = $region69
  $region68: #{predictor_forward.1} parent=0 // pred_region
    _
  $region69: #{predictor_forward.1} parent=0 // pred_fallthru
    _
  // Predicated region
  $region70: #{predictor_forward.1} parent=0 // pred_check
    _
  $region71: #{predictor_forward.1} parent=0 // pred_check_branch
    %62 = sbr.rel (0) target = $region73
  $region72: #{predictor_forward.1} parent=0 // pred_region
    _
  $region73: #{predictor_forward.1} parent=0 // pred_fallthru
    _
  // Predicated region
  $region74: #{predictor_forward.1} parent=0 // pred_check
    _
  $region75: #{predictor_forward.1} parent=0 // pred_check_branch
    %64 = sbr.rel (0) target = $region77
  $region76: #{predictor_forward.1} parent=0 // pred_region
    _
  $region77: #{predictor_forward.1} parent=0 // pred_fallthru
    _
  // Predicated region
  $region78: #{predictor_forward.1} parent=0 // pred_check
    _
  $region79: #{predictor_forward.1} parent=0 // pred_check_branch
    %66 = sbr.rel (0) target = $region81
  $region80: #{predictor_forward.1} parent=0 // pred_region
    _
  $region81: #{predictor_forward.1} parent=0 // pred_fallthru
    _
  %v67 = vld [vmem:[%s0] sm:$0xff]
  %v68 = vld [vmem:[%s0 + $0x8] sm:$0xff]
  %v69 = vld [vmem:[%s2] sm:$0x1]
  %v70 = vld [vmem:[%s3] sm:$0x1]
  %vm71 = vcmask 261120
  %v72 = vsel %vm71, %v67, 0.0
  %73 = vadd.xlane.f32.xlu0 %v72
  %v74 = vpop.xlane.xlu0 %73
  %v75 = vsel %vm71, %v68, 0.0
  %76 = vadd.xlane.f32.xlu0 %v75
  %v77 = vpop.xlane.xlu0 %76
  %v78 = vrcp.pop 32.0
  %v79 = vmul.f32 %v74, %v78
  %v80 = vmul.f32 %v77, %v78
  %v81 = vsub.f32 %v67, %v79
  %v82 = vsub.f32 %v68, %v80
  %v83 = vmul.f32 %v81, %v81
  %v84 = vmul.f32 %v82, %v82
  %v85 = vsel %vm71, %v83, 0.0
  %86 = vadd.xlane.f32.xlu0 %v85
  %v87 = vpop.xlane.xlu0 %86
  %v88 = vsel %vm71, %v84, 0.0
  %89 = vadd.xlane.f32.xlu0 %v88
  %v90 = vpop.xlane.xlu0 %89
  %v91 = vmul.f32 %v87, %v78
  %v92 = vmul.f32 %v90, %v78
  %v93 = vadd.f32 %v91, 1e-12
  %v94 = vadd.f32 %v92, 1e-12
  %v95 = vrsqrt.pop %v93
  %v96 = vrsqrt.pop %v94
  %v97 = vmul.f32 %v81, %v95
  %v98 = vmul.f32 %v82, %v96
  %v100 = vlaneseq
  %v101 = vshrl.u32 %v100, 7
  %v102 = vsub.s32 0, %v101
  %v103 = vrot.slane %v69, %v102
  %v105 = vmul.f32 %v103, %v97
  %v106 = vmul.f32 %v103, %v98
  %v108 = vlaneseq
  %v109 = vshrl.u32 %v108, 7
  %v110 = vsub.s32 0, %v109
  %v111 = vrot.slane %v70, %v110
  %v113 = vadd.f32 %v105, %v111
  %v114 = vadd.f32 %v106, %v111
  %v115 = vld [vmem:[%s1] sm:$0xff]
  %v116 = vld [vmem:[%s1 + $0x8] sm:$0xff]
  %v117 = vld [vmem:[%s4] sm:$0xff]
  %v118 = vld [vmem:[%s4 + $0x8] sm:$0xff]
  %v119 = vld [vmem:[%s4 + $0x10] sm:$0xff]
  %v120 = vld [vmem:[%s4 + $0x18] sm:$0xff]
  %v121 = vld [vmem:[%s5] sm:$0x1]
  %v123 = vlaneseq
  %v124 = vshrl.u32 %v123, 7
  %v125 = vsub.s32 0, %v124
  %v126 = vrot.slane %v121, %v125
  %v129 = vsel %vm71, %v113, 0
  %v132 = vsel %vm71, %v114, 0
  %134 = vmatprep.subr.mxu0 0.0
  %135 = vmatpush1.msra.mxu0 %v117
  %136 = vmatprep.subr.mxu0 0.0
  %137 = vmatpush1.msra.mxu0 %v118
  %138 = vmatprep.subr.mxu0 0.0
  %139 = vmatpush1.msra.mxu0 %v119
  %140 = vmatprep.subr.mxu0 0.0
  %141 = vmatpush1.msra.mxu0 %v120
  %142 = vmatprep.subr.mxu0 0.0
  %143 = vmatpush1.msra.mxu0 0.0
  %144 = vmatprep.subr.mxu0 0.0
  %145 = vmatpush1.msra.mxu0 0.0
  %146 = vmatprep.subr.mxu0 0.0
  %147 = vmatpush1.msra.mxu0 0.0
  %148 = vmatprep.subr.mxu0 0.0
  %149 = vmatpush1.msra.mxu0 0.0
  %150 = vmatprep.subr.mxu0 0.0
  %151 = vmatpush1.msra.mxu0 0.0
  %152 = vmatprep.subr.mxu0 0.0
  %153 = vmatpush1.msra.mxu0 0.0
  %154 = vmatprep.subr.mxu0 0.0
  %155 = vmatpush1.msra.mxu0 0.0
  %156 = vmatprep.subr.mxu0 0.0
  %157 = vmatpush1.msra.mxu0 0.0
  %158 = vmatprep.subr.mxu0 0.0
  %159 = vmatpush1.msra.mxu0 0.0
  %160 = vmatprep.subr.mxu0 0.0
  %161 = vmatpush1.msra.mxu0 0.0
  %162 = vmatprep.subr.mxu0 0.0
  %163 = vmatpush1.msra.mxu0 0.0
  %164 = vmatprep.subr.mxu0 0.0
  %165 = vmatpush1.msra.mxu0 0.0
  %166 = vmatprep.subr.mxu0 0.0
  %167 = vmatpush1.msra.mxu0 0.0
  %168 = vmatprep.subr.mxu0 0.0
  %169 = vmatpush1.msra.mxu0 0.0
  %170 = vmatprep.subr.mxu0 0.0
  %171 = vmatpush1.msra.mxu0 0.0
  %172 = vmatprep.subr.mxu0 0.0
  %173 = vmatpush1.msra.mxu0 0.0
  %174 = vmatprep.subr.mxu0 0.0
  %175 = vmatpush1.msra.mxu0 0.0
  %176 = vmatprep.subr.mxu0 0.0
  %177 = vmatpush1.msra.mxu0 0.0
  %178 = vmatprep.subr.mxu0 0.0
  %179 = vmatpush1.msra.mxu0 0.0
  %180 = vmatprep.subr.mxu0 0.0
  %181 = vmatpush1.msra.mxu0 0.0
  %182 = vmatprep.subr.mxu0 0.0
  %183 = vmatpush1.msra.mxu0 0.0
  %184 = vmatprep.subr.mxu0 0.0
  %185 = vmatpush1.msra.mxu0 0.0
  %186 = vmatprep.subr.mxu0 0.0
  %187 = vmatpush1.msra.mxu0 0.0
  %188 = vmatprep.subr.mxu0 0.0
  %189 = vmatpush1.msra.mxu0 0.0
  %190 = vmatprep.subr.mxu0 0.0
  %191 = vmatpush1.msra.mxu0 0.0
  %192 = vmatprep.subr.mxu0 0.0
  %193 = vmatpush1.msra.mxu0 0.0
  %194 = vmatprep.subr.mxu0 0.0
  %195 = vmatpush1.msra.mxu0 0.0
  %196 = vmatprep.subr.mxu0 0.0
  %197 = vmatpush1.msra.mxu0 0.0
  %198 = vmatprep.mubr.f32.mxu0 0.0
  %199 = vmatmul.mubr.f32.gmra.mrb[0].mxu0 %v129
  %v200 = vpop.f32.mrb[0].mxu0
  %v201 = vadd.f32 %v126, %v200
  %v202 = vpop.f32.mrb[0].mxu0
  %203 = vmatprep.mubr.f32.mxu0 0.0
  %204 = vmatmul.mubr.f32.gmra.mrb[0].mxu0 %v132
  %v205 = vpop.f32.mrb[0].mxu0
  %v206 = vadd.f32 %v126, %v205
  %v207 = vpop.f32.mrb[0].mxu0
  %208 = vdwg.mxu0
  %v209 = vld [vmem:[%s6] sm:$0xff]
  %v210 = vld [vmem:[%s6 + $0x8] sm:$0xff]
  %v211 = vld [vmem:[%s6 + $0x10] sm:$0xff]
  %v212 = vld [vmem:[%s6 + $0x18] sm:$0xff]
  %215 = vrot.lane.b32.xlu0 %v201, 96
  %v216 = vpop.permute.xlu0 %215
  %217 = vrot.lane.b32.xlu0 %v206, 96
  %v218 = vpop.permute.xlu0 %217
  %vm219 = vcmask 64512
  %v220 = vsel %vm219, %v201, 0
  %v222 = vsel %vm219, %v206, 0
  %v224 = vsel %vm219, %v216, 0
  %v226 = vsel %vm219, %v218, 0
  %228 = vmatprep.subr.mxu0 0.0
  %229 = vmatpush1.xpose.msra.mxu0 %v224
  %230 = vmatprep.subr.mxu0 0.0
  %231 = vmatpush1.xpose.msra.mxu0 %v226
  %232 = vmatprep.subr.mxu0 0.0
  %233 = vmatpush1.xpose.msra.mxu0 0.0
  %234 = vmatprep.subr.mxu0 0.0
  %235 = vmatpush1.xpose.msra.mxu0 0.0
  %236 = vmatprep.subr.mxu0 0.0
  %237 = vmatpush1.xpose.msra.mxu0 0.0
  %238 = vmatprep.subr.mxu0 0.0
  %239 = vmatpush1.xpose.msra.mxu0 0.0
  %240 = vmatprep.subr.mxu0 0.0
  %241 = vmatpush1.xpose.msra.mxu0 0.0
  %242 = vmatprep.subr.mxu0 0.0
  %243 = vmatpush1.xpose.msra.mxu0 0.0
  %244 = vmatprep.subr.mxu0 0.0
  %245 = vmatpush1.xpose.msra.mxu0 0.0
  %246 = vmatprep.subr.mxu0 0.0
  %247 = vmatpush1.xpose.msra.mxu0 0.0
  %248 = vmatprep.subr.mxu0 0.0
  %249 = vmatpush1.xpose.msra.mxu0 0.0
  %250 = vmatprep.subr.mxu0 0.0
  %251 = vmatpush1.xpose.msra.mxu0 0.0
  %252 = vmatprep.subr.mxu0 0.0
  %253 = vmatpush1.xpose.msra.mxu0 0.0
  %254 = vmatprep.subr.mxu0 0.0
  %255 = vmatpush1.xpose.msra.mxu0 0.0
  %256 = vmatprep.subr.mxu0 0.0
  %257 = vmatpush1.xpose.msra.mxu0 0.0
  %258 = vmatprep.subr.mxu0 0.0
  %259 = vmatpush1.xpose.msra.mxu0 0.0
  %260 = vmatprep.subr.mxu0 0.0
  %261 = vmatpush1.xpose.msra.mxu0 0.0
  %262 = vmatprep.subr.mxu0 0.0
  %263 = vmatpush1.xpose.msra.mxu0 0.0
  %264 = vmatprep.subr.mxu0 0.0
  %265 = vmatpush1.xpose.msra.mxu0 0.0
  %266 = vmatprep.subr.mxu0 0.0
  %267 = vmatpush1.xpose.msra.mxu0 0.0
  %268 = vmatprep.subr.mxu0 0.0
  %269 = vmatpush1.xpose.msra.mxu0 0.0
  %270 = vmatprep.subr.mxu0 0.0
  %271 = vmatpush1.xpose.msra.mxu0 0.0
  %272 = vmatprep.subr.mxu0 0.0
  %273 = vmatpush1.xpose.msra.mxu0 0.0
  %274 = vmatprep.subr.mxu0 0.0
  %275 = vmatpush1.xpose.msra.mxu0 0.0
  %276 = vmatprep.subr.mxu0 0.0
  %277 = vmatpush1.xpose.msra.mxu0 0.0
  %278 = vmatprep.subr.mxu0 0.0
  %279 = vmatpush1.xpose.msra.mxu0 0.0
  %280 = vmatprep.subr.mxu0 0.0
  %281 = vmatpush1.xpose.msra.mxu0 0.0
  %282 = vmatprep.subr.mxu0 0.0
  %283 = vmatpush1.xpose.msra.mxu0 0.0
  %284 = vmatprep.subr.mxu0 0.0
  %285 = vmatpush1.xpose.msra.mxu0 0.0
  %286 = vmatprep.subr.mxu0 0.0
  %287 = vmatpush1.xpose.msra.mxu0 0.0
  %288 = vmatprep.subr.mxu0 0.0
  %289 = vmatpush1.xpose.msra.mxu0 0.0
  %290 = vmatprep.subr.mxu0 0.0
  %291 = vmatpush1.xpose.msra.mxu0 0.0
  %292 = vmatprep.mubr.f32.mxu0 0.0
  %293 = vmatmul.mubr.f32.gmra.mrb[0].mxu0 %v220
  %v294 = vpop.f32.mrb[0].mxu0
  %v295 = vadd.f32 0.0, %v294
  %v296 = vpop.f32.mrb[0].mxu0
  %297 = vmatprep.mubr.f32.mxu0 0.0
  %298 = vmatmul.mubr.f32.gmra.mrb[0].mxu0 %v222
  %v299 = vpop.f32.mrb[0].mxu0
  %v300 = vadd.f32 0.0, %v299
  %v301 = vpop.f32.mrb[0].mxu0
  %302 = vdwg.mxu0
  %v303 = vmul.f32 %v295, 0.35355338
  %v304 = vmul.f32 %v300, 0.35355338
  %v305 = vadd.f32 %v303, %v115
  %v306 = vadd.f32 %v304, %v116
  %vm307 = vcmask 130048
  %v308 = vsel %vm307, %v305, -inf
  %309 = vmax.xlane.f32.xlu0 %v308
  %v310 = vpop.xlane.xlu0 %309
  %v311 = vsel %vm307, %v306, -inf
  %312 = vmax.xlane.f32.xlu0 %v311
  %v313 = vpop.xlane.xlu0 %312
  %v314 = vsub.f32 %v305, %v310
  %v315 = vsub.f32 %v306, %v313
  %v316 = vmul.f32 %v314, 1.442695
  %v317 = vpow.pop %v316
  %v318 = vmul.f32 %v315, 1.442695
  %v319 = vpow.pop %v318
  %v320 = vsel %vm307, %v317, 0.0
  %321 = vadd.xlane.f32.xlu0 %v320
  %v322 = vpop.xlane.xlu0 %321
  %v323 = vsel %vm307, %v319, 0.0
  %324 = vadd.xlane.f32.xlu0 %v323
  %v325 = vpop.xlane.xlu0 %324
  %v326 = vrcp.pop %v322
  %v327 = vrcp.pop %v325
  %v328 = vmul.f32 %v317, %v326
  %v329 = vmul.f32 %v319, %v327
  %330 = vrot.lane.b32.xlu0 %v201, 64
  %v331 = vpop.permute.xlu0 %330
  %332 = vrot.lane.b32.xlu0 %v206, 64
  %v333 = vpop.permute.xlu0 %332
  %v337 = vsel %vm307, %v328, 0
  %v340 = vsel %vm307, %v329, 0
  %342 = vmatprep.subr.mxu0 0.0
  %343 = vmatpush1.msra.mxu0 %v331
  %344 = vmatprep.subr.mxu0 0.0
  %345 = vmatpush1.msra.mxu0 %v333
  %346 = vmatprep.subr.mxu0 0.0
  %347 = vmatpush1.msra.mxu0 0.0
  %348 = vmatprep.subr.mxu0 0.0
  %349 = vmatpush1.msra.mxu0 0.0
  %350 = vmatprep.subr.mxu0 0.0
  %351 = vmatpush1.msra.mxu0 0.0
  %352 = vmatprep.subr.mxu0 0.0
  %353 = vmatpush1.msra.mxu0 0.0
  %354 = vmatprep.subr.mxu0 0.0
  %355 = vmatpush1.msra.mxu0 0.0
  %356 = vmatprep.subr.mxu0 0.0
  %357 = vmatpush1.msra.mxu0 0.0
  %358 = vmatprep.subr.mxu0 0.0
  %359 = vmatpush1.msra.mxu0 0.0
  %360 = vmatprep.subr.mxu0 0.0
  %361 = vmatpush1.msra.mxu0 0.0
  %362 = vmatprep.subr.mxu0 0.0
  %363 = vmatpush1.msra.mxu0 0.0
  %364 = vmatprep.subr.mxu0 0.0
  %365 = vmatpush1.msra.mxu0 0.0
  %366 = vmatprep.subr.mxu0 0.0
  %367 = vmatpush1.msra.mxu0 0.0
  %368 = vmatprep.subr.mxu0 0.0
  %369 = vmatpush1.msra.mxu0 0.0
  %370 = vmatprep.subr.mxu0 0.0
  %371 = vmatpush1.msra.mxu0 0.0
  %372 = vmatprep.subr.mxu0 0.0
  %373 = vmatpush1.msra.mxu0 0.0
  %374 = vmatprep.subr.mxu0 0.0
  %375 = vmatpush1.msra.mxu0 0.0
  %376 = vmatprep.subr.mxu0 0.0
  %377 = vmatpush1.msra.mxu0 0.0
  %378 = vmatprep.subr.mxu0 0.0
  %379 = vmatpush1.msra.mxu0 0.0
  %380 = vmatprep.subr.mxu0 0.0
  %381 = vmatpush1.msra.mxu0 0.0
  %382 = vmatprep.subr.mxu0 0.0
  %383 = vmatpush1.msra.mxu0 0.0
  %384 = vmatprep.subr.mxu0 0.0
  %385 = vmatpush1.msra.mxu0 0.0
  %386 = vmatprep.subr.mxu0 0.0
  %387 = vmatpush1.msra.mxu0 0.0
  %388 = vmatprep.subr.mxu0 0.0
  %389 = vmatpush1.msra.mxu0 0.0
  %390 = vmatprep.subr.mxu0 0.0
  %391 = vmatpush1.msra.mxu0 0.0
  %392 = vmatprep.subr.mxu0 0.0
  %393 = vmatpush1.msra.mxu0 0.0
  %394 = vmatprep.subr.mxu0 0.0
  %395 = vmatpush1.msra.mxu0 0.0
  %396 = vmatprep.subr.mxu0 0.0
  %397 = vmatpush1.msra.mxu0 0.0
  %398 = vmatprep.subr.mxu0 0.0
  %399 = vmatpush1.msra.mxu0 0.0
  %400 = vmatprep.subr.mxu0 0.0
  %401 = vmatpush1.msra.mxu0 0.0
  %402 = vmatprep.subr.mxu0 0.0
  %403 = vmatpush1.msra.mxu0 0.0
  %404 = vmatprep.subr.mxu0 0.0
  %405 = vmatpush1.msra.mxu0 0.0
  %406 = vmatprep.mubr.f32.mxu0 0.0
  %407 = vmatmul.mubr.f32.gmra.mrb[0].mxu0 %v337
  %v408 = vpop.f32.mrb[0].mxu0
  %v409 = vadd.f32 0.0, %v408
  %v410 = vpop.f32.mrb[0].mxu0
  %411 = vmatprep.mubr.f32.mxu0 0.0
  %412 = vmatmul.mubr.f32.gmra.mrb[0].mxu0 %v340
  %v413 = vpop.f32.mrb[0].mxu0
  %v414 = vadd.f32 0.0, %v413
  %v415 = vpop.f32.mrb[0].mxu0
  %416 = vdwg.mxu0
  %417 = vrot.lane.b32.xlu0 %v201, 120
  %v418 = vpop.permute.xlu0 %417
  %419 = vrot.lane.b32.xlu0 %v206, 120
  %v420 = vpop.permute.xlu0 %419
  %421 = vrot.lane.b32.xlu0 %v201, 88
  %v422 = vpop.permute.xlu0 %421
  %423 = vrot.lane.b32.xlu0 %v206, 88
  %v424 = vpop.permute.xlu0 %423
  %v425 = vsel %vm219, %v418, 0
  %v427 = vsel %vm219, %v420, 0
  %v429 = vsel %vm219, %v422, 0
  %v431 = vsel %vm219, %v424, 0
  %433 = vmatprep.subr.mxu0 0.0
  %434 = vmatpush1.xpose.msra.mxu0 %v429
  %435 = vmatprep.subr.mxu0 0.0
  %436 = vmatpush1.xpose.msra.mxu0 %v431
  %437 = vmatprep.subr.mxu0 0.0
  %438 = vmatpush1.xpose.msra.mxu0 0.0
  %439 = vmatprep.subr.mxu0 0.0
  %440 = vmatpush1.xpose.msra.mxu0 0.0
  %441 = vmatprep.subr.mxu0 0.0
  %442 = vmatpush1.xpose.msra.mxu0 0.0
  %443 = vmatprep.subr.mxu0 0.0
  %444 = vmatpush1.xpose.msra.mxu0 0.0
  %445 = vmatprep.subr.mxu0 0.0
  %446 = vmatpush1.xpose.msra.mxu0 0.0
  %447 = vmatprep.subr.mxu0 0.0
  %448 = vmatpush1.xpose.msra.mxu0 0.0
  %449 = vmatprep.subr.mxu0 0.0
  %450 = vmatpush1.xpose.msra.mxu0 0.0
  %451 = vmatprep.subr.mxu0 0.0
  %452 = vmatpush1.xpose.msra.mxu0 0.0
  %453 = vmatprep.subr.mxu0 0.0
  %454 = vmatpush1.xpose.msra.mxu0 0.0
  %455 = vmatprep.subr.mxu0 0.0
  %456 = vmatpush1.xpose.msra.mxu0 0.0
  %457 = vmatprep.subr.mxu0 0.0
  %458 = vmatpush1.xpose.msra.mxu0 0.0
  %459 = vmatprep.subr.mxu0 0.0
  %460 = vmatpush1.xpose.msra.mxu0 0.0
  %461 = vmatprep.subr.mxu0 0.0
  %462 = vmatpush1.xpose.msra.mxu0 0.0
  %463 = vmatprep.subr.mxu0 0.0
  %464 = vmatpush1.xpose.msra.mxu0 0.0
  %465 = vmatprep.subr.mxu0 0.0
  %466 = vmatpush1.xpose.msra.mxu0 0.0
  %467 = vmatprep.subr.mxu0 0.0
  %468 = vmatpush1.xpose.msra.mxu0 0.0
  %469 = vmatprep.subr.mxu0 0.0
  %470 = vmatpush1.xpose.msra.mxu0 0.0
  %471 = vmatprep.subr.mxu0 0.0
  %472 = vmatpush1.xpose.msra.mxu0 0.0
  %473 = vmatprep.subr.mxu0 0.0
  %474 = vmatpush1.xpose.msra.mxu0 0.0
  %475 = vmatprep.subr.mxu0 0.0
  %476 = vmatpush1.xpose.msra.mxu0 0.0
  %477 = vmatprep.subr.mxu0 0.0
  %478 = vmatpush1.xpose.msra.mxu0 0.0
  %479 = vmatprep.subr.mxu0 0.0
  %480 = vmatpush1.xpose.msra.mxu0 0.0
  %481 = vmatprep.subr.mxu0 0.0
  %482 = vmatpush1.xpose.msra.mxu0 0.0
  %483 = vmatprep.subr.mxu0 0.0
  %484 = vmatpush1.xpose.msra.mxu0 0.0
  %485 = vmatprep.subr.mxu0 0.0
  %486 = vmatpush1.xpose.msra.mxu0 0.0
  %487 = vmatprep.subr.mxu0 0.0
  %488 = vmatpush1.xpose.msra.mxu0 0.0
  %489 = vmatprep.subr.mxu0 0.0
  %490 = vmatpush1.xpose.msra.mxu0 0.0
  %491 = vmatprep.subr.mxu0 0.0
  %492 = vmatpush1.xpose.msra.mxu0 0.0
  %493 = vmatprep.subr.mxu0 0.0
  %494 = vmatpush1.xpose.msra.mxu0 0.0
  %495 = vmatprep.subr.mxu0 0.0
  %496 = vmatpush1.xpose.msra.mxu0 0.0
  %497 = vmatprep.mubr.f32.mxu0 0.0
  %498 = vmatmul.mubr.f32.gmra.mrb[0].mxu0 %v425
  %v499 = vpop.f32.mrb[0].mxu0
  %v500 = vadd.f32 0.0, %v499
  %v501 = vpop.f32.mrb[0].mxu0
  %502 = vmatprep.mubr.f32.mxu0 0.0
  %503 = vmatmul.mubr.f32.gmra.mrb[0].mxu0 %v427
  %v504 = vpop.f32.mrb[0].mxu0
  %v505 = vadd.f32 0.0, %v504
  %v506 = vpop.f32.mrb[0].mxu0
  %507 = vdwg.mxu0
  %v508 = vmul.f32 %v500, 0.35355338
  %v509 = vmul.f32 %v505, 0.35355338
  %v510 = vadd.f32 %v508, %v115
  %v511 = vadd.f32 %v509, %v116
  %v512 = vsel %vm307, %v510, -inf
  %513 = vmax.xlane.f32.xlu0 %v512
  %v514 = vpop.xlane.xlu0 %513
  %v515 = vsel %vm307, %v511, -inf
  %516 = vmax.xlane.f32.xlu0 %v515
  %v517 = vpop.xlane.xlu0 %516
  %v518 = vsub.f32 %v510, %v514
  %v519 = vsub.f32 %v511, %v517
  %v520 = vmul.f32 %v518, 1.442695
  %v521 = vpow.pop %v520
  %v522 = vmul.f32 %v519, 1.442695
  %v523 = vpow.pop %v522
  %v524 = vsel %vm307, %v521, 0.0
  %525 = vadd.xlane.f32.xlu0 %v524
  %v526 = vpop.xlane.xlu0 %525
  %v527 = vsel %vm307, %v523, 0.0
  %528 = vadd.xlane.f32.xlu0 %v527
  %v529 = vpop.xlane.xlu0 %528
  %v530 = vrcp.pop %v526
  %v531 = vrcp.pop %v529
  %v532 = vmul.f32 %v521, %v530
  %v533 = vmul.f32 %v523, %v531
  %534 = vrot.lane.b32.xlu0 %v201, 56
  %v535 = vpop.permute.xlu0 %534
  %536 = vrot.lane.b32.xlu0 %v206, 56
  %v537 = vpop.permute.xlu0 %536
  %v541 = vsel %vm307, %v532, 0
  %v544 = vsel %vm307, %v533, 0
  %546 = vmatprep.subr.mxu0 0.0
  %547 = vmatpush1.msra.mxu0 %v535
  %548 = vmatprep.subr.mxu0 0.0
  %549 = vmatpush1.msra.mxu0 %v537
  %550 = vmatprep.subr.mxu0 0.0
  %551 = vmatpush1.msra.mxu0 0.0
  %552 = vmatprep.subr.mxu0 0.0
  %553 = vmatpush1.msra.mxu0 0.0
  %554 = vmatprep.subr.mxu0 0.0
  %555 = vmatpush1.msra.mxu0 0.0
  %556 = vmatprep.subr.mxu0 0.0
  %557 = vmatpush1.msra.mxu0 0.0
  %558 = vmatprep.subr.mxu0 0.0
  %559 = vmatpush1.msra.mxu0 0.0
  %560 = vmatprep.subr.mxu0 0.0
  %561 = vmatpush1.msra.mxu0 0.0
  %562 = vmatprep.subr.mxu0 0.0
  %563 = vmatpush1.msra.mxu0 0.0
  %564 = vmatprep.subr.mxu0 0.0
  %565 = vmatpush1.msra.mxu0 0.0
  %566 = vmatprep.subr.mxu0 0.0
  %567 = vmatpush1.msra.mxu0 0.0
  %568 = vmatprep.subr.mxu0 0.0
  %569 = vmatpush1.msra.mxu0 0.0
  %570 = vmatprep.subr.mxu0 0.0
  %571 = vmatpush1.msra.mxu0 0.0
  %572 = vmatprep.subr.mxu0 0.0
  %573 = vmatpush1.msra.mxu0 0.0
  %574 = vmatprep.subr.mxu0 0.0
  %575 = vmatpush1.msra.mxu0 0.0
  %576 = vmatprep.subr.mxu0 0.0
  %577 = vmatpush1.msra.mxu0 0.0
  %578 = vmatprep.subr.mxu0 0.0
  %579 = vmatpush1.msra.mxu0 0.0
  %580 = vmatprep.subr.mxu0 0.0
  %581 = vmatpush1.msra.mxu0 0.0
  %582 = vmatprep.subr.mxu0 0.0
  %583 = vmatpush1.msra.mxu0 0.0
  %584 = vmatprep.subr.mxu0 0.0
  %585 = vmatpush1.msra.mxu0 0.0
  %586 = vmatprep.subr.mxu0 0.0
  %587 = vmatpush1.msra.mxu0 0.0
  %588 = vmatprep.subr.mxu0 0.0
  %589 = vmatpush1.msra.mxu0 0.0
  %590 = vmatprep.subr.mxu0 0.0
  %591 = vmatpush1.msra.mxu0 0.0
  %592 = vmatprep.subr.mxu0 0.0
  %593 = vmatpush1.msra.mxu0 0.0
  %594 = vmatprep.subr.mxu0 0.0
  %595 = vmatpush1.msra.mxu0 0.0
  %596 = vmatprep.subr.mxu0 0.0
  %597 = vmatpush1.msra.mxu0 0.0
  %598 = vmatprep.subr.mxu0 0.0
  %599 = vmatpush1.msra.mxu0 0.0
  %600 = vmatprep.subr.mxu0 0.0
  %601 = vmatpush1.msra.mxu0 0.0
  %602 = vmatprep.subr.mxu0 0.0
  %603 = vmatpush1.msra.mxu0 0.0
  %604 = vmatprep.subr.mxu0 0.0
  %605 = vmatpush1.msra.mxu0 0.0
  %606 = vmatprep.subr.mxu0 0.0
  %607 = vmatpush1.msra.mxu0 0.0
  %608 = vmatprep.subr.mxu0 0.0
  %609 = vmatpush1.msra.mxu0 0.0
  %610 = vmatprep.mubr.f32.mxu0 0.0
  %611 = vmatmul.mubr.f32.gmra.mrb[0].mxu0 %v541
  %v612 = vpop.f32.mrb[0].mxu0
  %v613 = vadd.f32 0.0, %v612
  %v614 = vpop.f32.mrb[0].mxu0
  %615 = vmatprep.mubr.f32.mxu0 0.0
  %616 = vmatmul.mubr.f32.gmra.mrb[0].mxu0 %v544
  %v617 = vpop.f32.mrb[0].mxu0
  %v618 = vadd.f32 0.0, %v617
  %v619 = vpop.f32.mrb[0].mxu0
  %620 = vdwg.mxu0
  %v622 = vsel %vm219, %v613, 0
  %v625 = vsel %vm219, %v618, 0
  %627 = vmatprep.subr.mxu0 0.0
  %628 = vmatpush1.msra.mxu0 %v210
  %629 = vmatprep.subr.mxu0 0.0
  %630 = vmatpush1.msra.mxu0 0.0
  %631 = vmatprep.subr.mxu0 0.0
  %632 = vmatpush1.msra.mxu0 0.0
  %633 = vmatprep.subr.mxu0 0.0
  %634 = vmatpush1.msra.mxu0 0.0
  %635 = vmatprep.subr.mxu0 0.0
  %636 = vmatpush1.msra.mxu0 0.0
  %637 = vmatprep.subr.mxu0 0.0
  %638 = vmatpush1.msra.mxu0 0.0
  %639 = vmatprep.subr.mxu0 0.0
  %640 = vmatpush1.msra.mxu0 0.0
  %641 = vmatprep.subr.mxu0 0.0
  %642 = vmatpush1.msra.mxu0 0.0
  %643 = vmatprep.subr.mxu0 0.0
  %644 = vmatpush1.msra.mxu0 0.0
  %645 = vmatprep.subr.mxu0 0.0
  %646 = vmatpush1.msra.mxu0 0.0
  %647 = vmatprep.subr.mxu0 0.0
  %648 = vmatpush1.msra.mxu0 0.0
  %649 = vmatprep.subr.mxu0 0.0
  %650 = vmatpush1.msra.mxu0 0.0
  %651 = vmatprep.subr.mxu0 0.0
  %652 = vmatpush1.msra.mxu0 0.0
  %653 = vmatprep.subr.mxu0 0.0
  %654 = vmatpush1.msra.mxu0 0.0
  %655 = vmatprep.subr.mxu0 0.0
  %656 = vmatpush1.msra.mxu0 0.0
  %657 = vmatprep.subr.mxu0 0.0
  %658 = vmatpush1.msra.mxu0 0.0
  %659 = vmatprep.subr.mxu0 0.0
  %660 = vmatpush1.msra.mxu0 0.0
  %661 = vmatprep.subr.mxu0 0.0
  %662 = vmatpush1.msra.mxu0 0.0
  %663 = vmatprep.subr.mxu0 0.0
  %664 = vmatpush1.msra.mxu0 0.0
  %665 = vmatprep.subr.mxu0 0.0
  %666 = vmatpush1.msra.mxu0 0.0
  %667 = vmatprep.subr.mxu0 0.0
  %668 = vmatpush1.msra.mxu0 0.0
  %669 = vmatprep.subr.mxu0 0.0
  %670 = vmatpush1.msra.mxu0 0.0
  %671 = vmatprep.subr.mxu0 0.0
  %672 = vmatpush1.msra.mxu0 0.0
  %673 = vmatprep.subr.mxu0 0.0
  %674 = vmatpush1.msra.mxu0 0.0
  %675 = vmatprep.subr.mxu0 0.0
  %676 = vmatpush1.msra.mxu0 0.0
  %677 = vmatprep.subr.mxu0 0.0
  %678 = vmatpush1.msra.mxu0 0.0
  %679 = vmatprep.subr.mxu0 0.0
  %680 = vmatpush1.msra.mxu0 0.0
  %681 = vmatprep.subr.mxu0 0.0
  %682 = vmatpush1.msra.mxu0 0.0
  %683 = vmatprep.subr.mxu0 0.0
  %684 = vmatpush1.msra.mxu0 0.0
  %685 = vmatprep.subr.mxu0 0.0
  %686 = vmatpush1.msra.mxu0 0.0
  %687 = vmatprep.subr.mxu0 0.0
  %688 = vmatpush1.msra.mxu0 0.0
  %689 = vmatprep.subr.mxu0 0.0
  %690 = vmatpush1.msra.mxu0 0.0
  %691 = vmatprep.mubr.f32.mxu0 0.0
  %692 = vmatmul.mubr.f32.gmra.mrb[0].mxu0 %v622
  %v693 = vpop.f32.mrb[0].mxu0
  %v694 = vadd.f32 0.0, %v693
  %v695 = vpop.f32.mrb[0].mxu0
  %696 = vmatprep.mubr.f32.mxu0 0.0
  %697 = vmatmul.mubr.f32.gmra.mrb[0].mxu0 %v625
  %v698 = vpop.f32.mrb[0].mxu0
  %v699 = vadd.f32 0.0, %v698
  %v700 = vpop.f32.mrb[0].mxu0
  %701 = vdwg.mxu0
  %v703 = vsel %vm219, %v409, 0
  %v706 = vsel %vm219, %v414, 0
  %708 = vmatprep.subr.mxu0 0.0
  %709 = vmatpush1.msra.mxu0 %v209
  %710 = vmatprep.subr.mxu0 0.0
  %711 = vmatpush1.msra.mxu0 0.0
  %712 = vmatprep.subr.mxu0 0.0
  %713 = vmatpush1.msra.mxu0 0.0
  %714 = vmatprep.subr.mxu0 0.0
  %715 = vmatpush1.msra.mxu0 0.0
  %716 = vmatprep.subr.mxu0 0.0
  %717 = vmatpush1.msra.mxu0 0.0
  %718 = vmatprep.subr.mxu0 0.0
  %719 = vmatpush1.msra.mxu0 0.0
  %720 = vmatprep.subr.mxu0 0.0
  %721 = vmatpush1.msra.mxu0 0.0
  %722 = vmatprep.subr.mxu0 0.0
  %723 = vmatpush1.msra.mxu0 0.0
  %724 = vmatprep.subr.mxu0 0.0
  %725 = vmatpush1.msra.mxu0 0.0
  %726 = vmatprep.subr.mxu0 0.0
  %727 = vmatpush1.msra.mxu0 0.0
  %728 = vmatprep.subr.mxu0 0.0
  %729 = vmatpush1.msra.mxu0 0.0
  %730 = vmatprep.subr.mxu0 0.0
  %731 = vmatpush1.msra.mxu0 0.0
  %732 = vmatprep.subr.mxu0 0.0
  %733 = vmatpush1.msra.mxu0 0.0
  %734 = vmatprep.subr.mxu0 0.0
  %735 = vmatpush1.msra.mxu0 0.0
  %736 = vmatprep.subr.mxu0 0.0
  %737 = vmatpush1.msra.mxu0 0.0
  %738 = vmatprep.subr.mxu0 0.0
  %739 = vmatpush1.msra.mxu0 0.0
  %740 = vmatprep.subr.mxu0 0.0
  %741 = vmatpush1.msra.mxu0 0.0
  %742 = vmatprep.subr.mxu0 0.0
  %743 = vmatpush1.msra.mxu0 0.0
  %744 = vmatprep.subr.mxu0 0.0
  %745 = vmatpush1.msra.mxu0 0.0
  %746 = vmatprep.subr.mxu0 0.0
  %747 = vmatpush1.msra.mxu0 0.0
  %748 = vmatprep.subr.mxu0 0.0
  %749 = vmatpush1.msra.mxu0 0.0
  %750 = vmatprep.subr.mxu0 0.0
  %751 = vmatpush1.msra.mxu0 0.0
  %752 = vmatprep.subr.mxu0 0.0
  %753 = vmatpush1.msra.mxu0 0.0
  %754 = vmatprep.subr.mxu0 0.0
  %755 = vmatpush1.msra.mxu0 0.0
  %756 = vmatprep.subr.mxu0 0.0
  %757 = vmatpush1.msra.mxu0 0.0
  %758 = vmatprep.subr.mxu0 0.0
  %759 = vmatpush1.msra.mxu0 0.0
  %760 = vmatprep.subr.mxu0 0.0
  %761 = vmatpush1.msra.mxu0 0.0
  %762 = vmatprep.subr.mxu0 0.0
  %763 = vmatpush1.msra.mxu0 0.0
  %764 = vmatprep.subr.mxu0 0.0
  %765 = vmatpush1.msra.mxu0 0.0
  %766 = vmatprep.subr.mxu0 0.0
  %767 = vmatpush1.msra.mxu0 0.0
  %768 = vmatprep.subr.mxu0 0.0
  %769 = vmatpush1.msra.mxu0 0.0
  %770 = vmatprep.subr.mxu0 0.0
  %771 = vmatpush1.msra.mxu0 0.0
  %772 = vmatprep.mubr.f32.mxu0 0.0
  %773 = vmatmul.mubr.f32.gmra.mrb[0].mxu0 %v703
  %v774 = vpop.f32.mrb[0].mxu0
  %v775 = vadd.f32 %v694, %v774
  %v776 = vpop.f32.mrb[0].mxu0
  %777 = vmatprep.mubr.f32.mxu0 0.0
  %778 = vmatmul.mubr.f32.gmra.mrb[0].mxu0 %v706
  %v779 = vpop.f32.mrb[0].mxu0
  %v780 = vadd.f32 %v699, %v779
  %v781 = vpop.f32.mrb[0].mxu0
  %782 = vdwg.mxu0
  %783 = vrot.lane.b32.xlu0 %v201, 112
  %v784 = vpop.permute.xlu0 %783
  %785 = vrot.lane.b32.xlu0 %v206, 112
  %v786 = vpop.permute.xlu0 %785
  %787 = vrot.lane.b32.xlu0 %v201, 80
  %v788 = vpop.permute.xlu0 %787
  %789 = vrot.lane.b32.xlu0 %v206, 80
  %v790 = vpop.permute.xlu0 %789
  %v791 = vsel %vm219, %v784, 0
  %v793 = vsel %vm219, %v786, 0
  %v795 = vsel %vm219, %v788, 0
  %v797 = vsel %vm219, %v790, 0
  %799 = vmatprep.subr.mxu0 0.0
  %800 = vmatpush1.xpose.msra.mxu0 %v795
  %801 = vmatprep.subr.mxu0 0.0
  %802 = vmatpush1.xpose.msra.mxu0 %v797
  %803 = vmatprep.subr.mxu0 0.0
  %804 = vmatpush1.xpose.msra.mxu0 0.0
  %805 = vmatprep.subr.mxu0 0.0
  %806 = vmatpush1.xpose.msra.mxu0 0.0
  %807 = vmatprep.subr.mxu0 0.0
  %808 = vmatpush1.xpose.msra.mxu0 0.0
  %809 = vmatprep.subr.mxu0 0.0
  %810 = vmatpush1.xpose.msra.mxu0 0.0
  %811 = vmatprep.subr.mxu0 0.0
  %812 = vmatpush1.xpose.msra.mxu0 0.0
  %813 = vmatprep.subr.mxu0 0.0
  %814 = vmatpush1.xpose.msra.mxu0 0.0
  %815 = vmatprep.subr.mxu0 0.0
  %816 = vmatpush1.xpose.msra.mxu0 0.0
  %817 = vmatprep.subr.mxu0 0.0
  %818 = vmatpush1.xpose.msra.mxu0 0.0
  %819 = vmatprep.subr.mxu0 0.0
  %820 = vmatpush1.xpose.msra.mxu0 0.0
  %821 = vmatprep.subr.mxu0 0.0
  %822 = vmatpush1.xpose.msra.mxu0 0.0
  %823 = vmatprep.subr.mxu0 0.0
  %824 = vmatpush1.xpose.msra.mxu0 0.0
  %825 = vmatprep.subr.mxu0 0.0
  %826 = vmatpush1.xpose.msra.mxu0 0.0
  %827 = vmatprep.subr.mxu0 0.0
  %828 = vmatpush1.xpose.msra.mxu0 0.0
  %829 = vmatprep.subr.mxu0 0.0
  %830 = vmatpush1.xpose.msra.mxu0 0.0
  %831 = vmatprep.subr.mxu0 0.0
  %832 = vmatpush1.xpose.msra.mxu0 0.0
  %833 = vmatprep.subr.mxu0 0.0
  %834 = vmatpush1.xpose.msra.mxu0 0.0
  %835 = vmatprep.subr.mxu0 0.0
  %836 = vmatpush1.xpose.msra.mxu0 0.0
  %837 = vmatprep.subr.mxu0 0.0
  %838 = vmatpush1.xpose.msra.mxu0 0.0
  %839 = vmatprep.subr.mxu0 0.0
  %840 = vmatpush1.xpose.msra.mxu0 0.0
  %841 = vmatprep.subr.mxu0 0.0
  %842 = vmatpush1.xpose.msra.mxu0 0.0
  %843 = vmatprep.subr.mxu0 0.0
  %844 = vmatpush1.xpose.msra.mxu0 0.0
  %845 = vmatprep.subr.mxu0 0.0
  %846 = vmatpush1.xpose.msra.mxu0 0.0
  %847 = vmatprep.subr.mxu0 0.0
  %848 = vmatpush1.xpose.msra.mxu0 0.0
  %849 = vmatprep.subr.mxu0 0.0
  %850 = vmatpush1.xpose.msra.mxu0 0.0
  %851 = vmatprep.subr.mxu0 0.0
  %852 = vmatpush1.xpose.msra.mxu0 0.0
  %853 = vmatprep.subr.mxu0 0.0
  %854 = vmatpush1.xpose.msra.mxu0 0.0
  %855 = vmatprep.subr.mxu0 0.0
  %856 = vmatpush1.xpose.msra.mxu0 0.0
  %857 = vmatprep.subr.mxu0 0.0
  %858 = vmatpush1.xpose.msra.mxu0 0.0
  %859 = vmatprep.subr.mxu0 0.0
  %860 = vmatpush1.xpose.msra.mxu0 0.0
  %861 = vmatprep.subr.mxu0 0.0
  %862 = vmatpush1.xpose.msra.mxu0 0.0
  %863 = vmatprep.mubr.f32.mxu0 0.0
  %864 = vmatmul.mubr.f32.gmra.mrb[0].mxu0 %v791
  %v865 = vpop.f32.mrb[0].mxu0
  %v866 = vadd.f32 0.0, %v865
  %v867 = vpop.f32.mrb[0].mxu0
  %868 = vmatprep.mubr.f32.mxu0 0.0
  %869 = vmatmul.mubr.f32.gmra.mrb[0].mxu0 %v793
  %v870 = vpop.f32.mrb[0].mxu0
  %v871 = vadd.f32 0.0, %v870
  %v872 = vpop.f32.mrb[0].mxu0
  %873 = vdwg.mxu0
  %v874 = vmul.f32 %v866, 0.35355338
  %v875 = vmul.f32 %v871, 0.35355338
  %v876 = vadd.f32 %v874, %v115
  %v877 = vadd.f32 %v875, %v116
  %v878 = vsel %vm307, %v876, -inf
  %879 = vmax.xlane.f32.xlu0 %v878
  %v880 = vpop.xlane.xlu0 %879
  %v881 = vsel %vm307, %v877, -inf
  %882 = vmax.xlane.f32.xlu0 %v881
  %v883 = vpop.xlane.xlu0 %882
  %v884 = vsub.f32 %v876, %v880
  %v885 = vsub.f32 %v877, %v883
  %v886 = vmul.f32 %v884, 1.442695
  %v887 = vpow.pop %v886
  %v888 = vmul.f32 %v885, 1.442695
  %v889 = vpow.pop %v888
  %v890 = vsel %vm307, %v887, 0.0
  %891 = vadd.xlane.f32.xlu0 %v890
  %v892 = vpop.xlane.xlu0 %891
  %v893 = vsel %vm307, %v889, 0.0
  %894 = vadd.xlane.f32.xlu0 %v893
  %v895 = vpop.xlane.xlu0 %894
  %v896 = vrcp.pop %v892
  %v897 = vrcp.pop %v895
  %v898 = vmul.f32 %v887, %v896
  %v899 = vmul.f32 %v889, %v897
  %900 = vrot.lane.b32.xlu0 %v201, 48
  %v901 = vpop.permute.xlu0 %900
  %902 = vrot.lane.b32.xlu0 %v206, 48
  %v903 = vpop.permute.xlu0 %902
  %v907 = vsel %vm307, %v898, 0
  %v910 = vsel %vm307, %v899, 0
  %912 = vmatprep.subr.mxu0 0.0
  %913 = vmatpush1.msra.mxu0 %v901
  %914 = vmatprep.subr.mxu0 0.0
  %915 = vmatpush1.msra.mxu0 %v903
  %916 = vmatprep.subr.mxu0 0.0
  %917 = vmatpush1.msra.mxu0 0.0
  %918 = vmatprep.subr.mxu0 0.0
  %919 = vmatpush1.msra.mxu0 0.0
  %920 = vmatprep.subr.mxu0 0.0
  %921 = vmatpush1.msra.mxu0 0.0
  %922 = vmatprep.subr.mxu0 0.0
  %923 = vmatpush1.msra.mxu0 0.0
  %924 = vmatprep.subr.mxu0 0.0
  %925 = vmatpush1.msra.mxu0 0.0
  %926 = vmatprep.subr.mxu0 0.0
  %927 = vmatpush1.msra.mxu0 0.0
  %928 = vmatprep.subr.mxu0 0.0
  %929 = vmatpush1.msra.mxu0 0.0
  %930 = vmatprep.subr.mxu0 0.0
  %931 = vmatpush1.msra.mxu0 0.0
  %932 = vmatprep.subr.mxu0 0.0
  %933 = vmatpush1.msra.mxu0 0.0
  %934 = vmatprep.subr.mxu0 0.0
  %935 = vmatpush1.msra.mxu0 0.0
  %936 = vmatprep.subr.mxu0 0.0
  %937 = vmatpush1.msra.mxu0 0.0
  %938 = vmatprep.subr.mxu0 0.0
  %939 = vmatpush1.msra.mxu0 0.0
  %940 = vmatprep.subr.mxu0 0.0
  %941 = vmatpush1.msra.mxu0 0.0
  %942 = vmatprep.subr.mxu0 0.0
  %943 = vmatpush1.msra.mxu0 0.0
  %944 = vmatprep.subr.mxu0 0.0
  %945 = vmatpush1.msra.mxu0 0.0
  %946 = vmatprep.subr.mxu0 0.0
  %947 = vmatpush1.msra.mxu0 0.0
  %948 = vmatprep.subr.mxu0 0.0
  %949 = vmatpush1.msra.mxu0 0.0
  %950 = vmatprep.subr.mxu0 0.0
  %951 = vmatpush1.msra.mxu0 0.0
  %952 = vmatprep.subr.mxu0 0.0
  %953 = vmatpush1.msra.mxu0 0.0
  %954 = vmatprep.subr.mxu0 0.0
  %955 = vmatpush1.msra.mxu0 0.0
  %956 = vmatprep.subr.mxu0 0.0
  %957 = vmatpush1.msra.mxu0 0.0
  %958 = vmatprep.subr.mxu0 0.0
  %959 = vmatpush1.msra.mxu0 0.0
  %960 = vmatprep.subr.mxu0 0.0
  %961 = vmatpush1.msra.mxu0 0.0
  %962 = vmatprep.subr.mxu0 0.0
  %963 = vmatpush1.msra.mxu0 0.0
  %964 = vmatprep.subr.mxu0 0.0
  %965 = vmatpush1.msra.mxu0 0.0
  %966 = vmatprep.subr.mxu0 0.0
  %967 = vmatpush1.msra.mxu0 0.0
  %968 = vmatprep.subr.mxu0 0.0
  %969 = vmatpush1.msra.mxu0 0.0
  %970 = vmatprep.subr.mxu0 0.0
  %971 = vmatpush1.msra.mxu0 0.0
  %972 = vmatprep.subr.mxu0 0.0
  %973 = vmatpush1.msra.mxu0 0.0
  %974 = vmatprep.subr.mxu0 0.0
  %975 = vmatpush1.msra.mxu0 0.0
  %976 = vmatprep.mubr.f32.mxu0 0.0
  %977 = vmatmul.mubr.f32.gmra.mrb[0].mxu0 %v907
  %v978 = vpop.f32.mrb[0].mxu0
  %v979 = vadd.f32 0.0, %v978
  %v980 = vpop.f32.mrb[0].mxu0
  %981 = vmatprep.mubr.f32.mxu0 0.0
  %982 = vmatmul.mubr.f32.gmra.mrb[0].mxu0 %v910
  %v983 = vpop.f32.mrb[0].mxu0
  %v984 = vadd.f32 0.0, %v983
  %v985 = vpop.f32.mrb[0].mxu0
  %986 = vdwg.mxu0
  %v988 = vsel %vm219, %v979, 0
  %v991 = vsel %vm219, %v984, 0
  %993 = vmatprep.subr.mxu0 0.0
  %994 = vmatpush1.msra.mxu0 %v211
  %995 = vmatprep.subr.mxu0 0.0
  %996 = vmatpush1.msra.mxu0 0.0
  %997 = vmatprep.subr.mxu0 0.0
  %998 = vmatpush1.msra.mxu0 0.0
  %999 = vmatprep.subr.mxu0 0.0
  %1000 = vmatpush1.msra.mxu0 0.0
  %1001 = vmatprep.subr.mxu0 0.0
  %1002 = vmatpush1.msra.mxu0 0.0
  %1003 = vmatprep.subr.mxu0 0.0
  %1004 = vmatpush1.msra.mxu0 0.0
  %1005 = vmatprep.subr.mxu0 0.0
  %1006 = vmatpush1.msra.mxu0 0.0
  %1007 = vmatprep.subr.mxu0 0.0
  %1008 = vmatpush1.msra.mxu0 0.0
  %1009 = vmatprep.subr.mxu0 0.0
  %1010 = vmatpush1.msra.mxu0 0.0
  %1011 = vmatprep.subr.mxu0 0.0
  %1012 = vmatpush1.msra.mxu0 0.0
  %1013 = vmatprep.subr.mxu0 0.0
  %1014 = vmatpush1.msra.mxu0 0.0
  %1015 = vmatprep.subr.mxu0 0.0
  %1016 = vmatpush1.msra.mxu0 0.0
  %1017 = vmatprep.subr.mxu0 0.0
  %1018 = vmatpush1.msra.mxu0 0.0
  %1019 = vmatprep.subr.mxu0 0.0
  %1020 = vmatpush1.msra.mxu0 0.0
  %1021 = vmatprep.subr.mxu0 0.0
  %1022 = vmatpush1.msra.mxu0 0.0
  %1023 = vmatprep.subr.mxu0 0.0
  %1024 = vmatpush1.msra.mxu0 0.0
  %1025 = vmatprep.subr.mxu0 0.0
  %1026 = vmatpush1.msra.mxu0 0.0
  %1027 = vmatprep.subr.mxu0 0.0
  %1028 = vmatpush1.msra.mxu0 0.0
  %1029 = vmatprep.subr.mxu0 0.0
  %1030 = vmatpush1.msra.mxu0 0.0
  %1031 = vmatprep.subr.mxu0 0.0
  %1032 = vmatpush1.msra.mxu0 0.0
  %1033 = vmatprep.subr.mxu0 0.0
  %1034 = vmatpush1.msra.mxu0 0.0
  %1035 = vmatprep.subr.mxu0 0.0
  %1036 = vmatpush1.msra.mxu0 0.0
  %1037 = vmatprep.subr.mxu0 0.0
  %1038 = vmatpush1.msra.mxu0 0.0
  %1039 = vmatprep.subr.mxu0 0.0
  %1040 = vmatpush1.msra.mxu0 0.0
  %1041 = vmatprep.subr.mxu0 0.0
  %1042 = vmatpush1.msra.mxu0 0.0
  %1043 = vmatprep.subr.mxu0 0.0
  %1044 = vmatpush1.msra.mxu0 0.0
  %1045 = vmatprep.subr.mxu0 0.0
  %1046 = vmatpush1.msra.mxu0 0.0
  %1047 = vmatprep.subr.mxu0 0.0
  %1048 = vmatpush1.msra.mxu0 0.0
  %1049 = vmatprep.subr.mxu0 0.0
  %1050 = vmatpush1.msra.mxu0 0.0
  %1051 = vmatprep.subr.mxu0 0.0
  %1052 = vmatpush1.msra.mxu0 0.0
  %1053 = vmatprep.subr.mxu0 0.0
  %1054 = vmatpush1.msra.mxu0 0.0
  %1055 = vmatprep.subr.mxu0 0.0
  %1056 = vmatpush1.msra.mxu0 0.0
  %1057 = vmatprep.mubr.f32.mxu0 0.0
  %1058 = vmatmul.mubr.f32.gmra.mrb[0].mxu0 %v988
  %v1059 = vpop.f32.mrb[0].mxu0
  %v1060 = vadd.f32 0.0, %v1059
  %v1061 = vpop.f32.mrb[0].mxu0
  %1062 = vmatprep.mubr.f32.mxu0 0.0
  %1063 = vmatmul.mubr.f32.gmra.mrb[0].mxu0 %v991
  %v1064 = vpop.f32.mrb[0].mxu0
  %v1065 = vadd.f32 0.0, %v1064
  %v1066 = vpop.f32.mrb[0].mxu0
  %1067 = vdwg.mxu0
  %v1068 = vadd.f32 %v775, %v1060
  %v1069 = vadd.f32 %v780, %v1065
  %1070 = vrot.lane.b32.xlu0 %v201, 104
  %v1071 = vpop.permute.xlu0 %1070
  %1072 = vrot.lane.b32.xlu0 %v206, 104
  %v1073 = vpop.permute.xlu0 %1072
  %1074 = vrot.lane.b32.xlu0 %v201, 72
  %v1075 = vpop.permute.xlu0 %1074
  %1076 = vrot.lane.b32.xlu0 %v206, 72
  %v1077 = vpop.permute.xlu0 %1076
  %v1078 = vsel %vm219, %v1071, 0
  %v1080 = vsel %vm219, %v1073, 0
  %v1082 = vsel %vm219, %v1075, 0
  %v1084 = vsel %vm219, %v1077, 0
  %1086 = vmatprep.subr.mxu0 0.0
  %1087 = vmatpush1.xpose.msra.mxu0 %v1082
  %1088 = vmatprep.subr.mxu0 0.0
  %1089 = vmatpush1.xpose.msra.mxu0 %v1084
  %1090 = vmatprep.subr.mxu0 0.0
  %1091 = vmatpush1.xpose.msra.mxu0 0.0
  %1092 = vmatprep.subr.mxu0 0.0
  %1093 = vmatpush1.xpose.msra.mxu0 0.0
  %1094 = vmatprep.subr.mxu0 0.0
  %1095 = vmatpush1.xpose.msra.mxu0 0.0
  %1096 = vmatprep.subr.mxu0 0.0
  %1097 = vmatpush1.xpose.msra.mxu0 0.0
  %1098 = vmatprep.subr.mxu0 0.0
  %1099 = vmatpush1.xpose.msra.mxu0 0.0
  %1100 = vmatprep.subr.mxu0 0.0
  %1101 = vmatpush1.xpose.msra.mxu0 0.0
  %1102 = vmatprep.subr.mxu0 0.0
  %1103 = vmatpush1.xpose.msra.mxu0 0.0
  %1104 = vmatprep.subr.mxu0 0.0
  %1105 = vmatpush1.xpose.msra.mxu0 0.0
  %1106 = vmatprep.subr.mxu0 0.0
  %1107 = vmatpush1.xpose.msra.mxu0 0.0
  %1108 = vmatprep.subr.mxu0 0.0
  %1109 = vmatpush1.xpose.msra.mxu0 0.0
  %1110 = vmatprep.subr.mxu0 0.0
  %1111 = vmatpush1.xpose.msra.mxu0 0.0
  %1112 = vmatprep.subr.mxu0 0.0
  %1113 = vmatpush1.xpose.msra.mxu0 0.0
  %1114 = vmatprep.subr.mxu0 0.0
  %1115 = vmatpush1.xpose.msra.mxu0 0.0
  %1116 = vmatprep.subr.mxu0 0.0
  %1117 = vmatpush1.xpose.msra.mxu0 0.0
  %1118 = vmatprep.subr.mxu0 0.0
  %1119 = vmatpush1.xpose.msra.mxu0 0.0
  %1120 = vmatprep.subr.mxu0 0.0
  %1121 = vmatpush1.xpose.msra.mxu0 0.0
  %1122 = vmatprep.subr.mxu0 0.0
  %1123 = vmatpush1.xpose.msra.mxu0 0.0
  %1124 = vmatprep.subr.mxu0 0.0
  %1125 = vmatpush1.xpose.msra.mxu0 0.0
  %1126 = vmatprep.subr.mxu0 0.0
  %1127 = vmatpush1.xpose.msra.mxu0 0.0
  %1128 = vmatprep.subr.mxu0 0.0
  %1129 = vmatpush1.xpose.msra.mxu0 0.0
  %1130 = vmatprep.subr.mxu0 0.0
  %1131 = vmatpush1.xpose.msra.mxu0 0.0
  %1132 = vmatprep.subr.mxu0 0.0
  %1133 = vmatpush1.xpose.msra.mxu0 0.0
  %1134 = vmatprep.subr.mxu0 0.0
  %1135 = vmatpush1.xpose.msra.mxu0 0.0
  %1136 = vmatprep.subr.mxu0 0.0
  %1137 = vmatpush1.xpose.msra.mxu0 0.0
  %1138 = vmatprep.subr.mxu0 0.0
  %1139 = vmatpush1.xpose.msra.mxu0 0.0
  %1140 = vmatprep.subr.mxu0 0.0
  %1141 = vmatpush1.xpose.msra.mxu0 0.0
  %1142 = vmatprep.subr.mxu0 0.0
  %1143 = vmatpush1.xpose.msra.mxu0 0.0
  %1144 = vmatprep.subr.mxu0 0.0
  %1145 = vmatpush1.xpose.msra.mxu0 0.0
  %1146 = vmatprep.subr.mxu0 0.0
  %1147 = vmatpush1.xpose.msra.mxu0 0.0
  %1148 = vmatprep.subr.mxu0 0.0
  %1149 = vmatpush1.xpose.msra.mxu0 0.0
  %1150 = vmatprep.mubr.f32.mxu0 0.0
  %1151 = vmatmul.mubr.f32.gmra.mrb[0].mxu0 %v1078
  %v1152 = vpop.f32.mrb[0].mxu0
  %v1153 = vadd.f32 0.0, %v1152
  %v1154 = vpop.f32.mrb[0].mxu0
  %1155 = vmatprep.mubr.f32.mxu0 0.0
  %1156 = vmatmul.mubr.f32.gmra.mrb[0].mxu0 %v1080
  %v1157 = vpop.f32.mrb[0].mxu0
  %v1158 = vadd.f32 0.0, %v1157
  %v1159 = vpop.f32.mrb[0].mxu0
  %1160 = vdwg.mxu0
  %v1161 = vmul.f32 %v1153, 0.35355338
  %v1162 = vmul.f32 %v1158, 0.35355338
  %v1163 = vadd.f32 %v1161, %v115
  %v1164 = vadd.f32 %v1162, %v116
  %v1165 = vsel %vm307, %v1163, -inf
  %1166 = vmax.xlane.f32.xlu0 %v1165
  %v1167 = vpop.xlane.xlu0 %1166
  %v1168 = vsel %vm307, %v1164, -inf
  %1169 = vmax.xlane.f32.xlu0 %v1168
  %v1170 = vpop.xlane.xlu0 %1169
  %v1171 = vsub.f32 %v1163, %v1167
  %v1172 = vsub.f32 %v1164, %v1170
  %v1173 = vmul.f32 %v1171, 1.442695
  %v1174 = vpow.pop %v1173
  %v1175 = vmul.f32 %v1172, 1.442695
  %v1176 = vpow.pop %v1175
  %v1177 = vsel %vm307, %v1174, 0.0
  %1178 = vadd.xlane.f32.xlu0 %v1177
  %v1179 = vpop.xlane.xlu0 %1178
  %v1180 = vsel %vm307, %v1176, 0.0
  %1181 = vadd.xlane.f32.xlu0 %v1180
  %v1182 = vpop.xlane.xlu0 %1181
  %v1183 = vrcp.pop %v1179
  %v1184 = vrcp.pop %v1182
  %v1185 = vmul.f32 %v1174, %v1183
  %v1186 = vmul.f32 %v1176, %v1184
  %1187 = vrot.lane.b32.xlu0 %v201, 40
  %v1188 = vpop.permute.xlu0 %1187
  %1189 = vrot.lane.b32.xlu0 %v206, 40
  %v1190 = vpop.permute.xlu0 %1189
  %v1194 = vsel %vm307, %v1185, 0
  %v1197 = vsel %vm307, %v1186, 0
  %1199 = vmatprep.subr.mxu0 0.0
  %1200 = vmatpush1.msra.mxu0 %v1188
  %1201 = vmatprep.subr.mxu0 0.0
  %1202 = vmatpush1.msra.mxu0 %v1190
  %1203 = vmatprep.subr.mxu0 0.0
  %1204 = vmatpush1.msra.mxu0 0.0
  %1205 = vmatprep.subr.mxu0 0.0
  %1206 = vmatpush1.msra.mxu0 0.0
  %1207 = vmatprep.subr.mxu0 0.0
  %1208 = vmatpush1.msra.mxu0 0.0
  %1209 = vmatprep.subr.mxu0 0.0
  %1210 = vmatpush1.msra.mxu0 0.0
  %1211 = vmatprep.subr.mxu0 0.0
  %1212 = vmatpush1.msra.mxu0 0.0
  %1213 = vmatprep.subr.mxu0 0.0
  %1214 = vmatpush1.msra.mxu0 0.0
  %1215 = vmatprep.subr.mxu0 0.0
  %1216 = vmatpush1.msra.mxu0 0.0
  %1217 = vmatprep.subr.mxu0 0.0
  %1218 = vmatpush1.msra.mxu0 0.0
  %1219 = vmatprep.subr.mxu0 0.0
  %1220 = vmatpush1.msra.mxu0 0.0
  %1221 = vmatprep.subr.mxu0 0.0
  %1222 = vmatpush1.msra.mxu0 0.0
  %1223 = vmatprep.subr.mxu0 0.0
  %1224 = vmatpush1.msra.mxu0 0.0
  %1225 = vmatprep.subr.mxu0 0.0
  %1226 = vmatpush1.msra.mxu0 0.0
  %1227 = vmatprep.subr.mxu0 0.0
  %1228 = vmatpush1.msra.mxu0 0.0
  %1229 = vmatprep.subr.mxu0 0.0
  %1230 = vmatpush1.msra.mxu0 0.0
  %1231 = vmatprep.subr.mxu0 0.0
  %1232 = vmatpush1.msra.mxu0 0.0
  %1233 = vmatprep.subr.mxu0 0.0
  %1234 = vmatpush1.msra.mxu0 0.0
  %1235 = vmatprep.subr.mxu0 0.0
  %1236 = vmatpush1.msra.mxu0 0.0
  %1237 = vmatprep.subr.mxu0 0.0
  %1238 = vmatpush1.msra.mxu0 0.0
  %1239 = vmatprep.subr.mxu0 0.0
  %1240 = vmatpush1.msra.mxu0 0.0
  %1241 = vmatprep.subr.mxu0 0.0
  %1242 = vmatpush1.msra.mxu0 0.0
  %1243 = vmatprep.subr.mxu0 0.0
  %1244 = vmatpush1.msra.mxu0 0.0
  %1245 = vmatprep.subr.mxu0 0.0
  %1246 = vmatpush1.msra.mxu0 0.0
  %1247 = vmatprep.subr.mxu0 0.0
  %1248 = vmatpush1.msra.mxu0 0.0
  %1249 = vmatprep.subr.mxu0 0.0
  %1250 = vmatpush1.msra.mxu0 0.0
  %1251 = vmatprep.subr.mxu0 0.0
  %1252 = vmatpush1.msra.mxu0 0.0
  %1253 = vmatprep.subr.mxu0 0.0
  %1254 = vmatpush1.msra.mxu0 0.0
  %1255 = vmatprep.subr.mxu0 0.0
  %1256 = vmatpush1.msra.mxu0 0.0
  %1257 = vmatprep.subr.mxu0 0.0
  %1258 = vmatpush1.msra.mxu0 0.0
  %1259 = vmatprep.subr.mxu0 0.0
  %1260 = vmatpush1.msra.mxu0 0.0
  %1261 = vmatprep.subr.mxu0 0.0
  %1262 = vmatpush1.msra.mxu0 0.0
  %1263 = vmatprep.mubr.f32.mxu0 0.0
  %1264 = vmatmul.mubr.f32.gmra.mrb[0].mxu0 %v1194
  %v1265 = vpop.f32.mrb[0].mxu0
  %v1266 = vadd.f32 0.0, %v1265
  %v1267 = vpop.f32.mrb[0].mxu0
  %1268 = vmatprep.mubr.f32.mxu0 0.0
  %1269 = vmatmul.mubr.f32.gmra.mrb[0].mxu0 %v1197
  %v1270 = vpop.f32.mrb[0].mxu0
  %v1271 = vadd.f32 0.0, %v1270
  %v1272 = vpop.f32.mrb[0].mxu0
  %1273 = vdwg.mxu0
  %v1275 = vsel %vm219, %v1266, 0
  %v1278 = vsel %vm219, %v1271, 0
  %1280 = vmatprep.subr.mxu0 0.0
  %1281 = vmatpush1.msra.mxu0 %v212
  %1282 = vmatprep.subr.mxu0 0.0
  %1283 = vmatpush1.msra.mxu0 0.0
  %1284 = vmatprep.subr.mxu0 0.0
  %1285 = vmatpush1.msra.mxu0 0.0
  %1286 = vmatprep.subr.mxu0 0.0
  %1287 = vmatpush1.msra.mxu0 0.0
  %1288 = vmatprep.subr.mxu0 0.0
  %1289 = vmatpush1.msra.mxu0 0.0
  %1290 = vmatprep.subr.mxu0 0.0
  %1291 = vmatpush1.msra.mxu0 0.0
  %1292 = vmatprep.subr.mxu0 0.0
  %1293 = vmatpush1.msra.mxu0 0.0
  %1294 = vmatprep.subr.mxu0 0.0
  %1295 = vmatpush1.msra.mxu0 0.0
  %1296 = vmatprep.subr.mxu0 0.0
  %1297 = vmatpush1.msra.mxu0 0.0
  %1298 = vmatprep.subr.mxu0 0.0
  %1299 = vmatpush1.msra.mxu0 0.0
  %1300 = vmatprep.subr.mxu0 0.0
  %1301 = vmatpush1.msra.mxu0 0.0
  %1302 = vmatprep.subr.mxu0 0.0
  %1303 = vmatpush1.msra.mxu0 0.0
  %1304 = vmatprep.subr.mxu0 0.0
  %1305 = vmatpush1.msra.mxu0 0.0
  %1306 = vmatprep.subr.mxu0 0.0
  %1307 = vmatpush1.msra.mxu0 0.0
  %1308 = vmatprep.subr.mxu0 0.0
  %1309 = vmatpush1.msra.mxu0 0.0
  %1310 = vmatprep.subr.mxu0 0.0
  %1311 = vmatpush1.msra.mxu0 0.0
  %1312 = vmatprep.subr.mxu0 0.0
  %1313 = vmatpush1.msra.mxu0 0.0
  %1314 = vmatprep.subr.mxu0 0.0
  %1315 = vmatpush1.msra.mxu0 0.0
  %1316 = vmatprep.subr.mxu0 0.0
  %1317 = vmatpush1.msra.mxu0 0.0
  %1318 = vmatprep.subr.mxu0 0.0
  %1319 = vmatpush1.msra.mxu0 0.0
  %1320 = vmatprep.subr.mxu0 0.0
  %1321 = vmatpush1.msra.mxu0 0.0
  %1322 = vmatprep.subr.mxu0 0.0
  %1323 = vmatpush1.msra.mxu0 0.0
  %1324 = vmatprep.subr.mxu0 0.0
  %1325 = vmatpush1.msra.mxu0 0.0
  %1326 = vmatprep.subr.mxu0 0.0
  %1327 = vmatpush1.msra.mxu0 0.0
  %1328 = vmatprep.subr.mxu0 0.0
  %1329 = vmatpush1.msra.mxu0 0.0
  %1330 = vmatprep.subr.mxu0 0.0
  %1331 = vmatpush1.msra.mxu0 0.0
  %1332 = vmatprep.subr.mxu0 0.0
  %1333 = vmatpush1.msra.mxu0 0.0
  %1334 = vmatprep.subr.mxu0 0.0
  %1335 = vmatpush1.msra.mxu0 0.0
  %1336 = vmatprep.subr.mxu0 0.0
  %1337 = vmatpush1.msra.mxu0 0.0
  %1338 = vmatprep.subr.mxu0 0.0
  %1339 = vmatpush1.msra.mxu0 0.0
  %1340 = vmatprep.subr.mxu0 0.0
  %1341 = vmatpush1.msra.mxu0 0.0
  %1342 = vmatprep.subr.mxu0 0.0
  %1343 = vmatpush1.msra.mxu0 0.0
  %1344 = vmatprep.mubr.f32.mxu0 0.0
  %1345 = vmatmul.mubr.f32.gmra.mrb[0].mxu0 %v1275
  %v1346 = vpop.f32.mrb[0].mxu0
  %v1347 = vadd.f32 0.0, %v1346
  %v1348 = vpop.f32.mrb[0].mxu0
  %1349 = vmatprep.mubr.f32.mxu0 0.0
  %1350 = vmatmul.mubr.f32.gmra.mrb[0].mxu0 %v1278
  %v1351 = vpop.f32.mrb[0].mxu0
  %v1352 = vadd.f32 0.0, %v1351
  %v1353 = vpop.f32.mrb[0].mxu0
  %1354 = vdwg.mxu0
  %v1355 = vadd.f32 %v1068, %v1347
  %v1356 = vadd.f32 %v1069, %v1352
  %v1357 = vld [vmem:[%s7] sm:$0x1]
  %v1359 = vlaneseq
  %v1360 = vshrl.u32 %v1359, 7
  %v1361 = vsub.s32 0, %v1360
  %v1362 = vrot.slane %v1357, %v1361
  %v1364 = vadd.f32 %v1355, %v1362
  %v1365 = vadd.f32 %v1356, %v1362
  %v1366 = vadd.f32 %v113, %v1364
  %v1367 = vadd.f32 %v114, %v1365
  %v1368 = vld [vmem:[%s8] sm:$0x1]
  %v1369 = vld [vmem:[%s9] sm:$0x1]
  %v1370 = vsel %vm71, %v1366, 0.0
  %1371 = vadd.xlane.f32.xlu0 %v1370
  %v1372 = vpop.xlane.xlu0 %1371
  %v1373 = vsel %vm71, %v1367, 0.0
  %1374 = vadd.xlane.f32.xlu0 %v1373
  %v1375 = vpop.xlane.xlu0 %1374
  %v1376 = vmul.f32 %v1372, %v78
  %v1377 = vmul.f32 %v1375, %v78
  %v1378 = vsub.f32 %v1366, %v1376
  %v1379 = vsub.f32 %v1367, %v1377
  %v1380 = vmul.f32 %v1378, %v1378
  %v1381 = vmul.f32 %v1379, %v1379
  %v1382 = vsel %vm71, %v1380, 0.0
  %1383 = vadd.xlane.f32.xlu0 %v1382
  %v1384 = vpop.xlane.xlu0 %1383
  %v1385 = vsel %vm71, %v1381, 0.0
  %1386 = vadd.xlane.f32.xlu0 %v1385
  %v1387 = vpop.xlane.xlu0 %1386
  %v1388 = vmul.f32 %v1384, %v78
  %v1389 = vmul.f32 %v1387, %v78
  %v1390 = vadd.f32 %v1388, 1e-12
  %v1391 = vadd.f32 %v1389, 1e-12
  %v1392 = vrsqrt.pop %v1390
  %v1393 = vrsqrt.pop %v1391
  %v1394 = vmul.f32 %v1378, %v1392
  %v1395 = vmul.f32 %v1379, %v1393
  %v1397 = vlaneseq
  %v1398 = vshrl.u32 %v1397, 7
  %v1399 = vsub.s32 0, %v1398
  %v1400 = vrot.slane %v1368, %v1399
  %v1402 = vmul.f32 %v1400, %v1394
  %v1403 = vmul.f32 %v1400, %v1395
  %v1405 = vlaneseq
  %v1406 = vshrl.u32 %v1405, 7
  %v1407 = vsub.s32 0, %v1406
  %v1408 = vrot.slane %v1369, %v1407
  %v1410 = vadd.f32 %v1402, %v1408
  %v1411 = vadd.f32 %v1403, %v1408
  %v1412 = vld [vmem:[%s10] sm:$0xff]
  %v1413 = vld [vmem:[%s10 + $0x8] sm:$0xff]
  %v1414 = vld [vmem:[%s10 + $0x10] sm:$0xff]
  %v1415 = vld [vmem:[%s10 + $0x18] sm:$0xff]
  %v1416 = vld [vmem:[%s11] sm:$0x1]
  %v1418 = vlaneseq
  %v1419 = vshrl.u32 %v1418, 7
  %v1420 = vsub.s32 0, %v1419
  %v1421 = vrot.slane %v1416, %v1420
  %v1424 = vsel %vm71, %v1410, 0
  %v1427 = vsel %vm71, %v1411, 0
  %1429 = vmatprep.subr.mxu0 0.0
  %1430 = vmatpush1.msra.mxu0 %v1412
  %1431 = vmatprep.subr.mxu0 0.0
  %1432 = vmatpush1.msra.mxu0 %v1413
  %1433 = vmatprep.subr.mxu0 0.0
  %1434 = vmatpush1.msra.mxu0 %v1414
  %1435 = vmatprep.subr.mxu0 0.0
  %1436 = vmatpush1.msra.mxu0 %v1415
  %1437 = vmatprep.subr.mxu0 0.0
  %1438 = vmatpush1.msra.mxu0 0.0
  %1439 = vmatprep.subr.mxu0 0.0
  %1440 = vmatpush1.msra.mxu0 0.0
  %1441 = vmatprep.subr.mxu0 0.0
  %1442 = vmatpush1.msra.mxu0 0.0
  %1443 = vmatprep.subr.mxu0 0.0
  %1444 = vmatpush1.msra.mxu0 0.0
  %1445 = vmatprep.subr.mxu0 0.0
  %1446 = vmatpush1.msra.mxu0 0.0
  %1447 = vmatprep.subr.mxu0 0.0
  %1448 = vmatpush1.msra.mxu0 0.0
  %1449 = vmatprep.subr.mxu0 0.0
  %1450 = vmatpush1.msra.mxu0 0.0
  %1451 = vmatprep.subr.mxu0 0.0
  %1452 = vmatpush1.msra.mxu0 0.0
  %1453 = vmatprep.subr.mxu0 0.0
  %1454 = vmatpush1.msra.mxu0 0.0
  %1455 = vmatprep.subr.mxu0 0.0
  %1456 = vmatpush1.msra.mxu0 0.0
  %1457 = vmatprep.subr.mxu0 0.0
  %1458 = vmatpush1.msra.mxu0 0.0
  %1459 = vmatprep.subr.mxu0 0.0
  %1460 = vmatpush1.msra.mxu0 0.0
  %1461 = vmatprep.subr.mxu0 0.0
  %1462 = vmatpush1.msra.mxu0 0.0
  %1463 = vmatprep.subr.mxu0 0.0
  %1464 = vmatpush1.msra.mxu0 0.0
  %1465 = vmatprep.subr.mxu0 0.0
  %1466 = vmatpush1.msra.mxu0 0.0
  %1467 = vmatprep.subr.mxu0 0.0
  %1468 = vmatpush1.msra.mxu0 0.0
  %1469 = vmatprep.subr.mxu0 0.0
  %1470 = vmatpush1.msra.mxu0 0.0
  %1471 = vmatprep.subr.mxu0 0.0
  %1472 = vmatpush1.msra.mxu0 0.0
  %1473 = vmatprep.subr.mxu0 0.0
  %1474 = vmatpush1.msra.mxu0 0.0
  %1475 = vmatprep.subr.mxu0 0.0
  %1476 = vmatpush1.msra.mxu0 0.0
  %1477 = vmatprep.subr.mxu0 0.0
  %1478 = vmatpush1.msra.mxu0 0.0
  %1479 = vmatprep.subr.mxu0 0.0
  %1480 = vmatpush1.msra.mxu0 0.0
  %1481 = vmatprep.subr.mxu0 0.0
  %1482 = vmatpush1.msra.mxu0 0.0
  %1483 = vmatprep.subr.mxu0 0.0
  %1484 = vmatpush1.msra.mxu0 0.0
  %1485 = vmatprep.subr.mxu0 0.0
  %1486 = vmatpush1.msra.mxu0 0.0
  %1487 = vmatprep.subr.mxu0 0.0
  %1488 = vmatpush1.msra.mxu0 0.0
  %1489 = vmatprep.subr.mxu0 0.0
  %1490 = vmatpush1.msra.mxu0 0.0
  %1491 = vmatprep.subr.mxu0 0.0
  %1492 = vmatpush1.msra.mxu0 0.0
  %1493 = vmatprep.mubr.f32.mxu0 0.0
  %1494 = vmatmul.mubr.f32.gmra.mrb[0].mxu0 %v1424
  %v1495 = vpop.f32.mrb[0].mxu0
  %v1496 = vadd.f32 %v1421, %v1495
  %v1497 = vpop.f32.mrb[0].mxu0
  %1498 = vmatprep.mubr.f32.mxu0 0.0
  %1499 = vmatmul.mubr.f32.gmra.mrb[0].mxu0 %v1427
  %v1500 = vpop.f32.mrb[0].mxu0
  %v1501 = vadd.f32 %v1421, %v1500
  %v1502 = vpop.f32.mrb[0].mxu0
  %1503 = vdwg.mxu0
  %v1504 = vmul.f32 %v1496, 0.5
  %v1505 = vmul.f32 %v1501, 0.5
  %v1506 = vmul.f32 %v1496, 0.044715
  %v1507 = vmul.f32 %v1501, 0.044715
  %v1508 = vmul.f32 %v1506, %v1496
  %v1509 = vmul.f32 %v1507, %v1501
  %v1510 = vmul.f32 %v1508, %v1496
  %v1511 = vmul.f32 %v1509, %v1501
  %v1512 = vadd.f32 %v1496, %v1510
  %v1513 = vadd.f32 %v1501, %v1511
  %v1514 = vmul.f32 %v1512, 0.7978846
  %v1515 = vmul.f32 %v1513, 0.7978846
  %v1516 = vtanh.pop %v1514
  %v1517 = vtanh.pop %v1515
  %v1518 = vadd.f32 %v1516, 1.0
  %v1519 = vadd.f32 %v1517, 1.0
  %v1520 = vmul.f32 %v1504, %v1518
  %v1521 = vmul.f32 %v1505, %v1519
  %v1522 = vld [vmem:[%s12] sm:$0xff]
  %v1523 = vld [vmem:[%s12 + $0x8] sm:$0xff]
  %v1524 = vld [vmem:[%s12 + $0x10] sm:$0xff]
  %v1525 = vld [vmem:[%s12 + $0x18] sm:$0xff]
  %v1526 = vld [vmem:[%s12 + $0x20] sm:$0xff]
  %v1527 = vld [vmem:[%s12 + $0x28] sm:$0xff]
  %v1528 = vld [vmem:[%s12 + $0x30] sm:$0xff]
  %v1529 = vld [vmem:[%s12 + $0x38] sm:$0xff]
  %v1530 = vld [vmem:[%s13] sm:$0x1]
  %v1532 = vlaneseq
  %v1533 = vshrl.u32 %v1532, 7
  %v1534 = vsub.s32 0, %v1533
  %v1535 = vrot.slane %v1530, %v1534
  %vm1537 = vcmask 523264
  %v1539 = vsel %vm1537, %v1520, 0
  %v1542 = vsel %vm1537, %v1521, 0
  %1544 = vmatprep.subr.mxu0 0.0
  %1545 = vmatpush1.msra.mxu0 %v1522
  %1546 = vmatprep.subr.mxu0 0.0
  %1547 = vmatpush1.msra.mxu0 %v1523
  %1548 = vmatprep.subr.mxu0 0.0
  %1549 = vmatpush1.msra.mxu0 %v1524
  %1550 = vmatprep.subr.mxu0 0.0
  %1551 = vmatpush1.msra.mxu0 %v1525
  %1552 = vmatprep.subr.mxu0 0.0
  %1553 = vmatpush1.msra.mxu0 %v1526
  %1554 = vmatprep.subr.mxu0 0.0
  %1555 = vmatpush1.msra.mxu0 %v1527
  %1556 = vmatprep.subr.mxu0 0.0
  %1557 = vmatpush1.msra.mxu0 %v1528
  %1558 = vmatprep.subr.mxu0 0.0
  %1559 = vmatpush1.msra.mxu0 %v1529
  %1560 = vmatprep.subr.mxu0 0.0
  %1561 = vmatpush1.msra.mxu0 0.0
  %1562 = vmatprep.subr.mxu0 0.0
  %1563 = vmatpush1.msra.mxu0 0.0
  %1564 = vmatprep.subr.mxu0 0.0
  %1565 = vmatpush1.msra.mxu0 0.0
  %1566 = vmatprep.subr.mxu0 0.0
  %1567 = vmatpush1.msra.mxu0 0.0
  %1568 = vmatprep.subr.mxu0 0.0
  %1569 = vmatpush1.msra.mxu0 0.0
  %1570 = vmatprep.subr.mxu0 0.0
  %1571 = vmatpush1.msra.mxu0 0.0
  %1572 = vmatprep.subr.mxu0 0.0
  %1573 = vmatpush1.msra.mxu0 0.0
  %1574 = vmatprep.subr.mxu0 0.0
  %1575 = vmatpush1.msra.mxu0 0.0
  %1576 = vmatprep.subr.mxu0 0.0
  %1577 = vmatpush1.msra.mxu0 0.0
  %1578 = vmatprep.subr.mxu0 0.0
  %1579 = vmatpush1.msra.mxu0 0.0
  %1580 = vmatprep.subr.mxu0 0.0
  %1581 = vmatpush1.msra.mxu0 0.0
  %1582 = vmatprep.subr.mxu0 0.0
  %1583 = vmatpush1.msra.mxu0 0.0
  %1584 = vmatprep.subr.mxu0 0.0
  %1585 = vmatpush1.msra.mxu0 0.0
  %1586 = vmatprep.subr.mxu0 0.0
  %1587 = vmatpush1.msra.mxu0 0.0
  %1588 = vmatprep.subr.mxu0 0.0
  %1589 = vmatpush1.msra.mxu0 0.0
  %1590 = vmatprep.subr.mxu0 0.0
  %1591 = vmatpush1.msra.mxu0 0.0
  %1592 = vmatprep.subr.mxu0 0.0
  %1593 = vmatpush1.msra.mxu0 0.0
  %1594 = vmatprep.subr.mxu0 0.0
  %1595 = vmatpush1.msra.mxu0 0.0
  %1596 = vmatprep.subr.mxu0 0.0
  %1597 = vmatpush1.msra.mxu0 0.0
  %1598 = vmatprep.subr.mxu0 0.0
  %1599 = vmatpush1.msra.mxu0 0.0
  %1600 = vmatprep.subr.mxu0 0.0
  %1601 = vmatpush1.msra.mxu0 0.0
  %1602 = vmatprep.subr.mxu0 0.0
  %1603 = vmatpush1.msra.mxu0 0.0
  %1604 = vmatprep.subr.mxu0 0.0
  %1605 = vmatpush1.msra.mxu0 0.0
  %1606 = vmatprep.subr.mxu0 0.0
  %1607 = vmatpush1.msra.mxu0 0.0
  %1608 = vmatprep.mubr.f32.mxu0 0.0
  %1609 = vmatmul.mubr.f32.gmra.mrb[0].mxu0 %v1539
  %v1610 = vpop.f32.mrb[0].mxu0
  %v1611 = vadd.f32 %v1535, %v1610
  %v1612 = vpop.f32.mrb[0].mxu0
  %1613 = vmatprep.mubr.f32.mxu0 0.0
  %1614 = vmatmul.mubr.f32.gmra.mrb[0].mxu0 %v1542
  %v1615 = vpop.f32.mrb[0].mxu0
  %v1616 = vadd.f32 %v1535, %v1615
  %v1617 = vpop.f32.mrb[0].mxu0
  %1618 = vdwg.mxu0
  %v1619 = vadd.f32 %v1410, %v1611
  %v1620 = vadd.f32 %v1411, %v1616
  %v1621 = vld [vmem:[%s14] sm:$0x1]
  %v1622 = vld [vmem:[%s15] sm:$0x1]
  %v1623 = vsel %vm71, %v1619, 0.0
  %1624 = vadd.xlane.f32.xlu0 %v1623
  %v1625 = vpop.xlane.xlu0 %1624
  %v1626 = vsel %vm71, %v1620, 0.0
  %1627 = vadd.xlane.f32.xlu0 %v1626
  %v1628 = vpop.xlane.xlu0 %1627
  %v1629 = vmul.f32 %v1625, %v78
  %v1630 = vmul.f32 %v1628, %v78
  %v1631 = vsub.f32 %v1619, %v1629
  %v1632 = vsub.f32 %v1620, %v1630
  %v1633 = vmul.f32 %v1631, %v1631
  %v1634 = vmul.f32 %v1632, %v1632
  %v1635 = vsel %vm71, %v1633, 0.0
  %1636 = vadd.xlane.f32.xlu0 %v1635
  %v1637 = vpop.xlane.xlu0 %1636
  %v1638 = vsel %vm71, %v1634, 0.0
  %1639 = vadd.xlane.f32.xlu0 %v1638
  %v1640 = vpop.xlane.xlu0 %1639
  %v1641 = vmul.f32 %v1637, %v78
  %v1642 = vmul.f32 %v1640, %v78
  %v1643 = vadd.f32 %v1641, 1e-12
  %v1644 = vadd.f32 %v1642, 1e-12
  %v1645 = vrsqrt.pop %v1643
  %v1646 = vrsqrt.pop %v1644
  %v1647 = vmul.f32 %v1631, %v1645
  %v1648 = vmul.f32 %v1632, %v1646
  %v1650 = vlaneseq
  %v1651 = vshrl.u32 %v1650, 7
  %v1652 = vsub.s32 0, %v1651
  %v1653 = vrot.slane %v1621, %v1652
  %v1655 = vmul.f32 %v1653, %v1647
  %v1656 = vmul.f32 %v1653, %v1648
  %v1658 = vlaneseq
  %v1659 = vshrl.u32 %v1658, 7
  %v1660 = vsub.s32 0, %v1659
  %v1661 = vrot.slane %v1622, %v1660
  %v1663 = vadd.f32 %v1655, %v1661
  %v1664 = vadd.f32 %v1656, %v1661
  %s1665 = scalar_lea.vmem %s4, 32
  %v1666 = vld [vmem:[%s1665] sm:$0xff]
  %v1667 = vld [vmem:[%s1665 + $0x8] sm:$0xff]
  %v1668 = vld [vmem:[%s1665 + $0x10] sm:$0xff]
  %v1669 = vld [vmem:[%s1665 + $0x18] sm:$0xff]
  %s1670 = scalar_lea.vmem %s5, 1
  %v1671 = vld [vmem:[%s1670] sm:$0x1]
  %v1673 = vlaneseq
  %v1674 = vshrl.u32 %v1673, 7
  %v1675 = vsub.s32 0, %v1674
  %v1676 = vrot.slane %v1671, %v1675
  %v1679 = vsel %vm71, %v1663, 0
  %v1682 = vsel %vm71, %v1664, 0
  %1684 = vmatprep.subr.mxu0 0.0
  %1685 = vmatpush1.msra.mxu0 %v1666
  %1686 = vmatprep.subr.mxu0 0.0
  %1687 = vmatpush1.msra.mxu0 %v1667
  %1688 = vmatprep.subr.mxu0 0.0
  %1689 = vmatpush1.msra.mxu0 %v1668
  %1690 = vmatprep.subr.mxu0 0.0
  %1691 = vmatpush1.msra.mxu0 %v1669
  %1692 = vmatprep.subr.mxu0 0.0
  %1693 = vmatpush1.msra.mxu0 0.0
  %1694 = vmatprep.subr.mxu0 0.0
  %1695 = vmatpush1.msra.mxu0 0.0
  %1696 = vmatprep.subr.mxu0 0.0
  %1697 = vmatpush1.msra.mxu0 0.0
  %1698 = vmatprep.subr.mxu0 0.0
  %1699 = vmatpush1.msra.mxu0 0.0
  %1700 = vmatprep.subr.mxu0 0.0
  %1701 = vmatpush1.msra.mxu0 0.0
  %1702 = vmatprep.subr.mxu0 0.0
  %1703 = vmatpush1.msra.mxu0 0.0
  %1704 = vmatprep.subr.mxu0 0.0
  %1705 = vmatpush1.msra.mxu0 0.0
  %1706 = vmatprep.subr.mxu0 0.0
  %1707 = vmatpush1.msra.mxu0 0.0
  %1708 = vmatprep.subr.mxu0 0.0
  %1709 = vmatpush1.msra.mxu0 0.0
  %1710 = vmatprep.subr.mxu0 0.0
  %1711 = vmatpush1.msra.mxu0 0.0
  %1712 = vmatprep.subr.mxu0 0.0
  %1713 = vmatpush1.msra.mxu0 0.0
  %1714 = vmatprep.subr.mxu0 0.0
  %1715 = vmatpush1.msra.mxu0 0.0
  %1716 = vmatprep.subr.mxu0 0.0
  %1717 = vmatpush1.msra.mxu0 0.0
  %1718 = vmatprep.subr.mxu0 0.0
  %1719 = vmatpush1.msra.mxu0 0.0
  %1720 = vmatprep.subr.mxu0 0.0
  %1721 = vmatpush1.msra.mxu0 0.0
  %1722 = vmatprep.subr.mxu0 0.0
  %1723 = vmatpush1.msra.mxu0 0.0
  %1724 = vmatprep.subr.mxu0 0.0
  %1725 = vmatpush1.msra.mxu0 0.0
  %1726 = vmatprep.subr.mxu0 0.0
  %1727 = vmatpush1.msra.mxu0 0.0
  %1728 = vmatprep.subr.mxu0 0.0
  %1729 = vmatpush1.msra.mxu0 0.0
  %1730 = vmatprep.subr.mxu0 0.0
  %1731 = vmatpush1.msra.mxu0 0.0
  %1732 = vmatprep.subr.mxu0 0.0
  %1733 = vmatpush1.msra.mxu0 0.0
  %1734 = vmatprep.subr.mxu0 0.0
  %1735 = vmatpush1.msra.mxu0 0.0
  %1736 = vmatprep.subr.mxu0 0.0
  %1737 = vmatpush1.msra.mxu0 0.0
  %1738 = vmatprep.subr.mxu0 0.0
  %1739 = vmatpush1.msra.mxu0 0.0
  %1740 = vmatprep.subr.mxu0 0.0
  %1741 = vmatpush1.msra.mxu0 0.0
  %1742 = vmatprep.subr.mxu0 0.0
  %1743 = vmatpush1.msra.mxu0 0.0
  %1744 = vmatprep.subr.mxu0 0.0
  %1745 = vmatpush1.msra.mxu0 0.0
  %1746 = vmatprep.subr.mxu0 0.0
  %1747 = vmatpush1.msra.mxu0 0.0
  %1748 = vmatprep.mubr.f32.mxu0 0.0
  %1749 = vmatmul.mubr.f32.gmra.mrb[0].mxu0 %v1679
  %v1750 = vpop.f32.mrb[0].mxu0
  %v1751 = vadd.f32 %v1676, %v1750
  %v1752 = vpop.f32.mrb[0].mxu0
  %1753 = vmatprep.mubr.f32.mxu0 0.0
  %1754 = vmatmul.mubr.f32.gmra.mrb[0].mxu0 %v1682
  %v1755 = vpop.f32.mrb[0].mxu0
  %v1756 = vadd.f32 %v1676, %v1755
  %v1757 = vpop.f32.mrb[0].mxu0
  %1758 = vdwg.mxu0
  %s1759 = scalar_lea.vmem %s6, 32
  %v1760 = vld [vmem:[%s1759] sm:$0xff]
  %v1761 = vld [vmem:[%s1759 + $0x8] sm:$0xff]
  %v1762 = vld [vmem:[%s1759 + $0x10] sm:$0xff]
  %v1763 = vld [vmem:[%s1759 + $0x18] sm:$0xff]
  %1766 = vrot.lane.b32.xlu0 %v1751, 96
  %v1767 = vpop.permute.xlu0 %1766
  %1768 = vrot.lane.b32.xlu0 %v1756, 96
  %v1769 = vpop.permute.xlu0 %1768
  %v1770 = vsel %vm219, %v1751, 0
  %v1772 = vsel %vm219, %v1756, 0
  %v1774 = vsel %vm219, %v1767, 0
  %v1776 = vsel %vm219, %v1769, 0
  %1778 = vmatprep.subr.mxu0 0.0
  %1779 = vmatpush1.xpose.msra.mxu0 %v1774
  %1780 = vmatprep.subr.mxu0 0.0
  %1781 = vmatpush1.xpose.msra.mxu0 %v1776
  %1782 = vmatprep.subr.mxu0 0.0
  %1783 = vmatpush1.xpose.msra.mxu0 0.0
  %1784 = vmatprep.subr.mxu0 0.0
  %1785 = vmatpush1.xpose.msra.mxu0 0.0
  %1786 = vmatprep.subr.mxu0 0.0
  %1787 = vmatpush1.xpose.msra.mxu0 0.0
  %1788 = vmatprep.subr.mxu0 0.0
  %1789 = vmatpush1.xpose.msra.mxu0 0.0
  %1790 = vmatprep.subr.mxu0 0.0
  %1791 = vmatpush1.xpose.msra.mxu0 0.0
  %1792 = vmatprep.subr.mxu0 0.0
  %1793 = vmatpush1.xpose.msra.mxu0 0.0
  %1794 = vmatprep.subr.mxu0 0.0
  %1795 = vmatpush1.xpose.msra.mxu0 0.0
  %1796 = vmatprep.subr.mxu0 0.0
  %1797 = vmatpush1.xpose.msra.mxu0 0.0
  %1798 = vmatprep.subr.mxu0 0.0
  %1799 = vmatpush1.xpose.msra.mxu0 0.0
  %1800 = vmatprep.subr.mxu0 0.0
  %1801 = vmatpush1.xpose.msra.mxu0 0.0
  %1802 = vmatprep.subr.mxu0 0.0
  %1803 = vmatpush1.xpose.msra.mxu0 0.0
  %1804 = vmatprep.subr.mxu0 0.0
  %1805 = vmatpush1.xpose.msra.mxu0 0.0
  %1806 = vmatprep.subr.mxu0 0.0
  %1807 = vmatpush1.xpose.msra.mxu0 0.0
  %1808 = vmatprep.subr.mxu0 0.0
  %1809 = vmatpush1.xpose.msra.mxu0 0.0
  %1810 = vmatprep.subr.mxu0 0.0
  %1811 = vmatpush1.xpose.msra.mxu0 0.0
  %1812 = vmatprep.subr.mxu0 0.0
  %1813 = vmatpush1.xpose.msra.mxu0 0.0
  %1814 = vmatprep.subr.mxu0 0.0
  %1815 = vmatpush1.xpose.msra.mxu0 0.0
  %1816 = vmatprep.subr.mxu0 0.0
  %1817 = vmatpush1.xpose.msra.mxu0 0.0
  %1818 = vmatprep.subr.mxu0 0.0
  %1819 = vmatpush1.xpose.msra.mxu0 0.0
  %1820 = vmatprep.subr.mxu0 0.0
  %1821 = vmatpush1.xpose.msra.mxu0 0.0
  %1822 = vmatprep.subr.mxu0 0.0
  %1823 = vmatpush1.xpose.msra.mxu0 0.0
  %1824 = vmatprep.subr.mxu0 0.0
  %1825 = vmatpush1.xpose.msra.mxu0 0.0
  %1826 = vmatprep.subr.mxu0 0.0
  %1827 = vmatpush1.xpose.msra.mxu0 0.0
  %1828 = vmatprep.subr.mxu0 0.0
  %1829 = vmatpush1.xpose.msra.mxu0 0.0
  %1830 = vmatprep.subr.mxu0 0.0
  %1831 = vmatpush1.xpose.msra.mxu0 0.0
  %1832 = vmatprep.subr.mxu0 0.0
  %1833 = vmatpush1.xpose.msra.mxu0 0.0
  %1834 = vmatprep.subr.mxu0 0.0
  %1835 = vmatpush1.xpose.msra.mxu0 0.0
  %1836 = vmatprep.subr.mxu0 0.0
  %1837 = vmatpush1.xpose.msra.mxu0 0.0
  %1838 = vmatprep.subr.mxu0 0.0
  %1839 = vmatpush1.xpose.msra.mxu0 0.0
  %1840 = vmatprep.subr.mxu0 0.0
  %1841 = vmatpush1.xpose.msra.mxu0 0.0
  %1842 = vmatprep.mubr.f32.mxu0 0.0
  %1843 = vmatmul.mubr.f32.gmra.mrb[0].mxu0 %v1770
  %v1844 = vpop.f32.mrb[0].mxu0
  %v1845 = vadd.f32 0.0, %v1844
  %v1846 = vpop.f32.mrb[0].mxu0
  %1847 = vmatprep.mubr.f32.mxu0 0.0
  %1848 = vmatmul.mubr.f32.gmra.mrb[0].mxu0 %v1772
  %v1849 = vpop.f32.mrb[0].mxu0
  %v1850 = vadd.f32 0.0, %v1849
  %v1851 = vpop.f32.mrb[0].mxu0
  %1852 = vdwg.mxu0
  %v1853 = vmul.f32 %v1845, 0.35355338
  %v1854 = vmul.f32 %v1850, 0.35355338
  %v1855 = vadd.f32 %v1853, %v115
  %v1856 = vadd.f32 %v1854, %v116
  %v1857 = vsel %vm307, %v1855, -inf
  %1858 = vmax.xlane.f32.xlu0 %v1857
  %v1859 = vpop.xlane.xlu0 %1858
  %v1860 = vsel %vm307, %v1856, -inf
  %1861 = vmax.xlane.f32.xlu0 %v1860
  %v1862 = vpop.xlane.xlu0 %1861
  %v1863 = vsub.f32 %v1855, %v1859
  %v1864 = vsub.f32 %v1856, %v1862
  %v1865 = vmul.f32 %v1863, 1.442695
  %v1866 = vpow.pop %v1865
  %v1867 = vmul.f32 %v1864, 1.442695
  %v1868 = vpow.pop %v1867
  %v1869 = vsel %vm307, %v1866, 0.0
  %1870 = vadd.xlane.f32.xlu0 %v1869
  %v1871 = vpop.xlane.xlu0 %1870
  %v1872 = vsel %vm307, %v1868, 0.0
  %1873 = vadd.xlane.f32.xlu0 %v1872
  %v1874 = vpop.xlane.xlu0 %1873
  %v1875 = vrcp.pop %v1871
  %v1876 = vrcp.pop %v1874
  %v1877 = vmul.f32 %v1866, %v1875
  %v1878 = vmul.f32 %v1868, %v1876
  %1879 = vrot.lane.b32.xlu0 %v1751, 64
  %v1880 = vpop.permute.xlu0 %1879
  %1881 = vrot.lane.b32.xlu0 %v1756, 64
  %v1882 = vpop.permute.xlu0 %1881
  %v1886 = vsel %vm307, %v1877, 0
  %v1889 = vsel %vm307, %v1878, 0
  %1891 = vmatprep.subr.mxu0 0.0
  %1892 = vmatpush1.msra.mxu0 %v1880
  %1893 = vmatprep.subr.mxu0 0.0
  %1894 = vmatpush1.msra.mxu0 %v1882
  %1895 = vmatprep.subr.mxu0 0.0
  %1896 = vmatpush1.msra.mxu0 0.0
  %1897 = vmatprep.subr.mxu0 0.0
  %1898 = vmatpush1.msra.mxu0 0.0
  %1899 = vmatprep.subr.mxu0 0.0
  %1900 = vmatpush1.msra.mxu0 0.0
  %1901 = vmatprep.subr.mxu0 0.0
  %1902 = vmatpush1.msra.mxu0 0.0
  %1903 = vmatprep.subr.mxu0 0.0
  %1904 = vmatpush1.msra.mxu0 0.0
  %1905 = vmatprep.subr.mxu0 0.0
  %1906 = vmatpush1.msra.mxu0 0.0
  %1907 = vmatprep.subr.mxu0 0.0
  %1908 = vmatpush1.msra.mxu0 0.0
  %1909 = vmatprep.subr.mxu0 0.0
  %1910 = vmatpush1.msra.mxu0 0.0
  %1911 = vmatprep.subr.mxu0 0.0
  %1912 = vmatpush1.msra.mxu0 0.0
  %1913 = vmatprep.subr.mxu0 0.0
  %1914 = vmatpush1.msra.mxu0 0.0
  %1915 = vmatprep.subr.mxu0 0.0
  %1916 = vmatpush1.msra.mxu0 0.0
  %1917 = vmatprep.subr.mxu0 0.0
  %1918 = vmatpush1.msra.mxu0 0.0
  %1919 = vmatprep.subr.mxu0 0.0
  %1920 = vmatpush1.msra.mxu0 0.0
  %1921 = vmatprep.subr.mxu0 0.0
  %1922 = vmatpush1.msra.mxu0 0.0
  %1923 = vmatprep.subr.mxu0 0.0
  %1924 = vmatpush1.msra.mxu0 0.0
  %1925 = vmatprep.subr.mxu0 0.0
  %1926 = vmatpush1.msra.mxu0 0.0
  %1927 = vmatprep.subr.mxu0 0.0
  %1928 = vmatpush1.msra.mxu0 0.0
  %1929 = vmatprep.subr.mxu0 0.0
  %1930 = vmatpush1.msra.mxu0 0.0
  %1931 = vmatprep.subr.mxu0 0.0
  %1932 = vmatpush1.msra.mxu0 0.0
  %1933 = vmatprep.subr.mxu0 0.0
  %1934 = vmatpush1.msra.mxu0 0.0
  %1935 = vmatprep.subr.mxu0 0.0
  %1936 = vmatpush1.msra.mxu0 0.0
  %1937 = vmatprep.subr.mxu0 0.0
  %1938 = vmatpush1.msra.mxu0 0.0
  %1939 = vmatprep.subr.mxu0 0.0
  %1940 = vmatpush1.msra.mxu0 0.0
  %1941 = vmatprep.subr.mxu0 0.0
  %1942 = vmatpush1.msra.mxu0 0.0
  %1943 = vmatprep.subr.mxu0 0.0
  %1944 = vmatpush1.msra.mxu0 0.0
  %1945 = vmatprep.subr.mxu0 0.0
  %1946 = vmatpush1.msra.mxu0 0.0
  %1947 = vmatprep.subr.mxu0 0.0
  %1948 = vmatpush1.msra.mxu0 0.0
  %1949 = vmatprep.subr.mxu0 0.0
  %1950 = vmatpush1.msra.mxu0 0.0
  %1951 = vmatprep.subr.mxu0 0.0
  %1952 = vmatpush1.msra.mxu0 0.0
  %1953 = vmatprep.subr.mxu0 0.0
  %1954 = vmatpush1.msra.mxu0 0.0
  %1955 = vmatprep.mubr.f32.mxu0 0.0
  %1956 = vmatmul.mubr.f32.gmra.mrb[0].mxu0 %v1886
  %v1957 = vpop.f32.mrb[0].mxu0
  %v1958 = vadd.f32 0.0, %v1957
  %v1959 = vpop.f32.mrb[0].mxu0
  %1960 = vmatprep.mubr.f32.mxu0 0.0
  %1961 = vmatmul.mubr.f32.gmra.mrb[0].mxu0 %v1889
  %v1962 = vpop.f32.mrb[0].mxu0
  %v1963 = vadd.f32 0.0, %v1962
  %v1964 = vpop.f32.mrb[0].mxu0
  %1965 = vdwg.mxu0
  %1966 = vrot.lane.b32.xlu0 %v1751, 120
  %v1967 = vpop.permute.xlu0 %1966
  %1968 = vrot.lane.b32.xlu0 %v1756, 120
  %v1969 = vpop.permute.xlu0 %1968
  %1970 = vrot.lane.b32.xlu0 %v1751, 88
  %v1971 = vpop.permute.xlu0 %1970
  %1972 = vrot.lane.b32.xlu0 %v1756, 88
  %v1973 = vpop.permute.xlu0 %1972
  %v1974 = vsel %vm219, %v1967, 0
  %v1976 = vsel %vm219, %v1969, 0
  %v1978 = vsel %vm219, %v1971, 0
  %v1980 = vsel %vm219, %v1973, 0
  %1982 = vmatprep.subr.mxu0 0.0
  %1983 = vmatpush1.xpose.msra.mxu0 %v1978
  %1984 = vmatprep.subr.mxu0 0.0
  %1985 = vmatpush1.xpose.msra.mxu0 %v1980
  %1986 = vmatprep.subr.mxu0 0.0
  %1987 = vmatpush1.xpose.msra.mxu0 0.0
  %1988 = vmatprep.subr.mxu0 0.0
  %1989 = vmatpush1.xpose.msra.mxu0 0.0
  %1990 = vmatprep.subr.mxu0 0.0
  %1991 = vmatpush1.xpose.msra.mxu0 0.0
  %1992 = vmatprep.subr.mxu0 0.0
  %1993 = vmatpush1.xpose.msra.mxu0 0.0
  %1994 = vmatprep.subr.mxu0 0.0
  %1995 = vmatpush1.xpose.msra.mxu0 0.0
  %1996 = vmatprep.subr.mxu0 0.0
  %1997 = vmatpush1.xpose.msra.mxu0 0.0
  %1998 = vmatprep.subr.mxu0 0.0
  %1999 = vmatpush1.xpose.msra.mxu0 0.0
  %2000 = vmatprep.subr.mxu0 0.0
  %2001 = vmatpush1.xpose.msra.mxu0 0.0
  %2002 = vmatprep.subr.mxu0 0.0
  %2003 = vmatpush1.xpose.msra.mxu0 0.0
  %2004 = vmatprep.subr.mxu0 0.0
  %2005 = vmatpush1.xpose.msra.mxu0 0.0
  %2006 = vmatprep.subr.mxu0 0.0
  %2007 = vmatpush1.xpose.msra.mxu0 0.0
  %2008 = vmatprep.subr.mxu0 0.0
  %2009 = vmatpush1.xpose.msra.mxu0 0.0
  %2010 = vmatprep.subr.mxu0 0.0
  %2011 = vmatpush1.xpose.msra.mxu0 0.0
  %2012 = vmatprep.subr.mxu0 0.0
  %2013 = vmatpush1.xpose.msra.mxu0 0.0
  %2014 = vmatprep.subr.mxu0 0.0
  %2015 = vmatpush1.xpose.msra.mxu0 0.0
  %2016 = vmatprep.subr.mxu0 0.0
  %2017 = vmatpush1.xpose.msra.mxu0 0.0
  %2018 = vmatprep.subr.mxu0 0.0
  %2019 = vmatpush1.xpose.msra.mxu0 0.0
  %2020 = vmatprep.subr.mxu0 0.0
  %2021 = vmatpush1.xpose.msra.mxu0 0.0
  %2022 = vmatprep.subr.mxu0 0.0
  %2023 = vmatpush1.xpose.msra.mxu0 0.0
  %2024 = vmatprep.subr.mxu0 0.0
  %2025 = vmatpush1.xpose.msra.mxu0 0.0
  %2026 = vmatprep.subr.mxu0 0.0
  %2027 = vmatpush1.xpose.msra.mxu0 0.0
  %2028 = vmatprep.subr.mxu0 0.0
  %2029 = vmatpush1.xpose.msra.mxu0 0.0
  %2030 = vmatprep.subr.mxu0 0.0
  %2031 = vmatpush1.xpose.msra.mxu0 0.0
  %2032 = vmatprep.subr.mxu0 0.0
  %2033 = vmatpush1.xpose.msra.mxu0 0.0
  %2034 = vmatprep.subr.mxu0 0.0
  %2035 = vmatpush1.xpose.msra.mxu0 0.0
  %2036 = vmatprep.subr.mxu0 0.0
  %2037 = vmatpush1.xpose.msra.mxu0 0.0
  %2038 = vmatprep.subr.mxu0 0.0
  %2039 = vmatpush1.xpose.msra.mxu0 0.0
  %2040 = vmatprep.subr.mxu0 0.0
  %2041 = vmatpush1.xpose.msra.mxu0 0.0
  %2042 = vmatprep.subr.mxu0 0.0
  %2043 = vmatpush1.xpose.msra.mxu0 0.0
  %2044 = vmatprep.subr.mxu0 0.0
  %2045 = vmatpush1.xpose.msra.mxu0 0.0
  %2046 = vmatprep.mubr.f32.mxu0 0.0
  %2047 = vmatmul.mubr.f32.gmra.mrb[0].mxu0 %v1974
  %v2048 = vpop.f32.mrb[0].mxu0
  %v2049 = vadd.f32 0.0, %v2048
  %v2050 = vpop.f32.mrb[0].mxu0
  %2051 = vmatprep.mubr.f32.mxu0 0.0
  %2052 = vmatmul.mubr.f32.gmra.mrb[0].mxu0 %v1976
  %v2053 = vpop.f32.mrb[0].mxu0
  %v2054 = vadd.f32 0.0, %v2053
  %v2055 = vpop.f32.mrb[0].mxu0
  %2056 = vdwg.mxu0
  %v2057 = vmul.f32 %v2049, 0.35355338
  %v2058 = vmul.f32 %v2054, 0.35355338
  %v2059 = vadd.f32 %v2057, %v115
  %v2060 = vadd.f32 %v2058, %v116
  %v2061 = vsel %vm307, %v2059, -inf
  %2062 = vmax.xlane.f32.xlu0 %v2061
  %v2063 = vpop.xlane.xlu0 %2062
  %v2064 = vsel %vm307, %v2060, -inf
  %2065 = vmax.xlane.f32.xlu0 %v2064
  %v2066 = vpop.xlane.xlu0 %2065
  %v2067 = vsub.f32 %v2059, %v2063
  %v2068 = vsub.f32 %v2060, %v2066
  %v2069 = vmul.f32 %v2067, 1.442695
  %v2070 = vpow.pop %v2069
  %v2071 = vmul.f32 %v2068, 1.442695
  %v2072 = vpow.pop %v2071
  %v2073 = vsel %vm307, %v2070, 0.0
  %2074 = vadd.xlane.f32.xlu0 %v2073
  %v2075 = vpop.xlane.xlu0 %2074
  %v2076 = vsel %vm307, %v2072, 0.0
  %2077 = vadd.xlane.f32.xlu0 %v2076
  %v2078 = vpop.xlane.xlu0 %2077
  %v2079 = vrcp.pop %v2075
  %v2080 = vrcp.pop %v2078
  %v2081 = vmul.f32 %v2070, %v2079
  %v2082 = vmul.f32 %v2072, %v2080
  %2083 = vrot.lane.b32.xlu0 %v1751, 56
  %v2084 = vpop.permute.xlu0 %2083
  %2085 = vrot.lane.b32.xlu0 %v1756, 56
  %v2086 = vpop.permute.xlu0 %2085
  %v2090 = vsel %vm307, %v2081, 0
  %v2093 = vsel %vm307, %v2082, 0
  %2095 = vmatprep.subr.mxu0 0.0
  %2096 = vmatpush1.msra.mxu0 %v2084
  %2097 = vmatprep.subr.mxu0 0.0
  %2098 = vmatpush1.msra.mxu0 %v2086
  %2099 = vmatprep.subr.mxu0 0.0
  %2100 = vmatpush1.msra.mxu0 0.0
  %2101 = vmatprep.subr.mxu0 0.0
  %2102 = vmatpush1.msra.mxu0 0.0
  %2103 = vmatprep.subr.mxu0 0.0
  %2104 = vmatpush1.msra.mxu0 0.0
  %2105 = vmatprep.subr.mxu0 0.0
  %2106 = vmatpush1.msra.mxu0 0.0
  %2107 = vmatprep.subr.mxu0 0.0
  %2108 = vmatpush1.msra.mxu0 0.0
  %2109 = vmatprep.subr.mxu0 0.0
  %2110 = vmatpush1.msra.mxu0 0.0
  %2111 = vmatprep.subr.mxu0 0.0
  %2112 = vmatpush1.msra.mxu0 0.0
  %2113 = vmatprep.subr.mxu0 0.0
  %2114 = vmatpush1.msra.mxu0 0.0
  %2115 = vmatprep.subr.mxu0 0.0
  %2116 = vmatpush1.msra.mxu0 0.0
  %2117 = vmatprep.subr.mxu0 0.0
  %2118 = vmatpush1.msra.mxu0 0.0
  %2119 = vmatprep.subr.mxu0 0.0
  %2120 = vmatpush1.msra.mxu0 0.0
  %2121 = vmatprep.subr.mxu0 0.0
  %2122 = vmatpush1.msra.mxu0 0.0
  %2123 = vmatprep.subr.mxu0 0.0
  %2124 = vmatpush1.msra.mxu0 0.0
  %2125 = vmatprep.subr.mxu0 0.0
  %2126 = vmatpush1.msra.mxu0 0.0
  %2127 = vmatprep.subr.mxu0 0.0
  %2128 = vmatpush1.msra.mxu0 0.0
  %2129 = vmatprep.subr.mxu0 0.0
  %2130 = vmatpush1.msra.mxu0 0.0
  %2131 = vmatprep.subr.mxu0 0.0
  %2132 = vmatpush1.msra.mxu0 0.0
  %2133 = vmatprep.subr.mxu0 0.0
  %2134 = vmatpush1.msra.mxu0 0.0
  %2135 = vmatprep.subr.mxu0 0.0
  %2136 = vmatpush1.msra.mxu0 0.0
  %2137 = vmatprep.subr.mxu0 0.0
  %2138 = vmatpush1.msra.mxu0 0.0
  %2139 = vmatprep.subr.mxu0 0.0
  %2140 = vmatpush1.msra.mxu0 0.0
  %2141 = vmatprep.subr.mxu0 0.0
  %2142 = vmatpush1.msra.mxu0 0.0
  %2143 = vmatprep.subr.mxu0 0.0
  %2144 = vmatpush1.msra.mxu0 0.0
  %2145 = vmatprep.subr.mxu0 0.0
  %2146 = vmatpush1.msra.mxu0 0.0
  %2147 = vmatprep.subr.mxu0 0.0
  %2148 = vmatpush1.msra.mxu0 0.0
  %2149 = vmatprep.subr.mxu0 0.0
  %2150 = vmatpush1.msra.mxu0 0.0
  %2151 = vmatprep.subr.mxu0 0.0
  %2152 = vmatpush1.msra.mxu0 0.0
  %2153 = vmatprep.subr.mxu0 0.0
  %2154 = vmatpush1.msra.mxu0 0.0
  %2155 = vmatprep.subr.mxu0 0.0
  %2156 = vmatpush1.msra.mxu0 0.0
  %2157 = vmatprep.subr.mxu0 0.0
  %2158 = vmatpush1.msra.mxu0 0.0
  %2159 = vmatprep.mubr.f32.mxu0 0.0
  %2160 = vmatmul.mubr.f32.gmra.mrb[0].mxu0 %v2090
  %v2161 = vpop.f32.mrb[0].mxu0
  %v2162 = vadd.f32 0.0, %v2161
  %v2163 = vpop.f32.mrb[0].mxu0
  %2164 = vmatprep.mubr.f32.mxu0 0.0
  %2165 = vmatmul.mubr.f32.gmra.mrb[0].mxu0 %v2093
  %v2166 = vpop.f32.mrb[0].mxu0
  %v2167 = vadd.f32 0.0, %v2166
  %v2168 = vpop.f32.mrb[0].mxu0
  %2169 = vdwg.mxu0
  %v2171 = vsel %vm219, %v2162, 0
  %v2174 = vsel %vm219, %v2167, 0
  %2176 = vmatprep.subr.mxu0 0.0
  %2177 = vmatpush1.msra.mxu0 %v1761
  %2178 = vmatprep.subr.mxu0 0.0
  %2179 = vmatpush1.msra.mxu0 0.0
  %2180 = vmatprep.subr.mxu0 0.0
  %2181 = vmatpush1.msra.mxu0 0.0
  %2182 = vmatprep.subr.mxu0 0.0
  %2183 = vmatpush1.msra.mxu0 0.0
  %2184 = vmatprep.subr.mxu0 0.0
  %2185 = vmatpush1.msra.mxu0 0.0
  %2186 = vmatprep.subr.mxu0 0.0
  %2187 = vmatpush1.msra.mxu0 0.0
  %2188 = vmatprep.subr.mxu0 0.0
  %2189 = vmatpush1.msra.mxu0 0.0
  %2190 = vmatprep.subr.mxu0 0.0
  %2191 = vmatpush1.msra.mxu0 0.0
  %2192 = vmatprep.subr.mxu0 0.0
  %2193 = vmatpush1.msra.mxu0 0.0
  %2194 = vmatprep.subr.mxu0 0.0
  %2195 = vmatpush1.msra.mxu0 0.0
  %2196 = vmatprep.subr.mxu0 0.0
  %2197 = vmatpush1.msra.mxu0 0.0
  %2198 = vmatprep.subr.mxu0 0.0
  %2199 = vmatpush1.msra.mxu0 0.0
  %2200 = vmatprep.subr.mxu0 0.0
  %2201 = vmatpush1.msra.mxu0 0.0
  %2202 = vmatprep.subr.mxu0 0.0
  %2203 = vmatpush1.msra.mxu0 0.0
  %2204 = vmatprep.subr.mxu0 0.0
  %2205 = vmatpush1.msra.mxu0 0.0
  %2206 = vmatprep.subr.mxu0 0.0
  %2207 = vmatpush1.msra.mxu0 0.0
  %2208 = vmatprep.subr.mxu0 0.0
  %2209 = vmatpush1.msra.mxu0 0.0
  %2210 = vmatprep.subr.mxu0 0.0
  %2211 = vmatpush1.msra.mxu0 0.0
  %2212 = vmatprep.subr.mxu0 0.0
  %2213 = vmatpush1.msra.mxu0 0.0
  %2214 = vmatprep.subr.mxu0 0.0
  %2215 = vmatpush1.msra.mxu0 0.0
  %2216 = vmatprep.subr.mxu0 0.0
  %2217 = vmatpush1.msra.mxu0 0.0
  %2218 = vmatprep.subr.mxu0 0.0
  %2219 = vmatpush1.msra.mxu0 0.0
  %2220 = vmatprep.subr.mxu0 0.0
  %2221 = vmatpush1.msra.mxu0 0.0
  %2222 = vmatprep.subr.mxu0 0.0
  %2223 = vmatpush1.msra.mxu0 0.0
  %2224 = vmatprep.subr.mxu0 0.0
  %2225 = vmatpush1.msra.mxu0 0.0
  %2226 = vmatprep.subr.mxu0 0.0
  %2227 = vmatpush1.msra.mxu0 0.0
  %2228 = vmatprep.subr.mxu0 0.0
  %2229 = vmatpush1.msra.mxu0 0.0
  %2230 = vmatprep.subr.mxu0 0.0
  %2231 = vmatpush1.msra.mxu0 0.0
  %2232 = vmatprep.subr.mxu0 0.0
  %2233 = vmatpush1.msra.mxu0 0.0
  %2234 = vmatprep.subr.mxu0 0.0
  %2235 = vmatpush1.msra.mxu0 0.0
  %2236 = vmatprep.subr.mxu0 0.0
  %2237 = vmatpush1.msra.mxu0 0.0
  %2238 = vmatprep.subr.mxu0 0.0
  %2239 = vmatpush1.msra.mxu0 0.0
  %2240 = vmatprep.mubr.f32.mxu0 0.0
  %2241 = vmatmul.mubr.f32.gmra.mrb[0].mxu0 %v2171
  %v2242 = vpop.f32.mrb[0].mxu0
  %v2243 = vadd.f32 0.0, %v2242
  %v2244 = vpop.f32.mrb[0].mxu0
  %2245 = vmatprep.mubr.f32.mxu0 0.0
  %2246 = vmatmul.mubr.f32.gmra.mrb[0].mxu0 %v2174
  %v2247 = vpop.f32.mrb[0].mxu0
  %v2248 = vadd.f32 0.0, %v2247
  %v2249 = vpop.f32.mrb[0].mxu0
  %2250 = vdwg.mxu0
  %v2252 = vsel %vm219, %v1958, 0
  %v2255 = vsel %vm219, %v1963, 0
  %2257 = vmatprep.subr.mxu0 0.0
  %2258 = vmatpush1.msra.mxu0 %v1760
  %2259 = vmatprep.subr.mxu0 0.0
  %2260 = vmatpush1.msra.mxu0 0.0
  %2261 = vmatprep.subr.mxu0 0.0
  %2262 = vmatpush1.msra.mxu0 0.0
  %2263 = vmatprep.subr.mxu0 0.0
  %2264 = vmatpush1.msra.mxu0 0.0
  %2265 = vmatprep.subr.mxu0 0.0
  %2266 = vmatpush1.msra.mxu0 0.0
  %2267 = vmatprep.subr.mxu0 0.0
  %2268 = vmatpush1.msra.mxu0 0.0
  %2269 = vmatprep.subr.mxu0 0.0
  %2270 = vmatpush1.msra.mxu0 0.0
  %2271 = vmatprep.subr.mxu0 0.0
  %2272 = vmatpush1.msra.mxu0 0.0
  %2273 = vmatprep.subr.mxu0 0.0
  %2274 = vmatpush1.msra.mxu0 0.0
  %2275 = vmatprep.subr.mxu0 0.0
  %2276 = vmatpush1.msra.mxu0 0.0
  %2277 = vmatprep.subr.mxu0 0.0
  %2278 = vmatpush1.msra.mxu0 0.0
  %2279 = vmatprep.subr.mxu0 0.0
  %2280 = vmatpush1.msra.mxu0 0.0
  %2281 = vmatprep.subr.mxu0 0.0
  %2282 = vmatpush1.msra.mxu0 0.0
  %2283 = vmatprep.subr.mxu0 0.0
  %2284 = vmatpush1.msra.mxu0 0.0
  %2285 = vmatprep.subr.mxu0 0.0
  %2286 = vmatpush1.msra.mxu0 0.0
  %2287 = vmatprep.subr.mxu0 0.0
  %2288 = vmatpush1.msra.mxu0 0.0
  %2289 = vmatprep.subr.mxu0 0.0
  %2290 = vmatpush1.msra.mxu0 0.0
  %2291 = vmatprep.subr.mxu0 0.0
  %2292 = vmatpush1.msra.mxu0 0.0
  %2293 = vmatprep.subr.mxu0 0.0
  %2294 = vmatpush1.msra.mxu0 0.0
  %2295 = vmatprep.subr.mxu0 0.0
  %2296 = vmatpush1.msra.mxu0 0.0
  %2297 = vmatprep.subr.mxu0 0.0
  %2298 = vmatpush1.msra.mxu0 0.0
  %2299 = vmatprep.subr.mxu0 0.0
  %2300 = vmatpush1.msra.mxu0 0.0
  %2301 = vmatprep.subr.mxu0 0.0
  %2302 = vmatpush1.msra.mxu0 0.0
  %2303 = vmatprep.subr.mxu0 0.0
  %2304 = vmatpush1.msra.mxu0 0.0
  %2305 = vmatprep.subr.mxu0 0.0
  %2306 = vmatpush1.msra.mxu0 0.0
  %2307 = vmatprep.subr.mxu0 0.0
  %2308 = vmatpush1.msra.mxu0 0.0
  %2309 = vmatprep.subr.mxu0 0.0
  %2310 = vmatpush1.msra.mxu0 0.0
  %2311 = vmatprep.subr.mxu0 0.0
  %2312 = vmatpush1.msra.mxu0 0.0
  %2313 = vmatprep.subr.mxu0 0.0
  %2314 = vmatpush1.msra.mxu0 0.0
  %2315 = vmatprep.subr.mxu0 0.0
  %2316 = vmatpush1.msra.mxu0 0.0
  %2317 = vmatprep.subr.mxu0 0.0
  %2318 = vmatpush1.msra.mxu0 0.0
  %2319 = vmatprep.subr.mxu0 0.0
  %2320 = vmatpush1.msra.mxu0 0.0
  %2321 = vmatprep.mubr.f32.mxu0 0.0
  %2322 = vmatmul.mubr.f32.gmra.mrb[0].mxu0 %v2252
  %v2323 = vpop.f32.mrb[0].mxu0
  %v2324 = vadd.f32 %v2243, %v2323
  %v2325 = vpop.f32.mrb[0].mxu0
  %2326 = vmatprep.mubr.f32.mxu0 0.0
  %2327 = vmatmul.mubr.f32.gmra.mrb[0].mxu0 %v2255
  %v2328 = vpop.f32.mrb[0].mxu0
  %v2329 = vadd.f32 %v2248, %v2328
  %v2330 = vpop.f32.mrb[0].mxu0
  %2331 = vdwg.mxu0
  %2332 = vrot.lane.b32.xlu0 %v1751, 112
  %v2333 = vpop.permute.xlu0 %2332
  %2334 = vrot.lane.b32.xlu0 %v1756, 112
  %v2335 = vpop.permute.xlu0 %2334
  %2336 = vrot.lane.b32.xlu0 %v1751, 80
  %v2337 = vpop.permute.xlu0 %2336
  %2338 = vrot.lane.b32.xlu0 %v1756, 80
  %v2339 = vpop.permute.xlu0 %2338
  %v2340 = vsel %vm219, %v2333, 0
  %v2342 = vsel %vm219, %v2335, 0
  %v2344 = vsel %vm219, %v2337, 0
  %v2346 = vsel %vm219, %v2339, 0
  %2348 = vmatprep.subr.mxu0 0.0
  %2349 = vmatpush1.xpose.msra.mxu0 %v2344
  %2350 = vmatprep.subr.mxu0 0.0
  %2351 = vmatpush1.xpose.msra.mxu0 %v2346
  %2352 = vmatprep.subr.mxu0 0.0
  %2353 = vmatpush1.xpose.msra.mxu0 0.0
  %2354 = vmatprep.subr.mxu0 0.0
  %2355 = vmatpush1.xpose.msra.mxu0 0.0
  %2356 = vmatprep.subr.mxu0 0.0
  %2357 = vmatpush1.xpose.msra.mxu0 0.0
  %2358 = vmatprep.subr.mxu0 0.0
  %2359 = vmatpush1.xpose.msra.mxu0 0.0
  %2360 = vmatprep.subr.mxu0 0.0
  %2361 = vmatpush1.xpose.msra.mxu0 0.0
  %2362 = vmatprep.subr.mxu0 0.0
  %2363 = vmatpush1.xpose.msra.mxu0 0.0
  %2364 = vmatprep.subr.mxu0 0.0
  %2365 = vmatpush1.xpose.msra.mxu0 0.0
  %2366 = vmatprep.subr.mxu0 0.0
  %2367 = vmatpush1.xpose.msra.mxu0 0.0
  %2368 = vmatprep.subr.mxu0 0.0
  %2369 = vmatpush1.xpose.msra.mxu0 0.0
  %2370 = vmatprep.subr.mxu0 0.0
  %2371 = vmatpush1.xpose.msra.mxu0 0.0
  %2372 = vmatprep.subr.mxu0 0.0
  %2373 = vmatpush1.xpose.msra.mxu0 0.0
  %2374 = vmatprep.subr.mxu0 0.0
  %2375 = vmatpush1.xpose.msra.mxu0 0.0
  %2376 = vmatprep.subr.mxu0 0.0
  %2377 = vmatpush1.xpose.msra.mxu0 0.0
  %2378 = vmatprep.subr.mxu0 0.0
  %2379 = vmatpush1.xpose.msra.mxu0 0.0
  %2380 = vmatprep.subr.mxu0 0.0
  %2381 = vmatpush1.xpose.msra.mxu0 0.0
  %2382 = vmatprep.subr.mxu0 0.0
  %2383 = vmatpush1.xpose.msra.mxu0 0.0
  %2384 = vmatprep.subr.mxu0 0.0
  %2385 = vmatpush1.xpose.msra.mxu0 0.0
  %2386 = vmatprep.subr.mxu0 0.0
  %2387 = vmatpush1.xpose.msra.mxu0 0.0
  %2388 = vmatprep.subr.mxu0 0.0
  %2389 = vmatpush1.xpose.msra.mxu0 0.0
  %2390 = vmatprep.subr.mxu0 0.0
  %2391 = vmatpush1.xpose.msra.mxu0 0.0
  %2392 = vmatprep.subr.mxu0 0.0
  %2393 = vmatpush1.xpose.msra.mxu0 0.0
  %2394 = vmatprep.subr.mxu0 0.0
  %2395 = vmatpush1.xpose.msra.mxu0 0.0
  %2396 = vmatprep.subr.mxu0 0.0
  %2397 = vmatpush1.xpose.msra.mxu0 0.0
  %2398 = vmatprep.subr.mxu0 0.0
  %2399 = vmatpush1.xpose.msra.mxu0 0.0
  %2400 = vmatprep.subr.mxu0 0.0
  %2401 = vmatpush1.xpose.msra.mxu0 0.0
  %2402 = vmatprep.subr.mxu0 0.0
  %2403 = vmatpush1.xpose.msra.mxu0 0.0
  %2404 = vmatprep.subr.mxu0 0.0
  %2405 = vmatpush1.xpose.msra.mxu0 0.0
  %2406 = vmatprep.subr.mxu0 0.0
  %2407 = vmatpush1.xpose.msra.mxu0 0.0
  %2408 = vmatprep.subr.mxu0 0.0
  %2409 = vmatpush1.xpose.msra.mxu0 0.0
  %2410 = vmatprep.subr.mxu0 0.0
  %2411 = vmatpush1.xpose.msra.mxu0 0.0
  %2412 = vmatprep.mubr.f32.mxu0 0.0
  %2413 = vmatmul.mubr.f32.gmra.mrb[0].mxu0 %v2340
  %v2414 = vpop.f32.mrb[0].mxu0
  %v2415 = vadd.f32 0.0, %v2414
  %v2416 = vpop.f32.mrb[0].mxu0
  %2417 = vmatprep.mubr.f32.mxu0 0.0
  %2418 = vmatmul.mubr.f32.gmra.mrb[0].mxu0 %v2342
  %v2419 = vpop.f32.mrb[0].mxu0
  %v2420 = vadd.f32 0.0, %v2419
  %v2421 = vpop.f32.mrb[0].mxu0
  %2422 = vdwg.mxu0
  %v2423 = vmul.f32 %v2415, 0.35355338
  %v2424 = vmul.f32 %v2420, 0.35355338
  %v2425 = vadd.f32 %v2423, %v115
  %v2426 = vadd.f32 %v2424, %v116
  %v2427 = vsel %vm307, %v2425, -inf
  %2428 = vmax.xlane.f32.xlu0 %v2427
  %v2429 = vpop.xlane.xlu0 %2428
  %v2430 = vsel %vm307, %v2426, -inf
  %2431 = vmax.xlane.f32.xlu0 %v2430
  %v2432 = vpop.xlane.xlu0 %2431
  %v2433 = vsub.f32 %v2425, %v2429
  %v2434 = vsub.f32 %v2426, %v2432
  %v2435 = vmul.f32 %v2433, 1.442695
  %v2436 = vpow.pop %v2435
  %v2437 = vmul.f32 %v2434, 1.442695
  %v2438 = vpow.pop %v2437
  %v2439 = vsel %vm307, %v2436, 0.0
  %2440 = vadd.xlane.f32.xlu0 %v2439
  %v2441 = vpop.xlane.xlu0 %2440
  %v2442 = vsel %vm307, %v2438, 0.0
  %2443 = vadd.xlane.f32.xlu0 %v2442
  %v2444 = vpop.xlane.xlu0 %2443
  %v2445 = vrcp.pop %v2441
  %v2446 = vrcp.pop %v2444
  %v2447 = vmul.f32 %v2436, %v2445
  %v2448 = vmul.f32 %v2438, %v2446
  %2449 = vrot.lane.b32.xlu0 %v1751, 48
  %v2450 = vpop.permute.xlu0 %2449
  %2451 = vrot.lane.b32.xlu0 %v1756, 48
  %v2452 = vpop.permute.xlu0 %2451
  %v2456 = vsel %vm307, %v2447, 0
  %v2459 = vsel %vm307, %v2448, 0
  %2461 = vmatprep.subr.mxu0 0.0
  %2462 = vmatpush1.msra.mxu0 %v2450
  %2463 = vmatprep.subr.mxu0 0.0
  %2464 = vmatpush1.msra.mxu0 %v2452
  %2465 = vmatprep.subr.mxu0 0.0
  %2466 = vmatpush1.msra.mxu0 0.0
  %2467 = vmatprep.subr.mxu0 0.0
  %2468 = vmatpush1.msra.mxu0 0.0
  %2469 = vmatprep.subr.mxu0 0.0
  %2470 = vmatpush1.msra.mxu0 0.0
  %2471 = vmatprep.subr.mxu0 0.0
  %2472 = vmatpush1.msra.mxu0 0.0
  %2473 = vmatprep.subr.mxu0 0.0
  %2474 = vmatpush1.msra.mxu0 0.0
  %2475 = vmatprep.subr.mxu0 0.0
  %2476 = vmatpush1.msra.mxu0 0.0
  %2477 = vmatprep.subr.mxu0 0.0
  %2478 = vmatpush1.msra.mxu0 0.0
  %2479 = vmatprep.subr.mxu0 0.0
  %2480 = vmatpush1.msra.mxu0 0.0
  %2481 = vmatprep.subr.mxu0 0.0
  %2482 = vmatpush1.msra.mxu0 0.0
  %2483 = vmatprep.subr.mxu0 0.0
  %2484 = vmatpush1.msra.mxu0 0.0
  %2485 = vmatprep.subr.mxu0 0.0
  %2486 = vmatpush1.msra.mxu0 0.0
  %2487 = vmatprep.subr.mxu0 0.0
  %2488 = vmatpush1.msra.mxu0 0.0
  %2489 = vmatprep.subr.mxu0 0.0
  %2490 = vmatpush1.msra.mxu0 0.0
  %2491 = vmatprep.subr.mxu0 0.0
  %2492 = vmatpush1.msra.mxu0 0.0
  %2493 = vmatprep.subr.mxu0 0.0
  %2494 = vmatpush1.msra.mxu0 0.0
  %2495 = vmatprep.subr.mxu0 0.0
  %2496 = vmatpush1.msra.mxu0 0.0
  %2497 = vmatprep.subr.mxu0 0.0
  %2498 = vmatpush1.msra.mxu0 0.0
  %2499 = vmatprep.subr.mxu0 0.0
  %2500 = vmatpush1.msra.mxu0 0.0
  %2501 = vmatprep.subr.mxu0 0.0
  %2502 = vmatpush1.msra.mxu0 0.0
  %2503 = vmatprep.subr.mxu0 0.0
  %2504 = vmatpush1.msra.mxu0 0.0
  %2505 = vmatprep.subr.mxu0 0.0
  %2506 = vmatpush1.msra.mxu0 0.0
  %2507 = vmatprep.subr.mxu0 0.0
  %2508 = vmatpush1.msra.mxu0 0.0
  %2509 = vmatprep.subr.mxu0 0.0
  %2510 = vmatpush1.msra.mxu0 0.0
  %2511 = vmatprep.subr.mxu0 0.0
  %2512 = vmatpush1.msra.mxu0 0.0
  %2513 = vmatprep.subr.mxu0 0.0
  %2514 = vmatpush1.msra.mxu0 0.0
  %2515 = vmatprep.subr.mxu0 0.0
  %2516 = vmatpush1.msra.mxu0 0.0
  %2517 = vmatprep.subr.mxu0 0.0
  %2518 = vmatpush1.msra.mxu0 0.0
  %2519 = vmatprep.subr.mxu0 0.0
  %2520 = vmatpush1.msra.mxu0 0.0
  %2521 = vmatprep.subr.mxu0 0.0
  %2522 = vmatpush1.msra.mxu0 0.0
  %2523 = vmatprep.subr.mxu0 0.0
  %2524 = vmatpush1.msra.mxu0 0.0
  %2525 = vmatprep.mubr.f32.mxu0 0.0
  %2526 = vmatmul.mubr.f32.gmra.mrb[0].mxu0 %v2456
  %v2527 = vpop.f32.mrb[0].mxu0
  %v2528 = vadd.f32 0.0, %v2527
  %v2529 = vpop.f32.mrb[0].mxu0
  %2530 = vmatprep.mubr.f32.mxu0 0.0
  %2531 = vmatmul.mubr.f32.gmra.mrb[0].mxu0 %v2459
  %v2532 = vpop.f32.mrb[0].mxu0
  %v2533 = vadd.f32 0.0, %v2532
  %v2534 = vpop.f32.mrb[0].mxu0
  %2535 = vdwg.mxu0
  %v2537 = vsel %vm219, %v2528, 0
  %v2540 = vsel %vm219, %v2533, 0
  %2542 = vmatprep.subr.mxu0 0.0
  %2543 = vmatpush1.msra.mxu0 %v1762
  %2544 = vmatprep.subr.mxu0 0.0
  %2545 = vmatpush1.msra.mxu0 0.0
  %2546 = vmatprep.subr.mxu0 0.0
  %2547 = vmatpush1.msra.mxu0 0.0
  %2548 = vmatprep.subr.mxu0 0.0
  %2549 = vmatpush1.msra.mxu0 0.0
  %2550 = vmatprep.subr.mxu0 0.0
  %2551 = vmatpush1.msra.mxu0 0.0
  %2552 = vmatprep.subr.mxu0 0.0
  %2553 = vmatpush1.msra.mxu0 0.0
  %2554 = vmatprep.subr.mxu0 0.0
  %2555 = vmatpush1.msra.mxu0 0.0
  %2556 = vmatprep.subr.mxu0 0.0
  %2557 = vmatpush1.msra.mxu0 0.0
  %2558 = vmatprep.subr.mxu0 0.0
  %2559 = vmatpush1.msra.mxu0 0.0
  %2560 = vmatprep.subr.mxu0 0.0
  %2561 = vmatpush1.msra.mxu0 0.0
  %2562 = vmatprep.subr.mxu0 0.0
  %2563 = vmatpush1.msra.mxu0 0.0
  %2564 = vmatprep.subr.mxu0 0.0
  %2565 = vmatpush1.msra.mxu0 0.0
  %2566 = vmatprep.subr.mxu0 0.0
  %2567 = vmatpush1.msra.mxu0 0.0
  %2568 = vmatprep.subr.mxu0 0.0
  %2569 = vmatpush1.msra.mxu0 0.0
  %2570 = vmatprep.subr.mxu0 0.0
  %2571 = vmatpush1.msra.mxu0 0.0
  %2572 = vmatprep.subr.mxu0 0.0
  %2573 = vmatpush1.msra.mxu0 0.0
  %2574 = vmatprep.subr.mxu0 0.0
  %2575 = vmatpush1.msra.mxu0 0.0
  %2576 = vmatprep.subr.mxu0 0.0
  %2577 = vmatpush1.msra.mxu0 0.0
  %2578 = vmatprep.subr.mxu0 0.0
  %2579 = vmatpush1.msra.mxu0 0.0
  %2580 = vmatprep.subr.mxu0 0.0
  %2581 = vmatpush1.msra.mxu0 0.0
  %2582 = vmatprep.subr.mxu0 0.0
  %2583 = vmatpush1.msra.mxu0 0.0
  %2584 = vmatprep.subr.mxu0 0.0
  %2585 = vmatpush1.msra.mxu0 0.0
  %2586 = vmatprep.subr.mxu0 0.0
  %2587 = vmatpush1.msra.mxu0 0.0
  %2588 = vmatprep.subr.mxu0 0.0
  %2589 = vmatpush1.msra.mxu0 0.0
  %2590 = vmatprep.subr.mxu0 0.0
  %2591 = vmatpush1.msra.mxu0 0.0
  %2592 = vmatprep.subr.mxu0 0.0
  %2593 = vmatpush1.msra.mxu0 0.0
  %2594 = vmatprep.subr.mxu0 0.0
  %2595 = vmatpush1.msra.mxu0 0.0
  %2596 = vmatprep.subr.mxu0 0.0
  %2597 = vmatpush1.msra.mxu0 0.0
  %2598 = vmatprep.subr.mxu0 0.0
  %2599 = vmatpush1.msra.mxu0 0.0
  %2600 = vmatprep.subr.mxu0 0.0
  %2601 = vmatpush1.msra.mxu0 0.0
  %2602 = vmatprep.subr.mxu0 0.0
  %2603 = vmatpush1.msra.mxu0 0.0
  %2604 = vmatprep.subr.mxu0 0.0
  %2605 = vmatpush1.msra.mxu0 0.0
  %2606 = vmatprep.mubr.f32.mxu0 0.0
  %2607 = vmatmul.mubr.f32.gmra.mrb[0].mxu0 %v2537
  %v2608 = vpop.f32.mrb[0].mxu0
  %v2609 = vadd.f32 0.0, %v2608
  %v2610 = vpop.f32.mrb[0].mxu0
  %2611 = vmatprep.mubr.f32.mxu0 0.0
  %2612 = vmatmul.mubr.f32.gmra.mrb[0].mxu0 %v2540
  %v2613 = vpop.f32.mrb[0].mxu0
  %v2614 = vadd.f32 0.0, %v2613
  %v2615 = vpop.f32.mrb[0].mxu0
  %2616 = vdwg.mxu0
  %v2617 = vadd.f32 %v2324, %v2609
  %v2618 = vadd.f32 %v2329, %v2614
  %2619 = vrot.lane.b32.xlu0 %v1751, 104
  %v2620 = vpop.permute.xlu0 %2619
  %2621 = vrot.lane.b32.xlu0 %v1756, 104
  %v2622 = vpop.permute.xlu0 %2621
  %2623 = vrot.lane.b32.xlu0 %v1751, 72
  %v2624 = vpop.permute.xlu0 %2623
  %2625 = vrot.lane.b32.xlu0 %v1756, 72
  %v2626 = vpop.permute.xlu0 %2625
  %v2627 = vsel %vm219, %v2620, 0
  %v2629 = vsel %vm219, %v2622, 0
  %v2631 = vsel %vm219, %v2624, 0
  %v2633 = vsel %vm219, %v2626, 0
  %2635 = vmatprep.subr.mxu0 0.0
  %2636 = vmatpush1.xpose.msra.mxu0 %v2631
  %2637 = vmatprep.subr.mxu0 0.0
  %2638 = vmatpush1.xpose.msra.mxu0 %v2633
  %2639 = vmatprep.subr.mxu0 0.0
  %2640 = vmatpush1.xpose.msra.mxu0 0.0
  %2641 = vmatprep.subr.mxu0 0.0
  %2642 = vmatpush1.xpose.msra.mxu0 0.0
  %2643 = vmatprep.subr.mxu0 0.0
  %2644 = vmatpush1.xpose.msra.mxu0 0.0
  %2645 = vmatprep.subr.mxu0 0.0
  %2646 = vmatpush1.xpose.msra.mxu0 0.0
  %2647 = vmatprep.subr.mxu0 0.0
  %2648 = vmatpush1.xpose.msra.mxu0 0.0
  %2649 = vmatprep.subr.mxu0 0.0
  %2650 = vmatpush1.xpose.msra.mxu0 0.0
  %2651 = vmatprep.subr.mxu0 0.0
  %2652 = vmatpush1.xpose.msra.mxu0 0.0
  %2653 = vmatprep.subr.mxu0 0.0
  %2654 = vmatpush1.xpose.msra.mxu0 0.0
  %2655 = vmatprep.subr.mxu0 0.0
  %2656 = vmatpush1.xpose.msra.mxu0 0.0
  %2657 = vmatprep.subr.mxu0 0.0
  %2658 = vmatpush1.xpose.msra.mxu0 0.0
  %2659 = vmatprep.subr.mxu0 0.0
  %2660 = vmatpush1.xpose.msra.mxu0 0.0
  %2661 = vmatprep.subr.mxu0 0.0
  %2662 = vmatpush1.xpose.msra.mxu0 0.0
  %2663 = vmatprep.subr.mxu0 0.0
  %2664 = vmatpush1.xpose.msra.mxu0 0.0
  %2665 = vmatprep.subr.mxu0 0.0
  %2666 = vmatpush1.xpose.msra.mxu0 0.0
  %2667 = vmatprep.subr.mxu0 0.0
  %2668 = vmatpush1.xpose.msra.mxu0 0.0
  %2669 = vmatprep.subr.mxu0 0.0
  %2670 = vmatpush1.xpose.msra.mxu0 0.0
  %2671 = vmatprep.subr.mxu0 0.0
  %2672 = vmatpush1.xpose.msra.mxu0 0.0
  %2673 = vmatprep.subr.mxu0 0.0
  %2674 = vmatpush1.xpose.msra.mxu0 0.0
  %2675 = vmatprep.subr.mxu0 0.0
  %2676 = vmatpush1.xpose.msra.mxu0 0.0
  %2677 = vmatprep.subr.mxu0 0.0
  %2678 = vmatpush1.xpose.msra.mxu0 0.0
  %2679 = vmatprep.subr.mxu0 0.0
  %2680 = vmatpush1.xpose.msra.mxu0 0.0
  %2681 = vmatprep.subr.mxu0 0.0
  %2682 = vmatpush1.xpose.msra.mxu0 0.0
  %2683 = vmatprep.subr.mxu0 0.0
  %2684 = vmatpush1.xpose.msra.mxu0 0.0
  %2685 = vmatprep.subr.mxu0 0.0
  %2686 = vmatpush1.xpose.msra.mxu0 0.0
  %2687 = vmatprep.subr.mxu0 0.0
  %2688 = vmatpush1.xpose.msra.mxu0 0.0
  %2689 = vmatprep.subr.mxu0 0.0
  %2690 = vmatpush1.xpose.msra.mxu0 0.0
  %2691 = vmatprep.subr.mxu0 0.0
  %2692 = vmatpush1.xpose.msra.mxu0 0.0
  %2693 = vmatprep.subr.mxu0 0.0
  %2694 = vmatpush1.xpose.msra.mxu0 0.0
  %2695 = vmatprep.subr.mxu0 0.0
  %2696 = vmatpush1.xpose.msra.mxu0 0.0
  %2697 = vmatprep.subr.mxu0 0.0
  %2698 = vmatpush1.xpose.msra.mxu0 0.0
  %2699 = vmatprep.mubr.f32.mxu0 0.0
  %2700 = vmatmul.mubr.f32.gmra.mrb[0].mxu0 %v2627
  %v2701 = vpop.f32.mrb[0].mxu0
  %v2702 = vadd.f32 0.0, %v2701
  %v2703 = vpop.f32.mrb[0].mxu0
  %2704 = vmatprep.mubr.f32.mxu0 0.0
  %2705 = vmatmul.mubr.f32.gmra.mrb[0].mxu0 %v2629
  %v2706 = vpop.f32.mrb[0].mxu0
  %v2707 = vadd.f32 0.0, %v2706
  %v2708 = vpop.f32.mrb[0].mxu0
  %2709 = vdwg.mxu0
  %v2710 = vmul.f32 %v2702, 0.35355338
  %v2711 = vmul.f32 %v2707, 0.35355338
  %v2712 = vadd.f32 %v2710, %v115
  %v2713 = vadd.f32 %v2711, %v116
  %v2714 = vsel %vm307, %v2712, -inf
  %2715 = vmax.xlane.f32.xlu0 %v2714
  %v2716 = vpop.xlane.xlu0 %2715
  %v2717 = vsel %vm307, %v2713, -inf
  %2718 = vmax.xlane.f32.xlu0 %v2717
  %v2719 = vpop.xlane.xlu0 %2718
  %v2720 = vsub.f32 %v2712, %v2716
  %v2721 = vsub.f32 %v2713, %v2719
  %v2722 = vmul.f32 %v2720, 1.442695
  %v2723 = vpow.pop %v2722
  %v2724 = vmul.f32 %v2721, 1.442695
  %v2725 = vpow.pop %v2724
  %v2726 = vsel %vm307, %v2723, 0.0
  %2727 = vadd.xlane.f32.xlu0 %v2726
  %v2728 = vpop.xlane.xlu0 %2727
  %v2729 = vsel %vm307, %v2725, 0.0
  %2730 = vadd.xlane.f32.xlu0 %v2729
  %v2731 = vpop.xlane.xlu0 %2730
  %v2732 = vrcp.pop %v2728
  %v2733 = vrcp.pop %v2731
  %v2734 = vmul.f32 %v2723, %v2732
  %v2735 = vmul.f32 %v2725, %v2733
  %2736 = vrot.lane.b32.xlu0 %v1751, 40
  %v2737 = vpop.permute.xlu0 %2736
  %2738 = vrot.lane.b32.xlu0 %v1756, 40
  %v2739 = vpop.permute.xlu0 %2738
  %v2743 = vsel %vm307, %v2734, 0
  %v2746 = vsel %vm307, %v2735, 0
  %2748 = vmatprep.subr.mxu0 0.0
  %2749 = vmatpush1.msra.mxu0 %v2737
  %2750 = vmatprep.subr.mxu0 0.0
  %2751 = vmatpush1.msra.mxu0 %v2739
  %2752 = vmatprep.subr.mxu0 0.0
  %2753 = vmatpush1.msra.mxu0 0.0
  %2754 = vmatprep.subr.mxu0 0.0
  %2755 = vmatpush1.msra.mxu0 0.0
  %2756 = vmatprep.subr.mxu0 0.0
  %2757 = vmatpush1.msra.mxu0 0.0
  %2758 = vmatprep.subr.mxu0 0.0
  %2759 = vmatpush1.msra.mxu0 0.0
  %2760 = vmatprep.subr.mxu0 0.0
  %2761 = vmatpush1.msra.mxu0 0.0
  %2762 = vmatprep.subr.mxu0 0.0
  %2763 = vmatpush1.msra.mxu0 0.0
  %2764 = vmatprep.subr.mxu0 0.0
  %2765 = vmatpush1.msra.mxu0 0.0
  %2766 = vmatprep.subr.mxu0 0.0
  %2767 = vmatpush1.msra.mxu0 0.0
  %2768 = vmatprep.subr.mxu0 0.0
  %2769 = vmatpush1.msra.mxu0 0.0
  %2770 = vmatprep.subr.mxu0 0.0
  %2771 = vmatpush1.msra.mxu0 0.0
  %2772 = vmatprep.subr.mxu0 0.0
  %2773 = vmatpush1.msra.mxu0 0.0
  %2774 = vmatprep.subr.mxu0 0.0
  %2775 = vmatpush1.msra.mxu0 0.0
  %2776 = vmatprep.subr.mxu0 0.0
  %2777 = vmatpush1.msra.mxu0 0.0
  %2778 = vmatprep.subr.mxu0 0.0
  %2779 = vmatpush1.msra.mxu0 0.0
  %2780 = vmatprep.subr.mxu0 0.0
  %2781 = vmatpush1.msra.mxu0 0.0
  %2782 = vmatprep.subr.mxu0 0.0
  %2783 = vmatpush1.msra.mxu0 0.0
  %2784 = vmatprep.subr.mxu0 0.0
  %2785 = vmatpush1.msra.mxu0 0.0
  %2786 = vmatprep.subr.mxu0 0.0
  %2787 = vmatpush1.msra.mxu0 0.0
  %2788 = vmatprep.subr.mxu0 0.0
  %2789 = vmatpush1.msra.mxu0 0.0
  %2790 = vmatprep.subr.mxu0 0.0
  %2791 = vmatpush1.msra.mxu0 0.0
  %2792 = vmatprep.subr.mxu0 0.0
  %2793 = vmatpush1.msra.mxu0 0.0
  %2794 = vmatprep.subr.mxu0 0.0
  %2795 = vmatpush1.msra.mxu0 0.0
  %2796 = vmatprep.subr.mxu0 0.0
  %2797 = vmatpush1.msra.mxu0 0.0
  %2798 = vmatprep.subr.mxu0 0.0
  %2799 = vmatpush1.msra.mxu0 0.0
  %2800 = vmatprep.subr.mxu0 0.0
  %2801 = vmatpush1.msra.mxu0 0.0
  %2802 = vmatprep.subr.mxu0 0.0
  %2803 = vmatpush1.msra.mxu0 0.0
  %2804 = vmatprep.subr.mxu0 0.0
  %2805 = vmatpush1.msra.mxu0 0.0
  %2806 = vmatprep.subr.mxu0 0.0
  %2807 = vmatpush1.msra.mxu0 0.0
  %2808 = vmatprep.subr.mxu0 0.0
  %2809 = vmatpush1.msra.mxu0 0.0
  %2810 = vmatprep.subr.mxu0 0.0
  %2811 = vmatpush1.msra.mxu0 0.0
  %2812 = vmatprep.mubr.f32.mxu0 0.0
  %2813 = vmatmul.mubr.f32.gmra.mrb[0].mxu0 %v2743
  %v2814 = vpop.f32.mrb[0].mxu0
  %v2815 = vadd.f32 0.0, %v2814
  %v2816 = vpop.f32.mrb[0].mxu0
  %2817 = vmatprep.mubr.f32.mxu0 0.0
  %2818 = vmatmul.mubr.f32.gmra.mrb[0].mxu0 %v2746
  %v2819 = vpop.f32.mrb[0].mxu0
  %v2820 = vadd.f32 0.0, %v2819
  %v2821 = vpop.f32.mrb[0].mxu0
  %2822 = vdwg.mxu0
  %v2824 = vsel %vm219, %v2815, 0
  %v2827 = vsel %vm219, %v2820, 0
  %2829 = vmatprep.subr.mxu0 0.0
  %2830 = vmatpush1.msra.mxu0 %v1763
  %2831 = vmatprep.subr.mxu0 0.0
  %2832 = vmatpush1.msra.mxu0 0.0
  %2833 = vmatprep.subr.mxu0 0.0
  %2834 = vmatpush1.msra.mxu0 0.0
  %2835 = vmatprep.subr.mxu0 0.0
  %2836 = vmatpush1.msra.mxu0 0.0
  %2837 = vmatprep.subr.mxu0 0.0
  %2838 = vmatpush1.msra.mxu0 0.0
  %2839 = vmatprep.subr.mxu0 0.0
  %2840 = vmatpush1.msra.mxu0 0.0
  %2841 = vmatprep.subr.mxu0 0.0
  %2842 = vmatpush1.msra.mxu0 0.0
  %2843 = vmatprep.subr.mxu0 0.0
  %2844 = vmatpush1.msra.mxu0 0.0
  %2845 = vmatprep.subr.mxu0 0.0
  %2846 = vmatpush1.msra.mxu0 0.0
  %2847 = vmatprep.subr.mxu0 0.0
  %2848 = vmatpush1.msra.mxu0 0.0
  %2849 = vmatprep.subr.mxu0 0.0
  %2850 = vmatpush1.msra.mxu0 0.0
  %2851 = vmatprep.subr.mxu0 0.0
  %2852 = vmatpush1.msra.mxu0 0.0
  %2853 = vmatprep.subr.mxu0 0.0
  %2854 = vmatpush1.msra.mxu0 0.0
  %2855 = vmatprep.subr.mxu0 0.0
  %2856 = vmatpush1.msra.mxu0 0.0
  %2857 = vmatprep.subr.mxu0 0.0
  %2858 = vmatpush1.msra.mxu0 0.0
  %2859 = vmatprep.subr.mxu0 0.0
  %2860 = vmatpush1.msra.mxu0 0.0
  %2861 = vmatprep.subr.mxu0 0.0
  %2862 = vmatpush1.msra.mxu0 0.0
  %2863 = vmatprep.subr.mxu0 0.0
  %2864 = vmatpush1.msra.mxu0 0.0
  %2865 = vmatprep.subr.mxu0 0.0
  %2866 = vmatpush1.msra.mxu0 0.0
  %2867 = vmatprep.subr.mxu0 0.0
  %2868 = vmatpush1.msra.mxu0 0.0
  %2869 = vmatprep.subr.mxu0 0.0
  %2870 = vmatpush1.msra.mxu0 0.0
  %2871 = vmatprep.subr.mxu0 0.0
  %2872 = vmatpush1.msra.mxu0 0.0
  %2873 = vmatprep.subr.mxu0 0.0
  %2874 = vmatpush1.msra.mxu0 0.0
  %2875 = vmatprep.subr.mxu0 0.0
  %2876 = vmatpush1.msra.mxu0 0.0
  %2877 = vmatprep.subr.mxu0 0.0
  %2878 = vmatpush1.msra.mxu0 0.0
  %2879 = vmatprep.subr.mxu0 0.0
  %2880 = vmatpush1.msra.mxu0 0.0
  %2881 = vmatprep.subr.mxu0 0.0
  %2882 = vmatpush1.msra.mxu0 0.0
  %2883 = vmatprep.subr.mxu0 0.0
  %2884 = vmatpush1.msra.mxu0 0.0
  %2885 = vmatprep.subr.mxu0 0.0
  %2886 = vmatpush1.msra.mxu0 0.0
  %2887 = vmatprep.subr.mxu0 0.0
  %2888 = vmatpush1.msra.mxu0 0.0
  %2889 = vmatprep.subr.mxu0 0.0
  %2890 = vmatpush1.msra.mxu0 0.0
  %2891 = vmatprep.subr.mxu0 0.0
  %2892 = vmatpush1.msra.mxu0 0.0
  %2893 = vmatprep.mubr.f32.mxu0 0.0
  %2894 = vmatmul.mubr.f32.gmra.mrb[0].mxu0 %v2824
  %v2895 = vpop.f32.mrb[0].mxu0
  %v2896 = vadd.f32 0.0, %v2895
  %v2897 = vpop.f32.mrb[0].mxu0
  %2898 = vmatprep.mubr.f32.mxu0 0.0
  %2899 = vmatmul.mubr.f32.gmra.mrb[0].mxu0 %v2827
  %v2900 = vpop.f32.mrb[0].mxu0
  %v2901 = vadd.f32 0.0, %v2900
  %v2902 = vpop.f32.mrb[0].mxu0
  %2903 = vdwg.mxu0
  %v2904 = vadd.f32 %v2617, %v2896
  %v2905 = vadd.f32 %v2618, %v2901
  %s2906 = scalar_lea.vmem %s7, 1
  %v2907 = vld [vmem:[%s2906] sm:$0x1]
  %v2909 = vlaneseq
  %v2910 = vshrl.u32 %v2909, 7
  %v2911 = vsub.s32 0, %v2910
  %v2912 = vrot.slane %v2907, %v2911
  %v2914 = vadd.f32 %v2904, %v2912
  %v2915 = vadd.f32 %v2905, %v2912
  %v2916 = vadd.f32 %v1663, %v2914
  %v2917 = vadd.f32 %v1664, %v2915
  %s2918 = scalar_lea.vmem %s8, 1
  %v2919 = vld [vmem:[%s2918] sm:$0x1]
  %s2920 = scalar_lea.vmem %s9, 1
  %v2921 = vld [vmem:[%s2920] sm:$0x1]
  %v2922 = vsel %vm71, %v2916, 0.0
  %2923 = vadd.xlane.f32.xlu0 %v2922
  %v2924 = vpop.xlane.xlu0 %2923
  %v2925 = vsel %vm71, %v2917, 0.0
  %2926 = vadd.xlane.f32.xlu0 %v2925
  %v2927 = vpop.xlane.xlu0 %2926
  %v2928 = vmul.f32 %v2924, %v78
  %v2929 = vmul.f32 %v2927, %v78
  %v2930 = vsub.f32 %v2916, %v2928
  %v2931 = vsub.f32 %v2917, %v2929
  %v2932 = vmul.f32 %v2930, %v2930
  %v2933 = vmul.f32 %v2931, %v2931
  %v2934 = vsel %vm71, %v2932, 0.0
  %2935 = vadd.xlane.f32.xlu0 %v2934
  %v2936 = vpop.xlane.xlu0 %2935
  %v2937 = vsel %vm71, %v2933, 0.0
  %2938 = vadd.xlane.f32.xlu0 %v2937
  %v2939 = vpop.xlane.xlu0 %2938
  %v2940 = vmul.f32 %v2936, %v78
  %v2941 = vmul.f32 %v2939, %v78
  %v2942 = vadd.f32 %v2940, 1e-12
  %v2943 = vadd.f32 %v2941, 1e-12
  %v2944 = vrsqrt.pop %v2942
  %v2945 = vrsqrt.pop %v2943
  %v2946 = vmul.f32 %v2930, %v2944
  %v2947 = vmul.f32 %v2931, %v2945
  %v2949 = vlaneseq
  %v2950 = vshrl.u32 %v2949, 7
  %v2951 = vsub.s32 0, %v2950
  %v2952 = vrot.slane %v2919, %v2951
  %v2954 = vmul.f32 %v2952, %v2946
  %v2955 = vmul.f32 %v2952, %v2947
  %v2957 = vlaneseq
  %v2958 = vshrl.u32 %v2957, 7
  %v2959 = vsub.s32 0, %v2958
  %v2960 = vrot.slane %v2921, %v2959
  %v2962 = vadd.f32 %v2954, %v2960
  %v2963 = vadd.f32 %v2955, %v2960
  %s2964 = scalar_lea.vmem %s10, 32
  %v2965 = vld [vmem:[%s2964] sm:$0xff]
  %v2966 = vld [vmem:[%s2964 + $0x8] sm:$0xff]
  %v2967 = vld [vmem:[%s2964 + $0x10] sm:$0xff]
  %v2968 = vld [vmem:[%s2964 + $0x18] sm:$0xff]
  %s2969 = scalar_lea.vmem %s11, 1
  %v2970 = vld [vmem:[%s2969] sm:$0x1]
  %v2972 = vlaneseq
  %v2973 = vshrl.u32 %v2972, 7
  %v2974 = vsub.s32 0, %v2973
  %v2975 = vrot.slane %v2970, %v2974
  %v2978 = vsel %vm71, %v2962, 0
  %v2981 = vsel %vm71, %v2963, 0
  %2983 = vmatprep.subr.mxu0 0.0
  %2984 = vmatpush1.msra.mxu0 %v2965
  %2985 = vmatprep.subr.mxu0 0.0
  %2986 = vmatpush1.msra.mxu0 %v2966
  %2987 = vmatprep.subr.mxu0 0.0
  %2988 = vmatpush1.msra.mxu0 %v2967
  %2989 = vmatprep.subr.mxu0 0.0
  %2990 = vmatpush1.msra.mxu0 %v2968
  %2991 = vmatprep.subr.mxu0 0.0
  %2992 = vmatpush1.msra.mxu0 0.0
  %2993 = vmatprep.subr.mxu0 0.0
  %2994 = vmatpush1.msra.mxu0 0.0
  %2995 = vmatprep.subr.mxu0 0.0
  %2996 = vmatpush1.msra.mxu0 0.0
  %2997 = vmatprep.subr.mxu0 0.0
  %2998 = vmatpush1.msra.mxu0 0.0
  %2999 = vmatprep.subr.mxu0 0.0
  %3000 = vmatpush1.msra.mxu0 0.0
  %3001 = vmatprep.subr.mxu0 0.0
  %3002 = vmatpush1.msra.mxu0 0.0
  %3003 = vmatprep.subr.mxu0 0.0
  %3004 = vmatpush1.msra.mxu0 0.0
  %3005 = vmatprep.subr.mxu0 0.0
  %3006 = vmatpush1.msra.mxu0 0.0
  %3007 = vmatprep.subr.mxu0 0.0
  %3008 = vmatpush1.msra.mxu0 0.0
  %3009 = vmatprep.subr.mxu0 0.0
  %3010 = vmatpush1.msra.mxu0 0.0
  %3011 = vmatprep.subr.mxu0 0.0
  %3012 = vmatpush1.msra.mxu0 0.0
  %3013 = vmatprep.subr.mxu0 0.0
  %3014 = vmatpush1.msra.mxu0 0.0
  %3015 = vmatprep.subr.mxu0 0.0
  %3016 = vmatpush1.msra.mxu0 0.0
  %3017 = vmatprep.subr.mxu0 0.0
  %3018 = vmatpush1.msra.mxu0 0.0
  %3019 = vmatprep.subr.mxu0 0.0
  %3020 = vmatpush1.msra.mxu0 0.0
  %3021 = vmatprep.subr.mxu0 0.0
  %3022 = vmatpush1.msra.mxu0 0.0
  %3023 = vmatprep.subr.mxu0 0.0
  %3024 = vmatpush1.msra.mxu0 0.0
  %3025 = vmatprep.subr.mxu0 0.0
  %3026 = vmatpush1.msra.mxu0 0.0
  %3027 = vmatprep.subr.mxu0 0.0
  %3028 = vmatpush1.msra.mxu0 0.0
  %3029 = vmatprep.subr.mxu0 0.0
  %3030 = vmatpush1.msra.mxu0 0.0
  %3031 = vmatprep.subr.mxu0 0.0
  %3032 = vmatpush1.msra.mxu0 0.0
  %3033 = vmatprep.subr.mxu0 0.0
  %3034 = vmatpush1.msra.mxu0 0.0
  %3035 = vmatprep.subr.mxu0 0.0
  %3036 = vmatpush1.msra.mxu0 0.0
  %3037 = vmatprep.subr.mxu0 0.0
  %3038 = vmatpush1.msra.mxu0 0.0
  %3039 = vmatprep.subr.mxu0 0.0
  %3040 = vmatpush1.msra.mxu0 0.0
  %3041 = vmatprep.subr.mxu0 0.0
  %3042 = vmatpush1.msra.mxu0 0.0
  %3043 = vmatprep.subr.mxu0 0.0
  %3044 = vmatpush1.msra.mxu0 0.0
  %3045 = vmatprep.subr.mxu0 0.0
  %3046 = vmatpush1.msra.mxu0 0.0
  %3047 = vmatprep.mubr.f32.mxu0 0.0
  %3048 = vmatmul.mubr.f32.gmra.mrb[0].mxu0 %v2978
  %v3049 = vpop.f32.mrb[0].mxu0
  %v3050 = vadd.f32 %v2975, %v3049
  %v3051 = vpop.f32.mrb[0].mxu0
  %3052 = vmatprep.mubr.f32.mxu0 0.0
  %3053 = vmatmul.mubr.f32.gmra.mrb[0].mxu0 %v2981
  %v3054 = vpop.f32.mrb[0].mxu0
  %v3055 = vadd.f32 %v2975, %v3054
  %v3056 = vpop.f32.mrb[0].mxu0
  %3057 = vdwg.mxu0
  %v3058 = vmul.f32 %v3050, 0.5
  %v3059 = vmul.f32 %v3055, 0.5
  %v3060 = vmul.f32 %v3050, 0.044715
  %v3061 = vmul.f32 %v3055, 0.044715
  %v3062 = vmul.f32 %v3060, %v3050
  %v3063 = vmul.f32 %v3061, %v3055
  %v3064 = vmul.f32 %v3062, %v3050
  %v3065 = vmul.f32 %v3063, %v3055
  %v3066 = vadd.f32 %v3050, %v3064
  %v3067 = vadd.f32 %v3055, %v3065
  %v3068 = vmul.f32 %v3066, 0.7978846
  %v3069 = vmul.f32 %v3067, 0.7978846
  %v3070 = vtanh.pop %v3068
  %v3071 = vtanh.pop %v3069
  %v3072 = vadd.f32 %v3070, 1.0
  %v3073 = vadd.f32 %v3071, 1.0
  %v3074 = vmul.f32 %v3058, %v3072
  %v3075 = vmul.f32 %v3059, %v3073
  %s3076 = scalar_lea.vmem %s12, 64
  %v3077 = vld [vmem:[%s3076] sm:$0xff]
  %v3078 = vld [vmem:[%s3076 + $0x8] sm:$0xff]
  %v3079 = vld [vmem:[%s3076 + $0x10] sm:$0xff]
  %v3080 = vld [vmem:[%s3076 + $0x18] sm:$0xff]
  %v3081 = vld [vmem:[%s3076 + $0x20] sm:$0xff]
  %v3082 = vld [vmem:[%s3076 + $0x28] sm:$0xff]
  %v3083 = vld [vmem:[%s3076 + $0x30] sm:$0xff]
  %v3084 = vld [vmem:[%s3076 + $0x38] sm:$0xff]
  %s3085 = scalar_lea.vmem %s13, 1
  %v3086 = vld [vmem:[%s3085] sm:$0x1]
  %v3088 = vlaneseq
  %v3089 = vshrl.u32 %v3088, 7
  %v3090 = vsub.s32 0, %v3089
  %v3091 = vrot.slane %v3086, %v3090
  %v3094 = vsel %vm1537, %v3074, 0
  %v3097 = vsel %vm1537, %v3075, 0
  %3099 = vmatprep.subr.mxu0 0.0
  %3100 = vmatpush1.msra.mxu0 %v3077
  %3101 = vmatprep.subr.mxu0 0.0
  %3102 = vmatpush1.msra.mxu0 %v3078
  %3103 = vmatprep.subr.mxu0 0.0
  %3104 = vmatpush1.msra.mxu0 %v3079
  %3105 = vmatprep.subr.mxu0 0.0
  %3106 = vmatpush1.msra.mxu0 %v3080
  %3107 = vmatprep.subr.mxu0 0.0
  %3108 = vmatpush1.msra.mxu0 %v3081
  %3109 = vmatprep.subr.mxu0 0.0
  %3110 = vmatpush1.msra.mxu0 %v3082
  %3111 = vmatprep.subr.mxu0 0.0
  %3112 = vmatpush1.msra.mxu0 %v3083
  %3113 = vmatprep.subr.mxu0 0.0
  %3114 = vmatpush1.msra.mxu0 %v3084
  %3115 = vmatprep.subr.mxu0 0.0
  %3116 = vmatpush1.msra.mxu0 0.0
  %3117 = vmatprep.subr.mxu0 0.0
  %3118 = vmatpush1.msra.mxu0 0.0
  %3119 = vmatprep.subr.mxu0 0.0
  %3120 = vmatpush1.msra.mxu0 0.0
  %3121 = vmatprep.subr.mxu0 0.0
  %3122 = vmatpush1.msra.mxu0 0.0
  %3123 = vmatprep.subr.mxu0 0.0
  %3124 = vmatpush1.msra.mxu0 0.0
  %3125 = vmatprep.subr.mxu0 0.0
  %3126 = vmatpush1.msra.mxu0 0.0
  %3127 = vmatprep.subr.mxu0 0.0
  %3128 = vmatpush1.msra.mxu0 0.0
  %3129 = vmatprep.subr.mxu0 0.0
  %3130 = vmatpush1.msra.mxu0 0.0
  %3131 = vmatprep.subr.mxu0 0.0
  %3132 = vmatpush1.msra.mxu0 0.0
  %3133 = vmatprep.subr.mxu0 0.0
  %3134 = vmatpush1.msra.mxu0 0.0
  %3135 = vmatprep.subr.mxu0 0.0
  %3136 = vmatpush1.msra.mxu0 0.0
  %3137 = vmatprep.subr.mxu0 0.0
  %3138 = vmatpush1.msra.mxu0 0.0
  %3139 = vmatprep.subr.mxu0 0.0
  %3140 = vmatpush1.msra.mxu0 0.0
  %3141 = vmatprep.subr.mxu0 0.0
  %3142 = vmatpush1.msra.mxu0 0.0
  %3143 = vmatprep.subr.mxu0 0.0
  %3144 = vmatpush1.msra.mxu0 0.0
  %3145 = vmatprep.subr.mxu0 0.0
  %3146 = vmatpush1.msra.mxu0 0.0
  %3147 = vmatprep.subr.mxu0 0.0
  %3148 = vmatpush1.msra.mxu0 0.0
  %3149 = vmatprep.subr.mxu0 0.0
  %3150 = vmatpush1.msra.mxu0 0.0
  %3151 = vmatprep.subr.mxu0 0.0
  %3152 = vmatpush1.msra.mxu0 0.0
  %3153 = vmatprep.subr.mxu0 0.0
  %3154 = vmatpush1.msra.mxu0 0.0
  %3155 = vmatprep.subr.mxu0 0.0
  %3156 = vmatpush1.msra.mxu0 0.0
  %3157 = vmatprep.subr.mxu0 0.0
  %3158 = vmatpush1.msra.mxu0 0.0
  %3159 = vmatprep.subr.mxu0 0.0
  %3160 = vmatpush1.msra.mxu0 0.0
  %3161 = vmatprep.subr.mxu0 0.0
  %3162 = vmatpush1.msra.mxu0 0.0
  %3163 = vmatprep.mubr.f32.mxu0 0.0
  %3164 = vmatmul.mubr.f32.gmra.mrb[0].mxu0 %v3094
  %v3165 = vpop.f32.mrb[0].mxu0
  %v3166 = vadd.f32 %v3091, %v3165
  %v3167 = vpop.f32.mrb[0].mxu0
  %3168 = vmatprep.mubr.f32.mxu0 0.0
  %3169 = vmatmul.mubr.f32.gmra.mrb[0].mxu0 %v3097
  %v3170 = vpop.f32.mrb[0].mxu0
  %v3171 = vadd.f32 %v3091, %v3170
  %v3172 = vpop.f32.mrb[0].mxu0
  %3173 = vdwg.mxu0
  %v3174 = vadd.f32 %v2962, %v3166
  %v3175 = vadd.f32 %v2963, %v3171
  %s3176 = scalar_lea.vmem %s14, 1
  %v3177 = vld [vmem:[%s3176] sm:$0x1]
  %s3178 = scalar_lea.vmem %s15, 1
  %v3179 = vld [vmem:[%s3178] sm:$0x1]
  %v3180 = vsel %vm71, %v3174, 0.0
  %3181 = vadd.xlane.f32.xlu0 %v3180
  %v3182 = vpop.xlane.xlu0 %3181
  %v3183 = vsel %vm71, %v3175, 0.0
  %3184 = vadd.xlane.f32.xlu0 %v3183
  %v3185 = vpop.xlane.xlu0 %3184
  %v3186 = vmul.f32 %v3182, %v78
  %v3187 = vmul.f32 %v3185, %v78
  %v3188 = vsub.f32 %v3174, %v3186
  %v3189 = vsub.f32 %v3175, %v3187
  %v3190 = vmul.f32 %v3188, %v3188
  %v3191 = vmul.f32 %v3189, %v3189
  %v3192 = vsel %vm71, %v3190, 0.0
  %3193 = vadd.xlane.f32.xlu0 %v3192
  %v3194 = vpop.xlane.xlu0 %3193
  %v3195 = vsel %vm71, %v3191, 0.0
  %3196 = vadd.xlane.f32.xlu0 %v3195
  %v3197 = vpop.xlane.xlu0 %3196
  %v3198 = vmul.f32 %v3194, %v78
  %v3199 = vmul.f32 %v3197, %v78
  %v3200 = vadd.f32 %v3198, 1e-12
  %v3201 = vadd.f32 %v3199, 1e-12
  %v3202 = vrsqrt.pop %v3200
  %v3203 = vrsqrt.pop %v3201
  %v3204 = vmul.f32 %v3188, %v3202
  %v3205 = vmul.f32 %v3189, %v3203
  %v3207 = vlaneseq
  %v3208 = vshrl.u32 %v3207, 7
  %v3209 = vsub.s32 0, %v3208
  %v3210 = vrot.slane %v3177, %v3209
  %v3212 = vmul.f32 %v3210, %v3204
  %v3213 = vmul.f32 %v3210, %v3205
  %v3215 = vlaneseq
  %v3216 = vshrl.u32 %v3215, 7
  %v3217 = vsub.s32 0, %v3216
  %v3218 = vrot.slane %v3179, %v3217
  %v3220 = vadd.f32 %v3212, %v3218
  %v3221 = vadd.f32 %v3213, %v3218
  %v3222 = vld [vmem:[%s16] sm:$0xff]
  %v3223 = vld [vmem:[%s16 + $0x8] sm:$0xff]
  %v3224 = vld [vmem:[%s16 + $0x10] sm:$0xff]
  %v3225 = vld [vmem:[%s16 + $0x18] sm:$0xff]
  %v3226 = vld [vmem:[%s17] sm:$0x1]
  %v3227 = vld [vmem:[%s18] sm:$0x1]
  %v3228 = vld [vmem:[#allocation2] sm:$0x1]
  %v3230 = vsel %vm71, %v3220, 0
  %3232 = vmatprep.subr.mxu0 0.0
  %3233 = vmatpush1.msra.mxu0 %v3222
  %3234 = vmatprep.subr.mxu0 0.0
  %3235 = vmatpush1.msra.mxu0 %v3223
  %3236 = vmatprep.subr.mxu0 0.0
  %3237 = vmatpush1.msra.mxu0 %v3224
  %3238 = vmatprep.subr.mxu0 0.0
  %3239 = vmatpush1.msra.mxu0 %v3225
  %3240 = vmatprep.subr.mxu0 0.0
  %3241 = vmatpush1.msra.mxu0 0.0
  %3242 = vmatprep.subr.mxu0 0.0
  %3243 = vmatpush1.msra.mxu0 0.0
  %3244 = vmatprep.subr.mxu0 0.0
  %3245 = vmatpush1.msra.mxu0 0.0
  %3246 = vmatprep.subr.mxu0 0.0
  %3247 = vmatpush1.msra.mxu0 0.0
  %3248 = vmatprep.subr.mxu0 0.0
  %3249 = vmatpush1.msra.mxu0 0.0
  %3250 = vmatprep.subr.mxu0 0.0
  %3251 = vmatpush1.msra.mxu0 0.0
  %3252 = vmatprep.subr.mxu0 0.0
  %3253 = vmatpush1.msra.mxu0 0.0
  %3254 = vmatprep.subr.mxu0 0.0
  %3255 = vmatpush1.msra.mxu0 0.0
  %3256 = vmatprep.subr.mxu0 0.0
  %3257 = vmatpush1.msra.mxu0 0.0
  %3258 = vmatprep.subr.mxu0 0.0
  %3259 = vmatpush1.msra.mxu0 0.0
  %3260 = vmatprep.subr.mxu0 0.0
  %3261 = vmatpush1.msra.mxu0 0.0
  %3262 = vmatprep.subr.mxu0 0.0
  %3263 = vmatpush1.msra.mxu0 0.0
  %3264 = vmatprep.subr.mxu0 0.0
  %3265 = vmatpush1.msra.mxu0 0.0
  %3266 = vmatprep.subr.mxu0 0.0
  %3267 = vmatpush1.msra.mxu0 0.0
  %3268 = vmatprep.subr.mxu0 0.0
  %3269 = vmatpush1.msra.mxu0 0.0
  %3270 = vmatprep.subr.mxu0 0.0
  %3271 = vmatpush1.msra.mxu0 0.0
  %3272 = vmatprep.subr.mxu0 0.0
  %3273 = vmatpush1.msra.mxu0 0.0
  %3274 = vmatprep.subr.mxu0 0.0
  %3275 = vmatpush1.msra.mxu0 0.0
  %3276 = vmatprep.subr.mxu0 0.0
  %3277 = vmatpush1.msra.mxu0 0.0
  %3278 = vmatprep.subr.mxu0 0.0
  %3279 = vmatpush1.msra.mxu0 0.0
  %3280 = vmatprep.subr.mxu0 0.0
  %3281 = vmatpush1.msra.mxu0 0.0
  %3282 = vmatprep.subr.mxu0 0.0
  %3283 = vmatpush1.msra.mxu0 0.0
  %3284 = vmatprep.subr.mxu0 0.0
  %3285 = vmatpush1.msra.mxu0 0.0
  %3286 = vmatprep.subr.mxu0 0.0
  %3287 = vmatpush1.msra.mxu0 0.0
  %3288 = vmatprep.subr.mxu0 0.0
  %3289 = vmatpush1.msra.mxu0 0.0
  %3290 = vmatprep.subr.mxu0 0.0
  %3291 = vmatpush1.msra.mxu0 0.0
  %3292 = vmatprep.subr.mxu0 0.0
  %3293 = vmatpush1.msra.mxu0 0.0
  %3294 = vmatprep.subr.mxu0 0.0
  %3295 = vmatpush1.msra.mxu0 0.0
  %3296 = vmatprep.mubr.f32.mxu0 0.0
  %3297 = vmatmul.mubr.f32.gmra.mrb[0].mxu0 %v3230
  %v3298 = vpop.f32.mrb[0].mxu0
  %v3299 = vadd.f32 %v3226, %v3298
  %v3300 = vpop.f32.mrb[0].mxu0
  %3301 = vdwg.mxu0
  %v3302 = vtanh.pop %v3299
  %v3303 = vmul.f32 %v3302, %v3227
  %vm3304 = vcmask 253952
  %v3305 = vsel %vm3304, %v3303, 0.0
  %3306 = vadd.xlane.f32.xlu0 %v3305
  %v3307 = vpop.xlane.xlu0 %3306
  %v3308 = vadd.f32 %v3307, %v3228
  %v3309 = vmax.f32 %v3308, 0.0
  %vm3310 = vcmask 0
  %3311 = vst.msk [vmem:[%s20] sm:$0x1] %vm3310, %v3309
  %v3313 = vsel %vm71, %v3221, 0
  %3315 = vmatprep.subr.mxu0 0.0
  %3316 = vmatpush1.msra.mxu0 %v3222
  %3317 = vmatprep.subr.mxu0 0.0
  %3318 = vmatpush1.msra.mxu0 %v3223
  %3319 = vmatprep.subr.mxu0 0.0
  %3320 = vmatpush1.msra.mxu0 %v3224
  %3321 = vmatprep.subr.mxu0 0.0
  %3322 = vmatpush1.msra.mxu0 %v3225
  %3323 = vmatprep.subr.mxu0 0.0
  %3324 = vmatpush1.msra.mxu0 0.0
  %3325 = vmatprep.subr.mxu0 0.0
  %3326 = vmatpush1.msra.mxu0 0.0
  %3327 = vmatprep.subr.mxu0 0.0
  %3328 = vmatpush1.msra.mxu0 0.0
  %3329 = vmatprep.subr.mxu0 0.0
  %3330 = vmatpush1.msra.mxu0 0.0
  %3331 = vmatprep.subr.mxu0 0.0
  %3332 = vmatpush1.msra.mxu0 0.0
  %3333 = vmatprep.subr.mxu0 0.0
  %3334 = vmatpush1.msra.mxu0 0.0
  %3335 = vmatprep.subr.mxu0 0.0
  %3336 = vmatpush1.msra.mxu0 0.0
  %3337 = vmatprep.subr.mxu0 0.0
  %3338 = vmatpush1.msra.mxu0 0.0
  %3339 = vmatprep.subr.mxu0 0.0
  %3340 = vmatpush1.msra.mxu0 0.0
  %3341 = vmatprep.subr.mxu0 0.0
  %3342 = vmatpush1.msra.mxu0 0.0
  %3343 = vmatprep.subr.mxu0 0.0
  %3344 = vmatpush1.msra.mxu0 0.0
  %3345 = vmatprep.subr.mxu0 0.0
  %3346 = vmatpush1.msra.mxu0 0.0
  %3347 = vmatprep.subr.mxu0 0.0
  %3348 = vmatpush1.msra.mxu0 0.0
  %3349 = vmatprep.subr.mxu0 0.0
  %3350 = vmatpush1.msra.mxu0 0.0
  %3351 = vmatprep.subr.mxu0 0.0
  %3352 = vmatpush1.msra.mxu0 0.0
  %3353 = vmatprep.subr.mxu0 0.0
  %3354 = vmatpush1.msra.mxu0 0.0
  %3355 = vmatprep.subr.mxu0 0.0
  %3356 = vmatpush1.msra.mxu0 0.0
  %3357 = vmatprep.subr.mxu0 0.0
  %3358 = vmatpush1.msra.mxu0 0.0
  %3359 = vmatprep.subr.mxu0 0.0
  %3360 = vmatpush1.msra.mxu0 0.0
  %3361 = vmatprep.subr.mxu0 0.0
  %3362 = vmatpush1.msra.mxu0 0.0
  %3363 = vmatprep.subr.mxu0 0.0
  %3364 = vmatpush1.msra.mxu0 0.0
  %3365 = vmatprep.subr.mxu0 0.0
  %3366 = vmatpush1.msra.mxu0 0.0
  %3367 = vmatprep.subr.mxu0 0.0
  %3368 = vmatpush1.msra.mxu0 0.0
  %3369 = vmatprep.subr.mxu0 0.0
  %3370 = vmatpush1.msra.mxu0 0.0
  %3371 = vmatprep.subr.mxu0 0.0
  %3372 = vmatpush1.msra.mxu0 0.0
  %3373 = vmatprep.subr.mxu0 0.0
  %3374 = vmatpush1.msra.mxu0 0.0
  %3375 = vmatprep.subr.mxu0 0.0
  %3376 = vmatpush1.msra.mxu0 0.0
  %3377 = vmatprep.subr.mxu0 0.0
  %3378 = vmatpush1.msra.mxu0 0.0
  %3379 = vmatprep.mubr.f32.mxu0 0.0
  %3380 = vmatmul.mubr.f32.gmra.mrb[0].mxu0 %v3313
  %v3381 = vpop.f32.mrb[0].mxu0
  %v3382 = vadd.f32 %v3226, %v3381
  %v3383 = vpop.f32.mrb[0].mxu0
  %3384 = vdwg.mxu0
  %v3385 = vtanh.pop %v3382
  %v3386 = vmul.f32 %v3385, %v3227
  %v3387 = vsel %vm3304, %v3386, 0.0
  %3388 = vadd.xlane.f32.xlu0 %v3387
  %v3389 = vpop.xlane.xlu0 %3388
  %v3390 = vadd.f32 %v3389, %v3228
  %v3391 = vmax.f32 %v3390, 0.0
  %3392 = vst.msk [vmem:[%s20 + $0x1] sm:$0x1] %vm3310, %v3391
  // Predicated region
  $region82: #{predictor_forward.1} parent=0 // pred_check
    _
  $region83: #{predictor_forward.1} parent=0 // pred_check_branch
    %3394 = sbr.rel (0) target = $region85
  $region84: #{predictor_forward.1} parent=0 // pred_region
    _
  $region85: #{predictor_forward.1} parent=0 // pred_fallthru
    _
  // Predicated region
  $region86: #{predictor_forward.1} parent=0 // pred_check
    _
  $region87: #{predictor_forward.1} parent=0 // pred_check_branch
    %3396 = sbr.rel (0) target = $region89
  $region88: #{predictor_forward.1} parent=0 // pred_region
    _
  $region89: #{predictor_forward.1} parent=0 // pred_fallthru
    _

</llo_original>
